<compile_context>
chip_gen: v7x
topology: tpu7x:2x2x1
jax: 0.10.0
libtpu: 0.0.40
codegen_flags: <defaults>
</compile_context>

<pallas_src>
import jax
import jax.numpy as jnp
from jax import lax
from jax.experimental import pallas as pl
from jax.experimental.pallas import tpu as pltpu

_H_IN = 28                     # LeNet5 geometry (28x28 input -> 256 flat features)
_C1, _C2, _C3 = 6, 16, 16      # conv output channels
_FC1, _FC2, _FC3 = 120, 84, 13
_PAD_O = 128                   # lane-dense padded width of all FC outputs


# ------------------------------ Pallas kernel -------------------------------

def _conv_banded(src_ref, row0, cb_ref, bias_ref, ho):
    """relu(conv3x3) of one image, as 3 banded matmuls (one per row offset).

    src_ref:  2-D activation slab ref (rows = n*H + h, lanes = w*Cin + ci)
    row0:     first row of this image inside src_ref (static python int)
    cb_ref:   (3, W_in*Cin, Wo*Cout) banded weight matrices
    bias_ref: (1, Wo*Cout) bias tiled over w
    """
    acc = jnp.dot(src_ref[row0:row0 + ho, :], cb_ref[0],
                  preferred_element_type=jnp.float32)
    acc = acc + jnp.dot(src_ref[row0 + 1:row0 + 1 + ho, :], cb_ref[1],
                        preferred_element_type=jnp.float32)
    acc = acc + jnp.dot(src_ref[row0 + 2:row0 + 2 + ho, :], cb_ref[2],
                        preferred_element_type=jnp.float32)
    return jnp.maximum(acc + bias_ref[...], 0.0)


def _pool2x2(y, th_ref, dst_ref, n, ho, wo, c):
    """2x2 / stride-2 max pool of one image's conv output (a VMEM value).

    y:       (ho, wo*c) conv+relu output (rows = h, lanes = w*c + ci)
    th_ref:  (ho//2, wo*c) scratch holding the h-pooled rows
    dst_ref: (N*ho//2, (wo//2)*c) next layer's activation slab; image n's rows
             are written at row offset n*ho//2.
    """
    h2, w2 = ho // 2, wo // 2
    for i in range(h2):                                    # pool over h
        th_ref[i:i + 1, :] = jnp.maximum(y[2 * i:2 * i + 1, :],
                                         y[2 * i + 1:2 * i + 2, :])
    hp = th_ref[...]
    base = n * h2
    for j in range(w2):                                    # pool over w
        left = hp[:, (2 * j) * c:(2 * j + 1) * c]
        right = hp[:, (2 * j + 1) * c:(2 * j + 2) * c]
        dst_ref[base:base + h2, j * c:(j + 1) * c] = jnp.maximum(left, right)


def _lenet5_kernel(x_ref,
                   cb1_ref, cbias1_ref,
                   cb2_ref, cbias2_ref,
                   cb3_ref, cbias3_ref,
                   w1_ref, b1_ref, w2_ref, b2_ref, w3_ref, b3_ref,
                   out_ref,
                   a2_ref, a3_ref, th1_ref, th2_ref):
    n_batch = out_ref.shape[0]
    # TODO(synk): for large batch, move this loop onto a "parallel" grid axis
    # (megacore / v7x dual-TC) instead of a static unroll.
    for n in range(n_batch):
        # conv1 (padding already folded into the 30x30 input slab) + relu + pool
        y1 = _conv_banded(x_ref, n * 30, cb1_ref, cbias1_ref, 28)   # (28, 168)
        _pool2x2(y1, th1_ref, a2_ref, n, 28, 28, _C1)               # -> (14, 84)

        # conv2 + relu + pool
        y2 = _conv_banded(a2_ref, n * 14, cb2_ref, cbias2_ref, 12)  # (12, 192)
        _pool2x2(y2, th2_ref, a3_ref, n, 12, 12, _C2)               # -> (6, 96)

        # conv3 + relu (no pool)
        y3 = _conv_banded(a3_ref, n * 6, cb3_ref, cbias3_ref, 4)    # (4, 64)

        # fc1 consumes the (h, w, c) flatten of y3; PyTorch's (c, h, w) flatten
        # order is folded into w1 (one (64, 128) block per conv3 output row h).
        acc = b1_ref[...]                                           # (1, 128)
        for h in range(4):
            acc = acc + jnp.dot(y3[h:h + 1, :], w1_ref[h],
                                preferred_element_type=jnp.float32)
        f1 = jnp.maximum(acc, 0.0)
        f2 = jnp.maximum(
            jnp.dot(f1, w2_ref[...], preferred_element_type=jnp.float32)
            + b2_ref[...], 0.0)
        logits = (jnp.dot(f2, w3_ref[...], preferred_element_type=jnp.float32)
                  + b3_ref[...])
        out_ref[n:n + 1, :] = logits                                # lane-dense


# --------------------------- Parameter preparation --------------------------

def _banded_conv_mats(w, w_in):
    """PyTorch conv weight (Cout, Cin, 3, 3) -> (3, w_in*Cin, (w_in-2)*Cout)
    banded matrices so that conv == sum_di row_shifted_input_slab @ B[di]."""
    c_out, c_in, _, _ = w.shape
    w_out = w_in - 2
    x_idx = jnp.arange(w_in)[:, None, None]
    wo_idx = jnp.arange(w_out)[None, :, None]
    dj_idx = jnp.arange(3)[None, None, :]
    onehot = (x_idx == wo_idx + dj_idx).astype(jnp.float32)    # (w_in, w_out, 3)
    b = jnp.einsum("xwj,oidj->dxiwo", onehot, w.astype(jnp.float32))
    return b.reshape(3, w_in * c_in, w_out * c_out)


def pack_params(params):
    """One-time repack of PyTorch-layout params into kernel operands."""
    f32 = jnp.float32
    # fc1: fold the NCHW flatten order (f = c*16 + h*4 + w) into the weight and
    # split it into one (64, 128) block per conv3 output row h.
    w1 = params["fc1_w"].astype(f32).reshape(_C3, 4, 4, _FC1)  # (c, h, w, o)
    w1 = jnp.transpose(w1, (1, 2, 0, 3)).reshape(4, 4 * _C3, _FC1)
    w1 = jnp.pad(w1, ((0, 0), (0, 0), (0, _PAD_O - _FC1)))
    w2 = jnp.pad(params["fc2_w"].astype(f32),
                 ((0, _PAD_O - _FC1), (0, _PAD_O - _FC2)))
    w3 = jnp.pad(params["fc3_w"].astype(f32),
                 ((0, _PAD_O - _FC2), (0, _PAD_O - _FC3)))
    return dict(
        cb1=_banded_conv_mats(params["conv1_w"], 30),
        cbias1=jnp.tile(params["conv1_b"].astype(f32), 28).reshape(1, 28 * _C1),
        cb2=_banded_conv_mats(params["conv2_w"], 14),
        cbias2=jnp.tile(params["conv2_b"].astype(f32), 12).reshape(1, 12 * _C2),
        cb3=_banded_conv_mats(params["conv3_w"], 6),
        cbias3=jnp.tile(params["conv3_b"].astype(f32), 4).reshape(1, 4 * _C3),
        w1=w1,
        b1=jnp.pad(params["fc1_b"].astype(f32),
                   (0, _PAD_O - _FC1)).reshape(1, _PAD_O),
        w2=w2,
        b2=jnp.pad(params["fc2_b"].astype(f32),
                   (0, _PAD_O - _FC2)).reshape(1, _PAD_O),
        w3=w3,
        b3=jnp.pad(params["fc3_b"].astype(f32),
                   (0, _PAD_O - _FC3)).reshape(1, _PAD_O),
    )


# --------------------------------- Forward ----------------------------------

def lenet5_forward(packed, x_nchw):
    n = x_nchw.shape[0]
    # NCHW (N,1,28,28) -> zero-padded 2-D slab (N*30, 30) with rows = n*30 + h.
    x = x_nchw.astype(jnp.float32).reshape(n, _H_IN, _H_IN)
    x = jnp.pad(x, ((0, 0), (1, 1), (1, 1))).reshape(n * 30, 30)

    out = pl.pallas_call(
        _lenet5_kernel,
        out_shape=jax.ShapeDtypeStruct((n, _PAD_O), jnp.float32),
        scratch_shapes=[
            pltpu.VMEM((n * 14, 14 * _C1), jnp.float32),   # a2: pooled conv1
            pltpu.VMEM((n * 6, 6 * _C2), jnp.float32),     # a3: pooled conv2
            pltpu.VMEM((14, 28 * _C1), jnp.float32),       # th1: h-pool temp
            pltpu.VMEM((6, 12 * _C2), jnp.float32),        # th2: h-pool temp
        ],
    )(x,
      packed["cb1"], packed["cbias1"],
      packed["cb2"], packed["cbias2"],
      packed["cb3"], packed["cbias3"],
      packed["w1"], packed["b1"],
      packed["w2"], packed["b2"],
      packed["w3"], packed["b3"])
    return out[:, :_FC3]


# ------------------------------ Init & reference ----------------------------

def init_params(key):
    ks = jax.random.split(key, 12)

    def u(k, shape, fan_in):
        bound = 1.0 / jnp.sqrt(jnp.float32(fan_in))
        return jax.random.uniform(k, shape, jnp.float32, -bound, bound)

    return dict(
        conv1_w=u(ks[0], (6, 1, 3, 3), 1 * 9),
        conv1_b=u(ks[1], (6,), 1 * 9),
        conv2_w=u(ks[2], (16, 6, 3, 3), 6 * 9),
        conv2_b=u(ks[3], (16,), 6 * 9),
        conv3_w=u(ks[4], (16, 16, 3, 3), 16 * 9),
        conv3_b=u(ks[5], (16,), 16 * 9),
        fc1_w=u(ks[6], (256, 120), 256),
        fc1_b=u(ks[7], (120,), 256),
        fc2_w=u(ks[8], (120, 84), 120),
        fc2_b=u(ks[9], (84,), 120),
        fc3_w=u(ks[10], (84, 13), 84),
        fc3_b=u(ks[11], (13,), 84),
    )


def lenet5_reference(params, x_nchw):
    """Pure-JAX/XLA reference matching the PyTorch module (NCHW semantics)."""
    prec = lax.Precision.HIGHEST
    dn = ("NCHW", "OIHW", "NCHW")
    y = x_nchw.astype(jnp.float32)
    y = lax.conv_general_dilated(y, params["conv1_w"], (1, 1), ((1, 1), (1, 1)),
                                 dimension_numbers=dn, precision=prec)
    y = jnp.maximum(y + params["conv1_b"][None, :, None, None], 0.0)
    y = lax.reduce_window(y, -jnp.inf, lax.max, (1, 1, 2, 2), (1, 1, 2, 2), "VALID")
    y = lax.conv_general_dilated(y, params["conv2_w"], (1, 1), "VALID",
                                 dimension_numbers=dn, precision=prec)
    y = jnp.maximum(y + params["conv2_b"][None, :, None, None], 0.0)
    y = lax.reduce_window(y, -jnp.inf, lax.max, (1, 1, 2, 2), (1, 1, 2, 2), "VALID")
    y = lax.conv_general_dilated(y, params["conv3_w"], (1, 1), "VALID",
                                 dimension_numbers=dn, precision=prec)
    y = jnp.maximum(y + params["conv3_b"][None, :, None, None], 0.0)
    y = y.reshape(y.shape[0], -1)                     # PyTorch view(-1, 256)
    y = jnp.maximum(jnp.dot(y, params["fc1_w"], precision=prec) + params["fc1_b"], 0.0)
    y = jnp.maximum(jnp.dot(y, params["fc2_w"], precision=prec) + params["fc2_b"], 0.0)
    return jnp.dot(y, params["fc3_w"], precision=prec) + params["fc3_b"]


if __name__ == "__main__":
    key = jax.random.PRNGKey(0)
    pkey, xkey = jax.random.split(key)
    params = init_params(pkey)
    packed = pack_params(params)          # one-time weight repack (host/XLA side)

    # LeNet5 geometry requires 28x28 input so the flatten yields 256 features.
    x = jax.random.normal(xkey, (2, 1, 28, 28), dtype=jnp.float32)

    out = jax.jit(lenet5_forward)(packed, x)
    out = jax.block_until_ready(out)
    assert out.shape == (2, 13), out.shape

    ref = lenet5_reference(params, x)
    err = float(jnp.max(jnp.abs(out - ref)))
    assert err < 2e-3, f"max abs error vs reference: {err}"
    print("KERNEL_OK")
</pallas_src>

<mosaic_0001>
module attributes {stable_mosaic.version = 11 : i64} {
  func.func @_lenet5_kernel(%arg0: memref<60x30xf32, #tpu.memory_space<vmem>>, %arg1: memref<3x30x168xf32, #tpu.memory_space<vmem>>, %arg2: memref<1x168xf32, #tpu.memory_space<vmem>>, %arg3: memref<3x84x192xf32, #tpu.memory_space<vmem>>, %arg4: memref<1x192xf32, #tpu.memory_space<vmem>>, %arg5: memref<3x96x64xf32, #tpu.memory_space<vmem>>, %arg6: memref<1x64xf32, #tpu.memory_space<vmem>>, %arg7: memref<4x64x128xf32, #tpu.memory_space<vmem>>, %arg8: memref<1x128xf32, #tpu.memory_space<vmem>>, %arg9: memref<128x128xf32, #tpu.memory_space<vmem>>, %arg10: memref<1x128xf32, #tpu.memory_space<vmem>>, %arg11: memref<128x128xf32, #tpu.memory_space<vmem>>, %arg12: memref<1x128xf32, #tpu.memory_space<vmem>>, %arg13: memref<2x128xf32, #tpu.memory_space<vmem>>, %arg14: memref<28x84xf32, #tpu.memory_space<vmem>>, %arg15: memref<12x96xf32, #tpu.memory_space<vmem>>, %arg16: memref<14x168xf32, #tpu.memory_space<vmem>>, %arg17: memref<6x192xf32, #tpu.memory_space<vmem>>) attributes {dimension_semantics = [], scalar_prefetch = 0 : i64, scratch_operands = 4 : i64, tpu.core_type = #tpu.core_type<tc>} {
    %c0 = arith.constant 0 : index
    %c0_0 = arith.constant 0 : index
    %0 = vector.load %arg0[%c0, %c0_0] : memref<60x30xf32, #tpu.memory_space<vmem>>, vector<28x30xf32>
    %c0_1 = arith.constant 0 : index
    %c0_2 = arith.constant 0 : index
    %c0_3 = arith.constant 0 : index
    %1 = vector.load %arg1[%c0_1, %c0_2, %c0_3] : memref<3x30x168xf32, #tpu.memory_space<vmem>>, vector<1x30x168xf32>
    %2 = vector.shape_cast %1 : vector<1x30x168xf32> to vector<30x168xf32>
    %cst = arith.constant dense<0.000000e+00> : vector<28x168xf32>
    %3 = tpu.matmul %0, %2, %cst {dimension_numbers = #tpu.dot_dimension_numbers<[1], [0], [0], [1], [0, 0, 1, 1], [], []>} : vector<28x30xf32>, vector<30x168xf32>, vector<28x168xf32> -> vector<28x168xf32>
    %c1 = arith.constant 1 : index
    %c0_4 = arith.constant 0 : index
    %4 = vector.load %arg0[%c1, %c0_4] : memref<60x30xf32, #tpu.memory_space<vmem>>, vector<28x30xf32>
    %c1_5 = arith.constant 1 : index
    %c0_6 = arith.constant 0 : index
    %c0_7 = arith.constant 0 : index
    %5 = vector.load %arg1[%c1_5, %c0_6, %c0_7] : memref<3x30x168xf32, #tpu.memory_space<vmem>>, vector<1x30x168xf32>
    %6 = vector.shape_cast %5 : vector<1x30x168xf32> to vector<30x168xf32>
    %cst_8 = arith.constant dense<0.000000e+00> : vector<28x168xf32>
    %7 = tpu.matmul %4, %6, %cst_8 {dimension_numbers = #tpu.dot_dimension_numbers<[1], [0], [0], [1], [0, 0, 1, 1], [], []>} : vector<28x30xf32>, vector<30x168xf32>, vector<28x168xf32> -> vector<28x168xf32>
    %8 = arith.addf %3, %7 : vector<28x168xf32>
    %c2 = arith.constant 2 : index
    %c0_9 = arith.constant 0 : index
    %9 = vector.load %arg0[%c2, %c0_9] : memref<60x30xf32, #tpu.memory_space<vmem>>, vector<28x30xf32>
    %c2_10 = arith.constant 2 : index
    %c0_11 = arith.constant 0 : index
    %c0_12 = arith.constant 0 : index
    %10 = vector.load %arg1[%c2_10, %c0_11, %c0_12] : memref<3x30x168xf32, #tpu.memory_space<vmem>>, vector<1x30x168xf32>
    %11 = vector.shape_cast %10 : vector<1x30x168xf32> to vector<30x168xf32>
    %cst_13 = arith.constant dense<0.000000e+00> : vector<28x168xf32>
    %12 = tpu.matmul %9, %11, %cst_13 {dimension_numbers = #tpu.dot_dimension_numbers<[1], [0], [0], [1], [0, 0, 1, 1], [], []>} : vector<28x30xf32>, vector<30x168xf32>, vector<28x168xf32> -> vector<28x168xf32>
    %13 = arith.addf %8, %12 : vector<28x168xf32>
    %c0_14 = arith.constant 0 : index
    %c0_15 = arith.constant 0 : index
    %14 = vector.load %arg2[%c0_14, %c0_15] : memref<1x168xf32, #tpu.memory_space<vmem>>, vector<1x168xf32>
    %15 = vector.broadcast %14 : vector<1x168xf32> to vector<28x168xf32>
    %16 = arith.addf %13, %15 : vector<28x168xf32>
    %cst_16 = arith.constant 0.000000e+00 : f32
    %17 = vector.broadcast %cst_16 : f32 to vector<28x168xf32>
    %18 = arith.maximumf %16, %17 : vector<28x168xf32>
    %19 = vector.extract_strided_slice %18 {offsets = [0, 0], sizes = [1, 168], strides = [1, 1]} : vector<28x168xf32> to vector<1x168xf32>
    %20 = vector.extract_strided_slice %18 {offsets = [1, 0], sizes = [1, 168], strides = [1, 1]} : vector<28x168xf32> to vector<1x168xf32>
    %21 = arith.maximumf %19, %20 : vector<1x168xf32>
    %c0_17 = arith.constant 0 : index
    %c0_18 = arith.constant 0 : index
    %22 = vector.load %arg16[%c0_17, %c0_18] : memref<14x168xf32, #tpu.memory_space<vmem>>, vector<1x168xf32>
    tpu.vector_store %arg16[%c0_17, %c0_18], %21 {strides = array<i32>} : memref<14x168xf32, #tpu.memory_space<vmem>>, vector<1x168xf32>,
    %23 = vector.extract_strided_slice %18 {offsets = [2, 0], sizes = [1, 168], strides = [1, 1]} : vector<28x168xf32> to vector<1x168xf32>
    %24 = vector.extract_strided_slice %18 {offsets = [3, 0], sizes = [1, 168], strides = [1, 1]} : vector<28x168xf32> to vector<1x168xf32>
    %25 = arith.maximumf %23, %24 : vector<1x168xf32>
    %c1_19 = arith.constant 1 : index
    %c0_20 = arith.constant 0 : index
    %26 = vector.load %arg16[%c1_19, %c0_20] : memref<14x168xf32, #tpu.memory_space<vmem>>, vector<1x168xf32>
    tpu.vector_store %arg16[%c1_19, %c0_20], %25 {strides = array<i32>} : memref<14x168xf32, #tpu.memory_space<vmem>>, vector<1x168xf32>,
    %27 = vector.extract_strided_slice %18 {offsets = [4, 0], sizes = [1, 168], strides = [1, 1]} : vector<28x168xf32> to vector<1x168xf32>
    %28 = vector.extract_strided_slice %18 {offsets = [5, 0], sizes = [1, 168], strides = [1, 1]} : vector<28x168xf32> to vector<1x168xf32>
    %29 = arith.maximumf %27, %28 : vector<1x168xf32>
    %c2_21 = arith.constant 2 : index
    %c0_22 = arith.constant 0 : index
    %30 = vector.load %arg16[%c2_21, %c0_22] : memref<14x168xf32, #tpu.memory_space<vmem>>, vector<1x168xf32>
    tpu.vector_store %arg16[%c2_21, %c0_22], %29 {strides = array<i32>} : memref<14x168xf32, #tpu.memory_space<vmem>>, vector<1x168xf32>,
    %31 = vector.extract_strided_slice %18 {offsets = [6, 0], sizes = [1, 168], strides = [1, 1]} : vector<28x168xf32> to vector<1x168xf32>
    %32 = vector.extract_strided_slice %18 {offsets = [7, 0], sizes = [1, 168], strides = [1, 1]} : vector<28x168xf32> to vector<1x168xf32>
    %33 = arith.maximumf %31, %32 : vector<1x168xf32>
    %c3 = arith.constant 3 : index
    %c0_23 = arith.constant 0 : index
    %34 = vector.load %arg16[%c3, %c0_23] : memref<14x168xf32, #tpu.memory_space<vmem>>, vector<1x168xf32>
    tpu.vector_store %arg16[%c3, %c0_23], %33 {strides = array<i32>} : memref<14x168xf32, #tpu.memory_space<vmem>>, vector<1x168xf32>,
    %35 = vector.extract_strided_slice %18 {offsets = [8, 0], sizes = [1, 168], strides = [1, 1]} : vector<28x168xf32> to vector<1x168xf32>
    %36 = vector.extract_strided_slice %18 {offsets = [9, 0], sizes = [1, 168], strides = [1, 1]} : vector<28x168xf32> to vector<1x168xf32>
    %37 = arith.maximumf %35, %36 : vector<1x168xf32>
    %c4 = arith.constant 4 : index
    %c0_24 = arith.constant 0 : index
    %38 = vector.load %arg16[%c4, %c0_24] : memref<14x168xf32, #tpu.memory_space<vmem>>, vector<1x168xf32>
    tpu.vector_store %arg16[%c4, %c0_24], %37 {strides = array<i32>} : memref<14x168xf32, #tpu.memory_space<vmem>>, vector<1x168xf32>,
    %39 = vector.extract_strided_slice %18 {offsets = [10, 0], sizes = [1, 168], strides = [1, 1]} : vector<28x168xf32> to vector<1x168xf32>
    %40 = vector.extract_strided_slice %18 {offsets = [11, 0], sizes = [1, 168], strides = [1, 1]} : vector<28x168xf32> to vector<1x168xf32>
    %41 = arith.maximumf %39, %40 : vector<1x168xf32>
    %c5 = arith.constant 5 : index
    %c0_25 = arith.constant 0 : index
    %42 = vector.load %arg16[%c5, %c0_25] : memref<14x168xf32, #tpu.memory_space<vmem>>, vector<1x168xf32>
    tpu.vector_store %arg16[%c5, %c0_25], %41 {strides = array<i32>} : memref<14x168xf32, #tpu.memory_space<vmem>>, vector<1x168xf32>,
    %43 = vector.extract_strided_slice %18 {offsets = [12, 0], sizes = [1, 168], strides = [1, 1]} : vector<28x168xf32> to vector<1x168xf32>
    %44 = vector.extract_strided_slice %18 {offsets = [13, 0], sizes = [1, 168], strides = [1, 1]} : vector<28x168xf32> to vector<1x168xf32>
    %45 = arith.maximumf %43, %44 : vector<1x168xf32>
    %c6 = arith.constant 6 : index
    %c0_26 = arith.constant 0 : index
    %46 = vector.load %arg16[%c6, %c0_26] : memref<14x168xf32, #tpu.memory_space<vmem>>, vector<1x168xf32>
    tpu.vector_store %arg16[%c6, %c0_26], %45 {strides = array<i32>} : memref<14x168xf32, #tpu.memory_space<vmem>>, vector<1x168xf32>,
    %47 = vector.extract_strided_slice %18 {offsets = [14, 0], sizes = [1, 168], strides = [1, 1]} : vector<28x168xf32> to vector<1x168xf32>
    %48 = vector.extract_strided_slice %18 {offsets = [15, 0], sizes = [1, 168], strides = [1, 1]} : vector<28x168xf32> to vector<1x168xf32>
    %49 = arith.maximumf %47, %48 : vector<1x168xf32>
    %c7 = arith.constant 7 : index
    %c0_27 = arith.constant 0 : index
    %50 = vector.load %arg16[%c7, %c0_27] : memref<14x168xf32, #tpu.memory_space<vmem>>, vector<1x168xf32>
    tpu.vector_store %arg16[%c7, %c0_27], %49 {strides = array<i32>} : memref<14x168xf32, #tpu.memory_space<vmem>>, vector<1x168xf32>,
    %51 = vector.extract_strided_slice %18 {offsets = [16, 0], sizes = [1, 168], strides = [1, 1]} : vector<28x168xf32> to vector<1x168xf32>
    %52 = vector.extract_strided_slice %18 {offsets = [17, 0], sizes = [1, 168], strides = [1, 1]} : vector<28x168xf32> to vector<1x168xf32>
    %53 = arith.maximumf %51, %52 : vector<1x168xf32>
    %c8 = arith.constant 8 : index
    %c0_28 = arith.constant 0 : index
    %54 = vector.load %arg16[%c8, %c0_28] : memref<14x168xf32, #tpu.memory_space<vmem>>, vector<1x168xf32>
    tpu.vector_store %arg16[%c8, %c0_28], %53 {strides = array<i32>} : memref<14x168xf32, #tpu.memory_space<vmem>>, vector<1x168xf32>,
    %55 = vector.extract_strided_slice %18 {offsets = [18, 0], sizes = [1, 168], strides = [1, 1]} : vector<28x168xf32> to vector<1x168xf32>
    %56 = vector.extract_strided_slice %18 {offsets = [19, 0], sizes = [1, 168], strides = [1, 1]} : vector<28x168xf32> to vector<1x168xf32>
    %57 = arith.maximumf %55, %56 : vector<1x168xf32>
    %c9 = arith.constant 9 : index
    %c0_29 = arith.constant 0 : index
    %58 = vector.load %arg16[%c9, %c0_29] : memref<14x168xf32, #tpu.memory_space<vmem>>, vector<1x168xf32>
    tpu.vector_store %arg16[%c9, %c0_29], %57 {strides = array<i32>} : memref<14x168xf32, #tpu.memory_space<vmem>>, vector<1x168xf32>,
    %59 = vector.extract_strided_slice %18 {offsets = [20, 0], sizes = [1, 168], strides = [1, 1]} : vector<28x168xf32> to vector<1x168xf32>
    %60 = vector.extract_strided_slice %18 {offsets = [21, 0], sizes = [1, 168], strides = [1, 1]} : vector<28x168xf32> to vector<1x168xf32>
    %61 = arith.maximumf %59, %60 : vector<1x168xf32>
    %c10 = arith.constant 10 : index
    %c0_30 = arith.constant 0 : index
    %62 = vector.load %arg16[%c10, %c0_30] : memref<14x168xf32, #tpu.memory_space<vmem>>, vector<1x168xf32>
    tpu.vector_store %arg16[%c10, %c0_30], %61 {strides = array<i32>} : memref<14x168xf32, #tpu.memory_space<vmem>>, vector<1x168xf32>,
    %63 = vector.extract_strided_slice %18 {offsets = [22, 0], sizes = [1, 168], strides = [1, 1]} : vector<28x168xf32> to vector<1x168xf32>
    %64 = vector.extract_strided_slice %18 {offsets = [23, 0], sizes = [1, 168], strides = [1, 1]} : vector<28x168xf32> to vector<1x168xf32>
    %65 = arith.maximumf %63, %64 : vector<1x168xf32>
    %c11 = arith.constant 11 : index
    %c0_31 = arith.constant 0 : index
    %66 = vector.load %arg16[%c11, %c0_31] : memref<14x168xf32, #tpu.memory_space<vmem>>, vector<1x168xf32>
    tpu.vector_store %arg16[%c11, %c0_31], %65 {strides = array<i32>} : memref<14x168xf32, #tpu.memory_space<vmem>>, vector<1x168xf32>,
    %67 = vector.extract_strided_slice %18 {offsets = [24, 0], sizes = [1, 168], strides = [1, 1]} : vector<28x168xf32> to vector<1x168xf32>
    %68 = vector.extract_strided_slice %18 {offsets = [25, 0], sizes = [1, 168], strides = [1, 1]} : vector<28x168xf32> to vector<1x168xf32>
    %69 = arith.maximumf %67, %68 : vector<1x168xf32>
    %c12 = arith.constant 12 : index
    %c0_32 = arith.constant 0 : index
    %70 = vector.load %arg16[%c12, %c0_32] : memref<14x168xf32, #tpu.memory_space<vmem>>, vector<1x168xf32>
    tpu.vector_store %arg16[%c12, %c0_32], %69 {strides = array<i32>} : memref<14x168xf32, #tpu.memory_space<vmem>>, vector<1x168xf32>,
    %71 = vector.extract_strided_slice %18 {offsets = [26, 0], sizes = [1, 168], strides = [1, 1]} : vector<28x168xf32> to vector<1x168xf32>
    %72 = vector.extract_strided_slice %18 {offsets = [27, 0], sizes = [1, 168], strides = [1, 1]} : vector<28x168xf32> to vector<1x168xf32>
    %73 = arith.maximumf %71, %72 : vector<1x168xf32>
    %c13 = arith.constant 13 : index
    %c0_33 = arith.constant 0 : index
    %74 = vector.load %arg16[%c13, %c0_33] : memref<14x168xf32, #tpu.memory_space<vmem>>, vector<1x168xf32>
    tpu.vector_store %arg16[%c13, %c0_33], %73 {strides = array<i32>} : memref<14x168xf32, #tpu.memory_space<vmem>>, vector<1x168xf32>,
    %c0_34 = arith.constant 0 : index
    %c0_35 = arith.constant 0 : index
    %75 = vector.load %arg16[%c0_34, %c0_35] : memref<14x168xf32, #tpu.memory_space<vmem>>, vector<14x168xf32>
    %76 = vector.extract_strided_slice %75 {offsets = [0, 0], sizes = [14, 6], strides = [1, 1]} : vector<14x168xf32> to vector<14x6xf32>
    %77 = vector.extract_strided_slice %75 {offsets = [0, 6], sizes = [14, 6], strides = [1, 1]} : vector<14x168xf32> to vector<14x6xf32>
    %78 = arith.maximumf %76, %77 : vector<14x6xf32>
    %c0_36 = arith.constant 0 : index
    %c0_37 = arith.constant 0 : index
    %79 = vector.load %arg14[%c0_36, %c0_37] : memref<28x84xf32, #tpu.memory_space<vmem>>, vector<14x6xf32>
    tpu.vector_store %arg14[%c0_36, %c0_37], %78 {strides = array<i32>} : memref<28x84xf32, #tpu.memory_space<vmem>>, vector<14x6xf32>,
    %80 = vector.extract_strided_slice %75 {offsets = [0, 12], sizes = [14, 6], strides = [1, 1]} : vector<14x168xf32> to vector<14x6xf32>
    %81 = vector.extract_strided_slice %75 {offsets = [0, 18], sizes = [14, 6], strides = [1, 1]} : vector<14x168xf32> to vector<14x6xf32>
    %82 = arith.maximumf %80, %81 : vector<14x6xf32>
    %c0_38 = arith.constant 0 : index
    %c6_39 = arith.constant 6 : index
    %83 = vector.load %arg14[%c0_38, %c6_39] : memref<28x84xf32, #tpu.memory_space<vmem>>, vector<14x6xf32>
    tpu.vector_store %arg14[%c0_38, %c6_39], %82 {strides = array<i32>} : memref<28x84xf32, #tpu.memory_space<vmem>>, vector<14x6xf32>,
    %84 = vector.extract_strided_slice %75 {offsets = [0, 24], sizes = [14, 6], strides = [1, 1]} : vector<14x168xf32> to vector<14x6xf32>
    %85 = vector.extract_strided_slice %75 {offsets = [0, 30], sizes = [14, 6], strides = [1, 1]} : vector<14x168xf32> to vector<14x6xf32>
    %86 = arith.maximumf %84, %85 : vector<14x6xf32>
    %c0_40 = arith.constant 0 : index
    %c12_41 = arith.constant 12 : index
    %87 = vector.load %arg14[%c0_40, %c12_41] : memref<28x84xf32, #tpu.memory_space<vmem>>, vector<14x6xf32>
    tpu.vector_store %arg14[%c0_40, %c12_41], %86 {strides = array<i32>} : memref<28x84xf32, #tpu.memory_space<vmem>>, vector<14x6xf32>,
    %88 = vector.extract_strided_slice %75 {offsets = [0, 36], sizes = [14, 6], strides = [1, 1]} : vector<14x168xf32> to vector<14x6xf32>
    %89 = vector.extract_strided_slice %75 {offsets = [0, 42], sizes = [14, 6], strides = [1, 1]} : vector<14x168xf32> to vector<14x6xf32>
    %90 = arith.maximumf %88, %89 : vector<14x6xf32>
    %c0_42 = arith.constant 0 : index
    %c18 = arith.constant 18 : index
    %91 = vector.load %arg14[%c0_42, %c18] : memref<28x84xf32, #tpu.memory_space<vmem>>, vector<14x6xf32>
    tpu.vector_store %arg14[%c0_42, %c18], %90 {strides = array<i32>} : memref<28x84xf32, #tpu.memory_space<vmem>>, vector<14x6xf32>,
    %92 = vector.extract_strided_slice %75 {offsets = [0, 48], sizes = [14, 6], strides = [1, 1]} : vector<14x168xf32> to vector<14x6xf32>
    %93 = vector.extract_strided_slice %75 {offsets = [0, 54], sizes = [14, 6], strides = [1, 1]} : vector<14x168xf32> to vector<14x6xf32>
    %94 = arith.maximumf %92, %93 : vector<14x6xf32>
    %c0_43 = arith.constant 0 : index
    %c24 = arith.constant 24 : index
    %95 = vector.load %arg14[%c0_43, %c24] : memref<28x84xf32, #tpu.memory_space<vmem>>, vector<14x6xf32>
    tpu.vector_store %arg14[%c0_43, %c24], %94 {strides = array<i32>} : memref<28x84xf32, #tpu.memory_space<vmem>>, vector<14x6xf32>,
    %96 = vector.extract_strided_slice %75 {offsets = [0, 60], sizes = [14, 6], strides = [1, 1]} : vector<14x168xf32> to vector<14x6xf32>
    %97 = vector.extract_strided_slice %75 {offsets = [0, 66], sizes = [14, 6], strides = [1, 1]} : vector<14x168xf32> to vector<14x6xf32>
    %98 = arith.maximumf %96, %97 : vector<14x6xf32>
    %c0_44 = arith.constant 0 : index
    %c30 = arith.constant 30 : index
    %99 = vector.load %arg14[%c0_44, %c30] : memref<28x84xf32, #tpu.memory_space<vmem>>, vector<14x6xf32>
    tpu.vector_store %arg14[%c0_44, %c30], %98 {strides = array<i32>} : memref<28x84xf32, #tpu.memory_space<vmem>>, vector<14x6xf32>,
    %100 = vector.extract_strided_slice %75 {offsets = [0, 72], sizes = [14, 6], strides = [1, 1]} : vector<14x168xf32> to vector<14x6xf32>
    %101 = vector.extract_strided_slice %75 {offsets = [0, 78], sizes = [14, 6], strides = [1, 1]} : vector<14x168xf32> to vector<14x6xf32>
    %102 = arith.maximumf %100, %101 : vector<14x6xf32>
    %c0_45 = arith.constant 0 : index
    %c36 = arith.constant 36 : index
    %103 = vector.load %arg14[%c0_45, %c36] : memref<28x84xf32, #tpu.memory_space<vmem>>, vector<14x6xf32>
    tpu.vector_store %arg14[%c0_45, %c36], %102 {strides = array<i32>} : memref<28x84xf32, #tpu.memory_space<vmem>>, vector<14x6xf32>,
    %104 = vector.extract_strided_slice %75 {offsets = [0, 84], sizes = [14, 6], strides = [1, 1]} : vector<14x168xf32> to vector<14x6xf32>
    %105 = vector.extract_strided_slice %75 {offsets = [0, 90], sizes = [14, 6], strides = [1, 1]} : vector<14x168xf32> to vector<14x6xf32>
    %106 = arith.maximumf %104, %105 : vector<14x6xf32>
    %c0_46 = arith.constant 0 : index
    %c42 = arith.constant 42 : index
    %107 = vector.load %arg14[%c0_46, %c42] : memref<28x84xf32, #tpu.memory_space<vmem>>, vector<14x6xf32>
    tpu.vector_store %arg14[%c0_46, %c42], %106 {strides = array<i32>} : memref<28x84xf32, #tpu.memory_space<vmem>>, vector<14x6xf32>,
    %108 = vector.extract_strided_slice %75 {offsets = [0, 96], sizes = [14, 6], strides = [1, 1]} : vector<14x168xf32> to vector<14x6xf32>
    %109 = vector.extract_strided_slice %75 {offsets = [0, 102], sizes = [14, 6], strides = [1, 1]} : vector<14x168xf32> to vector<14x6xf32>
    %110 = arith.maximumf %108, %109 : vector<14x6xf32>
    %c0_47 = arith.constant 0 : index
    %c48 = arith.constant 48 : index
    %111 = vector.load %arg14[%c0_47, %c48] : memref<28x84xf32, #tpu.memory_space<vmem>>, vector<14x6xf32>
    tpu.vector_store %arg14[%c0_47, %c48], %110 {strides = array<i32>} : memref<28x84xf32, #tpu.memory_space<vmem>>, vector<14x6xf32>,
    %112 = vector.extract_strided_slice %75 {offsets = [0, 108], sizes = [14, 6], strides = [1, 1]} : vector<14x168xf32> to vector<14x6xf32>
    %113 = vector.extract_strided_slice %75 {offsets = [0, 114], sizes = [14, 6], strides = [1, 1]} : vector<14x168xf32> to vector<14x6xf32>
    %114 = arith.maximumf %112, %113 : vector<14x6xf32>
    %c0_48 = arith.constant 0 : index
    %c54 = arith.constant 54 : index
    %115 = vector.load %arg14[%c0_48, %c54] : memref<28x84xf32, #tpu.memory_space<vmem>>, vector<14x6xf32>
    tpu.vector_store %arg14[%c0_48, %c54], %114 {strides = array<i32>} : memref<28x84xf32, #tpu.memory_space<vmem>>, vector<14x6xf32>,
    %116 = vector.extract_strided_slice %75 {offsets = [0, 120], sizes = [14, 6], strides = [1, 1]} : vector<14x168xf32> to vector<14x6xf32>
    %117 = vector.extract_strided_slice %75 {offsets = [0, 126], sizes = [14, 6], strides = [1, 1]} : vector<14x168xf32> to vector<14x6xf32>
    %118 = arith.maximumf %116, %117 : vector<14x6xf32>
    %c0_49 = arith.constant 0 : index
    %c60 = arith.constant 60 : index
    %119 = vector.load %arg14[%c0_49, %c60] : memref<28x84xf32, #tpu.memory_space<vmem>>, vector<14x6xf32>
    tpu.vector_store %arg14[%c0_49, %c60], %118 {strides = array<i32>} : memref<28x84xf32, #tpu.memory_space<vmem>>, vector<14x6xf32>,
    %120 = vector.extract_strided_slice %75 {offsets = [0, 132], sizes = [14, 6], strides = [1, 1]} : vector<14x168xf32> to vector<14x6xf32>
    %121 = vector.extract_strided_slice %75 {offsets = [0, 138], sizes = [14, 6], strides = [1, 1]} : vector<14x168xf32> to vector<14x6xf32>
    %122 = arith.maximumf %120, %121 : vector<14x6xf32>
    %c0_50 = arith.constant 0 : index
    %c66 = arith.constant 66 : index
    %123 = vector.load %arg14[%c0_50, %c66] : memref<28x84xf32, #tpu.memory_space<vmem>>, vector<14x6xf32>
    tpu.vector_store %arg14[%c0_50, %c66], %122 {strides = array<i32>} : memref<28x84xf32, #tpu.memory_space<vmem>>, vector<14x6xf32>,
    %124 = vector.extract_strided_slice %75 {offsets = [0, 144], sizes = [14, 6], strides = [1, 1]} : vector<14x168xf32> to vector<14x6xf32>
    %125 = vector.extract_strided_slice %75 {offsets = [0, 150], sizes = [14, 6], strides = [1, 1]} : vector<14x168xf32> to vector<14x6xf32>
    %126 = arith.maximumf %124, %125 : vector<14x6xf32>
    %c0_51 = arith.constant 0 : index
    %c72 = arith.constant 72 : index
    %127 = vector.load %arg14[%c0_51, %c72] : memref<28x84xf32, #tpu.memory_space<vmem>>, vector<14x6xf32>
    tpu.vector_store %arg14[%c0_51, %c72], %126 {strides = array<i32>} : memref<28x84xf32, #tpu.memory_space<vmem>>, vector<14x6xf32>,
    %128 = vector.extract_strided_slice %75 {offsets = [0, 156], sizes = [14, 6], strides = [1, 1]} : vector<14x168xf32> to vector<14x6xf32>
    %129 = vector.extract_strided_slice %75 {offsets = [0, 162], sizes = [14, 6], strides = [1, 1]} : vector<14x168xf32> to vector<14x6xf32>
    %130 = arith.maximumf %128, %129 : vector<14x6xf32>
    %c0_52 = arith.constant 0 : index
    %c78 = arith.constant 78 : index
    %131 = vector.load %arg14[%c0_52, %c78] : memref<28x84xf32, #tpu.memory_space<vmem>>, vector<14x6xf32>
    tpu.vector_store %arg14[%c0_52, %c78], %130 {strides = array<i32>} : memref<28x84xf32, #tpu.memory_space<vmem>>, vector<14x6xf32>,
    %c0_53 = arith.constant 0 : index
    %c0_54 = arith.constant 0 : index
    %132 = vector.load %arg14[%c0_53, %c0_54] : memref<28x84xf32, #tpu.memory_space<vmem>>, vector<12x84xf32>
    %c0_55 = arith.constant 0 : index
    %c0_56 = arith.constant 0 : index
    %c0_57 = arith.constant 0 : index
    %133 = vector.load %arg3[%c0_55, %c0_56, %c0_57] : memref<3x84x192xf32, #tpu.memory_space<vmem>>, vector<1x84x192xf32>
    %134 = vector.shape_cast %133 : vector<1x84x192xf32> to vector<84x192xf32>
    %cst_58 = arith.constant dense<0.000000e+00> : vector<12x192xf32>
    %135 = tpu.matmul %132, %134, %cst_58 {dimension_numbers = #tpu.dot_dimension_numbers<[1], [0], [0], [1], [0, 0, 1, 1], [], []>} : vector<12x84xf32>, vector<84x192xf32>, vector<12x192xf32> -> vector<12x192xf32>
    %c1_59 = arith.constant 1 : index
    %c0_60 = arith.constant 0 : index
    %136 = vector.load %arg14[%c1_59, %c0_60] : memref<28x84xf32, #tpu.memory_space<vmem>>, vector<12x84xf32>
    %c1_61 = arith.constant 1 : index
    %c0_62 = arith.constant 0 : index
    %c0_63 = arith.constant 0 : index
    %137 = vector.load %arg3[%c1_61, %c0_62, %c0_63] : memref<3x84x192xf32, #tpu.memory_space<vmem>>, vector<1x84x192xf32>
    %138 = vector.shape_cast %137 : vector<1x84x192xf32> to vector<84x192xf32>
    %cst_64 = arith.constant dense<0.000000e+00> : vector<12x192xf32>
    %139 = tpu.matmul %136, %138, %cst_64 {dimension_numbers = #tpu.dot_dimension_numbers<[1], [0], [0], [1], [0, 0, 1, 1], [], []>} : vector<12x84xf32>, vector<84x192xf32>, vector<12x192xf32> -> vector<12x192xf32>
    %140 = arith.addf %135, %139 : vector<12x192xf32>
    %c2_65 = arith.constant 2 : index
    %c0_66 = arith.constant 0 : index
    %141 = vector.load %arg14[%c2_65, %c0_66] : memref<28x84xf32, #tpu.memory_space<vmem>>, vector<12x84xf32>
    %c2_67 = arith.constant 2 : index
    %c0_68 = arith.constant 0 : index
    %c0_69 = arith.constant 0 : index
    %142 = vector.load %arg3[%c2_67, %c0_68, %c0_69] : memref<3x84x192xf32, #tpu.memory_space<vmem>>, vector<1x84x192xf32>
    %143 = vector.shape_cast %142 : vector<1x84x192xf32> to vector<84x192xf32>
    %cst_70 = arith.constant dense<0.000000e+00> : vector<12x192xf32>
    %144 = tpu.matmul %141, %143, %cst_70 {dimension_numbers = #tpu.dot_dimension_numbers<[1], [0], [0], [1], [0, 0, 1, 1], [], []>} : vector<12x84xf32>, vector<84x192xf32>, vector<12x192xf32> -> vector<12x192xf32>
    %145 = arith.addf %140, %144 : vector<12x192xf32>
    %c0_71 = arith.constant 0 : index
    %c0_72 = arith.constant 0 : index
    %146 = vector.load %arg4[%c0_71, %c0_72] : memref<1x192xf32, #tpu.memory_space<vmem>>, vector<1x192xf32>
    %147 = vector.broadcast %146 : vector<1x192xf32> to vector<12x192xf32>
    %148 = arith.addf %145, %147 : vector<12x192xf32>
    %cst_73 = arith.constant 0.000000e+00 : f32
    %149 = vector.broadcast %cst_73 : f32 to vector<12x192xf32>
    %150 = arith.maximumf %148, %149 : vector<12x192xf32>
    %151 = vector.extract_strided_slice %150 {offsets = [0, 0], sizes = [1, 192], strides = [1, 1]} : vector<12x192xf32> to vector<1x192xf32>
    %152 = vector.extract_strided_slice %150 {offsets = [1, 0], sizes = [1, 192], strides = [1, 1]} : vector<12x192xf32> to vector<1x192xf32>
    %153 = arith.maximumf %151, %152 : vector<1x192xf32>
    %c0_74 = arith.constant 0 : index
    %c0_75 = arith.constant 0 : index
    %154 = vector.load %arg17[%c0_74, %c0_75] : memref<6x192xf32, #tpu.memory_space<vmem>>, vector<1x192xf32>
    tpu.vector_store %arg17[%c0_74, %c0_75], %153 {strides = array<i32>} : memref<6x192xf32, #tpu.memory_space<vmem>>, vector<1x192xf32>,
    %155 = vector.extract_strided_slice %150 {offsets = [2, 0], sizes = [1, 192], strides = [1, 1]} : vector<12x192xf32> to vector<1x192xf32>
    %156 = vector.extract_strided_slice %150 {offsets = [3, 0], sizes = [1, 192], strides = [1, 1]} : vector<12x192xf32> to vector<1x192xf32>
    %157 = arith.maximumf %155, %156 : vector<1x192xf32>
    %c1_76 = arith.constant 1 : index
    %c0_77 = arith.constant 0 : index
    %158 = vector.load %arg17[%c1_76, %c0_77] : memref<6x192xf32, #tpu.memory_space<vmem>>, vector<1x192xf32>
    tpu.vector_store %arg17[%c1_76, %c0_77], %157 {strides = array<i32>} : memref<6x192xf32, #tpu.memory_space<vmem>>, vector<1x192xf32>,
    %159 = vector.extract_strided_slice %150 {offsets = [4, 0], sizes = [1, 192], strides = [1, 1]} : vector<12x192xf32> to vector<1x192xf32>
    %160 = vector.extract_strided_slice %150 {offsets = [5, 0], sizes = [1, 192], strides = [1, 1]} : vector<12x192xf32> to vector<1x192xf32>
    %161 = arith.maximumf %159, %160 : vector<1x192xf32>
    %c2_78 = arith.constant 2 : index
    %c0_79 = arith.constant 0 : index
    %162 = vector.load %arg17[%c2_78, %c0_79] : memref<6x192xf32, #tpu.memory_space<vmem>>, vector<1x192xf32>
    tpu.vector_store %arg17[%c2_78, %c0_79], %161 {strides = array<i32>} : memref<6x192xf32, #tpu.memory_space<vmem>>, vector<1x192xf32>,
    %163 = vector.extract_strided_slice %150 {offsets = [6, 0], sizes = [1, 192], strides = [1, 1]} : vector<12x192xf32> to vector<1x192xf32>
    %164 = vector.extract_strided_slice %150 {offsets = [7, 0], sizes = [1, 192], strides = [1, 1]} : vector<12x192xf32> to vector<1x192xf32>
    %165 = arith.maximumf %163, %164 : vector<1x192xf32>
    %c3_80 = arith.constant 3 : index
    %c0_81 = arith.constant 0 : index
    %166 = vector.load %arg17[%c3_80, %c0_81] : memref<6x192xf32, #tpu.memory_space<vmem>>, vector<1x192xf32>
    tpu.vector_store %arg17[%c3_80, %c0_81], %165 {strides = array<i32>} : memref<6x192xf32, #tpu.memory_space<vmem>>, vector<1x192xf32>,
    %167 = vector.extract_strided_slice %150 {offsets = [8, 0], sizes = [1, 192], strides = [1, 1]} : vector<12x192xf32> to vector<1x192xf32>
    %168 = vector.extract_strided_slice %150 {offsets = [9, 0], sizes = [1, 192], strides = [1, 1]} : vector<12x192xf32> to vector<1x192xf32>
    %169 = arith.maximumf %167, %168 : vector<1x192xf32>
    %c4_82 = arith.constant 4 : index
    %c0_83 = arith.constant 0 : index
    %170 = vector.load %arg17[%c4_82, %c0_83] : memref<6x192xf32, #tpu.memory_space<vmem>>, vector<1x192xf32>
    tpu.vector_store %arg17[%c4_82, %c0_83], %169 {strides = array<i32>} : memref<6x192xf32, #tpu.memory_space<vmem>>, vector<1x192xf32>,
    %171 = vector.extract_strided_slice %150 {offsets = [10, 0], sizes = [1, 192], strides = [1, 1]} : vector<12x192xf32> to vector<1x192xf32>
    %172 = vector.extract_strided_slice %150 {offsets = [11, 0], sizes = [1, 192], strides = [1, 1]} : vector<12x192xf32> to vector<1x192xf32>
    %173 = arith.maximumf %171, %172 : vector<1x192xf32>
    %c5_84 = arith.constant 5 : index
    %c0_85 = arith.constant 0 : index
    %174 = vector.load %arg17[%c5_84, %c0_85] : memref<6x192xf32, #tpu.memory_space<vmem>>, vector<1x192xf32>
    tpu.vector_store %arg17[%c5_84, %c0_85], %173 {strides = array<i32>} : memref<6x192xf32, #tpu.memory_space<vmem>>, vector<1x192xf32>,
    %c0_86 = arith.constant 0 : index
    %c0_87 = arith.constant 0 : index
    %175 = vector.load %arg17[%c0_86, %c0_87] : memref<6x192xf32, #tpu.memory_space<vmem>>, vector<6x192xf32>
    %176 = vector.extract_strided_slice %175 {offsets = [0, 0], sizes = [6, 16], strides = [1, 1]} : vector<6x192xf32> to vector<6x16xf32>
    %177 = vector.extract_strided_slice %175 {offsets = [0, 16], sizes = [6, 16], strides = [1, 1]} : vector<6x192xf32> to vector<6x16xf32>
    %178 = arith.maximumf %176, %177 : vector<6x16xf32>
    %c0_88 = arith.constant 0 : index
    %c0_89 = arith.constant 0 : index
    %179 = vector.load %arg15[%c0_88, %c0_89] : memref<12x96xf32, #tpu.memory_space<vmem>>, vector<6x16xf32>
    tpu.vector_store %arg15[%c0_88, %c0_89], %178 {strides = array<i32>} : memref<12x96xf32, #tpu.memory_space<vmem>>, vector<6x16xf32>,
    %180 = vector.extract_strided_slice %175 {offsets = [0, 32], sizes = [6, 16], strides = [1, 1]} : vector<6x192xf32> to vector<6x16xf32>
    %181 = vector.extract_strided_slice %175 {offsets = [0, 48], sizes = [6, 16], strides = [1, 1]} : vector<6x192xf32> to vector<6x16xf32>
    %182 = arith.maximumf %180, %181 : vector<6x16xf32>
    %c0_90 = arith.constant 0 : index
    %c16 = arith.constant 16 : index
    %183 = vector.load %arg15[%c0_90, %c16] : memref<12x96xf32, #tpu.memory_space<vmem>>, vector<6x16xf32>
    tpu.vector_store %arg15[%c0_90, %c16], %182 {strides = array<i32>} : memref<12x96xf32, #tpu.memory_space<vmem>>, vector<6x16xf32>,
    %184 = vector.extract_strided_slice %175 {offsets = [0, 64], sizes = [6, 16], strides = [1, 1]} : vector<6x192xf32> to vector<6x16xf32>
    %185 = vector.extract_strided_slice %175 {offsets = [0, 80], sizes = [6, 16], strides = [1, 1]} : vector<6x192xf32> to vector<6x16xf32>
    %186 = arith.maximumf %184, %185 : vector<6x16xf32>
    %c0_91 = arith.constant 0 : index
    %c32 = arith.constant 32 : index
    %187 = vector.load %arg15[%c0_91, %c32] : memref<12x96xf32, #tpu.memory_space<vmem>>, vector<6x16xf32>
    tpu.vector_store %arg15[%c0_91, %c32], %186 {strides = array<i32>} : memref<12x96xf32, #tpu.memory_space<vmem>>, vector<6x16xf32>,
    %188 = vector.extract_strided_slice %175 {offsets = [0, 96], sizes = [6, 16], strides = [1, 1]} : vector<6x192xf32> to vector<6x16xf32>
    %189 = vector.extract_strided_slice %175 {offsets = [0, 112], sizes = [6, 16], strides = [1, 1]} : vector<6x192xf32> to vector<6x16xf32>
    %190 = arith.maximumf %188, %189 : vector<6x16xf32>
    %c0_92 = arith.constant 0 : index
    %c48_93 = arith.constant 48 : index
    %191 = vector.load %arg15[%c0_92, %c48_93] : memref<12x96xf32, #tpu.memory_space<vmem>>, vector<6x16xf32>
    tpu.vector_store %arg15[%c0_92, %c48_93], %190 {strides = array<i32>} : memref<12x96xf32, #tpu.memory_space<vmem>>, vector<6x16xf32>,
    %192 = vector.extract_strided_slice %175 {offsets = [0, 128], sizes = [6, 16], strides = [1, 1]} : vector<6x192xf32> to vector<6x16xf32>
    %193 = vector.extract_strided_slice %175 {offsets = [0, 144], sizes = [6, 16], strides = [1, 1]} : vector<6x192xf32> to vector<6x16xf32>
    %194 = arith.maximumf %192, %193 : vector<6x16xf32>
    %c0_94 = arith.constant 0 : index
    %c64 = arith.constant 64 : index
    %195 = vector.load %arg15[%c0_94, %c64] : memref<12x96xf32, #tpu.memory_space<vmem>>, vector<6x16xf32>
    tpu.vector_store %arg15[%c0_94, %c64], %194 {strides = array<i32>} : memref<12x96xf32, #tpu.memory_space<vmem>>, vector<6x16xf32>,
    %196 = vector.extract_strided_slice %175 {offsets = [0, 160], sizes = [6, 16], strides = [1, 1]} : vector<6x192xf32> to vector<6x16xf32>
    %197 = vector.extract_strided_slice %175 {offsets = [0, 176], sizes = [6, 16], strides = [1, 1]} : vector<6x192xf32> to vector<6x16xf32>
    %198 = arith.maximumf %196, %197 : vector<6x16xf32>
    %c0_95 = arith.constant 0 : index
    %c80 = arith.constant 80 : index
    %199 = vector.load %arg15[%c0_95, %c80] : memref<12x96xf32, #tpu.memory_space<vmem>>, vector<6x16xf32>
    tpu.vector_store %arg15[%c0_95, %c80], %198 {strides = array<i32>} : memref<12x96xf32, #tpu.memory_space<vmem>>, vector<6x16xf32>,
    %c0_96 = arith.constant 0 : index
    %c0_97 = arith.constant 0 : index
    %200 = vector.load %arg15[%c0_96, %c0_97] : memref<12x96xf32, #tpu.memory_space<vmem>>, vector<4x96xf32>
    %c0_98 = arith.constant 0 : index
    %c0_99 = arith.constant 0 : index
    %c0_100 = arith.constant 0 : index
    %201 = vector.load %arg5[%c0_98, %c0_99, %c0_100] : memref<3x96x64xf32, #tpu.memory_space<vmem>>, vector<1x96x64xf32>
    %202 = vector.shape_cast %201 : vector<1x96x64xf32> to vector<96x64xf32>
    %cst_101 = arith.constant dense<0.000000e+00> : vector<4x64xf32>
    %203 = tpu.matmul %200, %202, %cst_101 {dimension_numbers = #tpu.dot_dimension_numbers<[1], [0], [0], [1], [0, 0, 1, 1], [], []>} : vector<4x96xf32>, vector<96x64xf32>, vector<4x64xf32> -> vector<4x64xf32>
    %c1_102 = arith.constant 1 : index
    %c0_103 = arith.constant 0 : index
    %204 = vector.load %arg15[%c1_102, %c0_103] : memref<12x96xf32, #tpu.memory_space<vmem>>, vector<4x96xf32>
    %c1_104 = arith.constant 1 : index
    %c0_105 = arith.constant 0 : index
    %c0_106 = arith.constant 0 : index
    %205 = vector.load %arg5[%c1_104, %c0_105, %c0_106] : memref<3x96x64xf32, #tpu.memory_space<vmem>>, vector<1x96x64xf32>
    %206 = vector.shape_cast %205 : vector<1x96x64xf32> to vector<96x64xf32>
    %cst_107 = arith.constant dense<0.000000e+00> : vector<4x64xf32>
    %207 = tpu.matmul %204, %206, %cst_107 {dimension_numbers = #tpu.dot_dimension_numbers<[1], [0], [0], [1], [0, 0, 1, 1], [], []>} : vector<4x96xf32>, vector<96x64xf32>, vector<4x64xf32> -> vector<4x64xf32>
    %208 = arith.addf %203, %207 : vector<4x64xf32>
    %c2_108 = arith.constant 2 : index
    %c0_109 = arith.constant 0 : index
    %209 = vector.load %arg15[%c2_108, %c0_109] : memref<12x96xf32, #tpu.memory_space<vmem>>, vector<4x96xf32>
    %c2_110 = arith.constant 2 : index
    %c0_111 = arith.constant 0 : index
    %c0_112 = arith.constant 0 : index
    %210 = vector.load %arg5[%c2_110, %c0_111, %c0_112] : memref<3x96x64xf32, #tpu.memory_space<vmem>>, vector<1x96x64xf32>
    %211 = vector.shape_cast %210 : vector<1x96x64xf32> to vector<96x64xf32>
    %cst_113 = arith.constant dense<0.000000e+00> : vector<4x64xf32>
    %212 = tpu.matmul %209, %211, %cst_113 {dimension_numbers = #tpu.dot_dimension_numbers<[1], [0], [0], [1], [0, 0, 1, 1], [], []>} : vector<4x96xf32>, vector<96x64xf32>, vector<4x64xf32> -> vector<4x64xf32>
    %213 = arith.addf %208, %212 : vector<4x64xf32>
    %c0_114 = arith.constant 0 : index
    %c0_115 = arith.constant 0 : index
    %214 = vector.load %arg6[%c0_114, %c0_115] : memref<1x64xf32, #tpu.memory_space<vmem>>, vector<1x64xf32>
    %215 = vector.broadcast %214 : vector<1x64xf32> to vector<4x64xf32>
    %216 = arith.addf %213, %215 : vector<4x64xf32>
    %cst_116 = arith.constant 0.000000e+00 : f32
    %217 = vector.broadcast %cst_116 : f32 to vector<4x64xf32>
    %218 = arith.maximumf %216, %217 : vector<4x64xf32>
    %c0_117 = arith.constant 0 : index
    %c0_118 = arith.constant 0 : index
    %219 = vector.load %arg8[%c0_117, %c0_118] : memref<1x128xf32, #tpu.memory_space<vmem>>, vector<1x128xf32>
    %220 = vector.extract_strided_slice %218 {offsets = [0, 0], sizes = [1, 64], strides = [1, 1]} : vector<4x64xf32> to vector<1x64xf32>
    %c0_119 = arith.constant 0 : index
    %c0_120 = arith.constant 0 : index
    %c0_121 = arith.constant 0 : index
    %221 = vector.load %arg7[%c0_119, %c0_120, %c0_121] : memref<4x64x128xf32, #tpu.memory_space<vmem>>, vector<1x64x128xf32>
    %222 = vector.shape_cast %221 : vector<1x64x128xf32> to vector<64x128xf32>
    %cst_122 = arith.constant dense<0.000000e+00> : vector<1x128xf32>
    %223 = tpu.matmul %220, %222, %cst_122 {dimension_numbers = #tpu.dot_dimension_numbers<[1], [0], [0], [1], [0, 0, 1, 1], [], []>} : vector<1x64xf32>, vector<64x128xf32>, vector<1x128xf32> -> vector<1x128xf32>
    %224 = arith.addf %219, %223 : vector<1x128xf32>
    %225 = vector.extract_strided_slice %218 {offsets = [1, 0], sizes = [1, 64], strides = [1, 1]} : vector<4x64xf32> to vector<1x64xf32>
    %c1_123 = arith.constant 1 : index
    %c0_124 = arith.constant 0 : index
    %c0_125 = arith.constant 0 : index
    %226 = vector.load %arg7[%c1_123, %c0_124, %c0_125] : memref<4x64x128xf32, #tpu.memory_space<vmem>>, vector<1x64x128xf32>
    %227 = vector.shape_cast %226 : vector<1x64x128xf32> to vector<64x128xf32>
    %cst_126 = arith.constant dense<0.000000e+00> : vector<1x128xf32>
    %228 = tpu.matmul %225, %227, %cst_126 {dimension_numbers = #tpu.dot_dimension_numbers<[1], [0], [0], [1], [0, 0, 1, 1], [], []>} : vector<1x64xf32>, vector<64x128xf32>, vector<1x128xf32> -> vector<1x128xf32>
    %229 = arith.addf %224, %228 : vector<1x128xf32>
    %230 = vector.extract_strided_slice %218 {offsets = [2, 0], sizes = [1, 64], strides = [1, 1]} : vector<4x64xf32> to vector<1x64xf32>
    %c2_127 = arith.constant 2 : index
    %c0_128 = arith.constant 0 : index
    %c0_129 = arith.constant 0 : index
    %231 = vector.load %arg7[%c2_127, %c0_128, %c0_129] : memref<4x64x128xf32, #tpu.memory_space<vmem>>, vector<1x64x128xf32>
    %232 = vector.shape_cast %231 : vector<1x64x128xf32> to vector<64x128xf32>
    %cst_130 = arith.constant dense<0.000000e+00> : vector<1x128xf32>
    %233 = tpu.matmul %230, %232, %cst_130 {dimension_numbers = #tpu.dot_dimension_numbers<[1], [0], [0], [1], [0, 0, 1, 1], [], []>} : vector<1x64xf32>, vector<64x128xf32>, vector<1x128xf32> -> vector<1x128xf32>
    %234 = arith.addf %229, %233 : vector<1x128xf32>
    %235 = vector.extract_strided_slice %218 {offsets = [3, 0], sizes = [1, 64], strides = [1, 1]} : vector<4x64xf32> to vector<1x64xf32>
    %c3_131 = arith.constant 3 : index
    %c0_132 = arith.constant 0 : index
    %c0_133 = arith.constant 0 : index
    %236 = vector.load %arg7[%c3_131, %c0_132, %c0_133] : memref<4x64x128xf32, #tpu.memory_space<vmem>>, vector<1x64x128xf32>
    %237 = vector.shape_cast %236 : vector<1x64x128xf32> to vector<64x128xf32>
    %cst_134 = arith.constant dense<0.000000e+00> : vector<1x128xf32>
    %238 = tpu.matmul %235, %237, %cst_134 {dimension_numbers = #tpu.dot_dimension_numbers<[1], [0], [0], [1], [0, 0, 1, 1], [], []>} : vector<1x64xf32>, vector<64x128xf32>, vector<1x128xf32> -> vector<1x128xf32>
    %239 = arith.addf %234, %238 : vector<1x128xf32>
    %cst_135 = arith.constant 0.000000e+00 : f32
    %240 = vector.broadcast %cst_135 : f32 to vector<1x128xf32>
    %241 = arith.maximumf %239, %240 : vector<1x128xf32>
    %c0_136 = arith.constant 0 : index
    %c0_137 = arith.constant 0 : index
    %242 = vector.load %arg9[%c0_136, %c0_137] : memref<128x128xf32, #tpu.memory_space<vmem>>, vector<128x128xf32>
    %cst_138 = arith.constant dense<0.000000e+00> : vector<1x128xf32>
    %243 = tpu.matmul %241, %242, %cst_138 {dimension_numbers = #tpu.dot_dimension_numbers<[1], [0], [0], [1], [0, 0, 1, 1], [], []>} : vector<1x128xf32>, vector<128x128xf32>, vector<1x128xf32> -> vector<1x128xf32>
    %c0_139 = arith.constant 0 : index
    %c0_140 = arith.constant 0 : index
    %244 = vector.load %arg10[%c0_139, %c0_140] : memref<1x128xf32, #tpu.memory_space<vmem>>, vector<1x128xf32>
    %245 = arith.addf %243, %244 : vector<1x128xf32>
    %cst_141 = arith.constant 0.000000e+00 : f32
    %246 = vector.broadcast %cst_141 : f32 to vector<1x128xf32>
    %247 = arith.maximumf %245, %246 : vector<1x128xf32>
    %c0_142 = arith.constant 0 : index
    %c0_143 = arith.constant 0 : index
    %248 = vector.load %arg11[%c0_142, %c0_143] : memref<128x128xf32, #tpu.memory_space<vmem>>, vector<128x128xf32>
    %cst_144 = arith.constant dense<0.000000e+00> : vector<1x128xf32>
    %249 = tpu.matmul %247, %248, %cst_144 {dimension_numbers = #tpu.dot_dimension_numbers<[1], [0], [0], [1], [0, 0, 1, 1], [], []>} : vector<1x128xf32>, vector<128x128xf32>, vector<1x128xf32> -> vector<1x128xf32>
    %c0_145 = arith.constant 0 : index
    %c0_146 = arith.constant 0 : index
    %250 = vector.load %arg12[%c0_145, %c0_146] : memref<1x128xf32, #tpu.memory_space<vmem>>, vector<1x128xf32>
    %251 = arith.addf %249, %250 : vector<1x128xf32>
    %c0_147 = arith.constant 0 : index
    %c0_148 = arith.constant 0 : index
    %252 = vector.load %arg13[%c0_147, %c0_148] : memref<2x128xf32, #tpu.memory_space<vmem>>, vector<1x128xf32>
    tpu.vector_store %arg13[%c0_147, %c0_148], %251 {strides = array<i32>} : memref<2x128xf32, #tpu.memory_space<vmem>>, vector<1x128xf32>,
    %c30_149 = arith.constant 30 : index
    %c0_150 = arith.constant 0 : index
    %253 = vector.load %arg0[%c30_149, %c0_150] : memref<60x30xf32, #tpu.memory_space<vmem>>, vector<28x30xf32>
    %c0_151 = arith.constant 0 : index
    %c0_152 = arith.constant 0 : index
    %c0_153 = arith.constant 0 : index
    %254 = vector.load %arg1[%c0_151, %c0_152, %c0_153] : memref<3x30x168xf32, #tpu.memory_space<vmem>>, vector<1x30x168xf32>
    %255 = vector.shape_cast %254 : vector<1x30x168xf32> to vector<30x168xf32>
    %cst_154 = arith.constant dense<0.000000e+00> : vector<28x168xf32>
    %256 = tpu.matmul %253, %255, %cst_154 {dimension_numbers = #tpu.dot_dimension_numbers<[1], [0], [0], [1], [0, 0, 1, 1], [], []>} : vector<28x30xf32>, vector<30x168xf32>, vector<28x168xf32> -> vector<28x168xf32>
    %c31 = arith.constant 31 : index
    %c0_155 = arith.constant 0 : index
    %257 = vector.load %arg0[%c31, %c0_155] : memref<60x30xf32, #tpu.memory_space<vmem>>, vector<28x30xf32>
    %c1_156 = arith.constant 1 : index
    %c0_157 = arith.constant 0 : index
    %c0_158 = arith.constant 0 : index
    %258 = vector.load %arg1[%c1_156, %c0_157, %c0_158] : memref<3x30x168xf32, #tpu.memory_space<vmem>>, vector<1x30x168xf32>
    %259 = vector.shape_cast %258 : vector<1x30x168xf32> to vector<30x168xf32>
    %cst_159 = arith.constant dense<0.000000e+00> : vector<28x168xf32>
    %260 = tpu.matmul %257, %259, %cst_159 {dimension_numbers = #tpu.dot_dimension_numbers<[1], [0], [0], [1], [0, 0, 1, 1], [], []>} : vector<28x30xf32>, vector<30x168xf32>, vector<28x168xf32> -> vector<28x168xf32>
    %261 = arith.addf %256, %260 : vector<28x168xf32>
    %c32_160 = arith.constant 32 : index
    %c0_161 = arith.constant 0 : index
    %262 = vector.load %arg0[%c32_160, %c0_161] : memref<60x30xf32, #tpu.memory_space<vmem>>, vector<28x30xf32>
    %c2_162 = arith.constant 2 : index
    %c0_163 = arith.constant 0 : index
    %c0_164 = arith.constant 0 : index
    %263 = vector.load %arg1[%c2_162, %c0_163, %c0_164] : memref<3x30x168xf32, #tpu.memory_space<vmem>>, vector<1x30x168xf32>
    %264 = vector.shape_cast %263 : vector<1x30x168xf32> to vector<30x168xf32>
    %cst_165 = arith.constant dense<0.000000e+00> : vector<28x168xf32>
    %265 = tpu.matmul %262, %264, %cst_165 {dimension_numbers = #tpu.dot_dimension_numbers<[1], [0], [0], [1], [0, 0, 1, 1], [], []>} : vector<28x30xf32>, vector<30x168xf32>, vector<28x168xf32> -> vector<28x168xf32>
    %266 = arith.addf %261, %265 : vector<28x168xf32>
    %c0_166 = arith.constant 0 : index
    %c0_167 = arith.constant 0 : index
    %267 = vector.load %arg2[%c0_166, %c0_167] : memref<1x168xf32, #tpu.memory_space<vmem>>, vector<1x168xf32>
    %268 = vector.broadcast %267 : vector<1x168xf32> to vector<28x168xf32>
    %269 = arith.addf %266, %268 : vector<28x168xf32>
    %cst_168 = arith.constant 0.000000e+00 : f32
    %270 = vector.broadcast %cst_168 : f32 to vector<28x168xf32>
    %271 = arith.maximumf %269, %270 : vector<28x168xf32>
    %272 = vector.extract_strided_slice %271 {offsets = [0, 0], sizes = [1, 168], strides = [1, 1]} : vector<28x168xf32> to vector<1x168xf32>
    %273 = vector.extract_strided_slice %271 {offsets = [1, 0], sizes = [1, 168], strides = [1, 1]} : vector<28x168xf32> to vector<1x168xf32>
    %274 = arith.maximumf %272, %273 : vector<1x168xf32>
    %c0_169 = arith.constant 0 : index
    %c0_170 = arith.constant 0 : index
    %275 = vector.load %arg16[%c0_169, %c0_170] : memref<14x168xf32, #tpu.memory_space<vmem>>, vector<1x168xf32>
    tpu.vector_store %arg16[%c0_169, %c0_170], %274 {strides = array<i32>} : memref<14x168xf32, #tpu.memory_space<vmem>>, vector<1x168xf32>,
    %276 = vector.extract_strided_slice %271 {offsets = [2, 0], sizes = [1, 168], strides = [1, 1]} : vector<28x168xf32> to vector<1x168xf32>
    %277 = vector.extract_strided_slice %271 {offsets = [3, 0], sizes = [1, 168], strides = [1, 1]} : vector<28x168xf32> to vector<1x168xf32>
    %278 = arith.maximumf %276, %277 : vector<1x168xf32>
    %c1_171 = arith.constant 1 : index
    %c0_172 = arith.constant 0 : index
    %279 = vector.load %arg16[%c1_171, %c0_172] : memref<14x168xf32, #tpu.memory_space<vmem>>, vector<1x168xf32>
    tpu.vector_store %arg16[%c1_171, %c0_172], %278 {strides = array<i32>} : memref<14x168xf32, #tpu.memory_space<vmem>>, vector<1x168xf32>,
    %280 = vector.extract_strided_slice %271 {offsets = [4, 0], sizes = [1, 168], strides = [1, 1]} : vector<28x168xf32> to vector<1x168xf32>
    %281 = vector.extract_strided_slice %271 {offsets = [5, 0], sizes = [1, 168], strides = [1, 1]} : vector<28x168xf32> to vector<1x168xf32>
    %282 = arith.maximumf %280, %281 : vector<1x168xf32>
    %c2_173 = arith.constant 2 : index
    %c0_174 = arith.constant 0 : index
    %283 = vector.load %arg16[%c2_173, %c0_174] : memref<14x168xf32, #tpu.memory_space<vmem>>, vector<1x168xf32>
    tpu.vector_store %arg16[%c2_173, %c0_174], %282 {strides = array<i32>} : memref<14x168xf32, #tpu.memory_space<vmem>>, vector<1x168xf32>,
    %284 = vector.extract_strided_slice %271 {offsets = [6, 0], sizes = [1, 168], strides = [1, 1]} : vector<28x168xf32> to vector<1x168xf32>
    %285 = vector.extract_strided_slice %271 {offsets = [7, 0], sizes = [1, 168], strides = [1, 1]} : vector<28x168xf32> to vector<1x168xf32>
    %286 = arith.maximumf %284, %285 : vector<1x168xf32>
    %c3_175 = arith.constant 3 : index
    %c0_176 = arith.constant 0 : index
    %287 = vector.load %arg16[%c3_175, %c0_176] : memref<14x168xf32, #tpu.memory_space<vmem>>, vector<1x168xf32>
    tpu.vector_store %arg16[%c3_175, %c0_176], %286 {strides = array<i32>} : memref<14x168xf32, #tpu.memory_space<vmem>>, vector<1x168xf32>,
    %288 = vector.extract_strided_slice %271 {offsets = [8, 0], sizes = [1, 168], strides = [1, 1]} : vector<28x168xf32> to vector<1x168xf32>
    %289 = vector.extract_strided_slice %271 {offsets = [9, 0], sizes = [1, 168], strides = [1, 1]} : vector<28x168xf32> to vector<1x168xf32>
    %290 = arith.maximumf %288, %289 : vector<1x168xf32>
    %c4_177 = arith.constant 4 : index
    %c0_178 = arith.constant 0 : index
    %291 = vector.load %arg16[%c4_177, %c0_178] : memref<14x168xf32, #tpu.memory_space<vmem>>, vector<1x168xf32>
    tpu.vector_store %arg16[%c4_177, %c0_178], %290 {strides = array<i32>} : memref<14x168xf32, #tpu.memory_space<vmem>>, vector<1x168xf32>,
    %292 = vector.extract_strided_slice %271 {offsets = [10, 0], sizes = [1, 168], strides = [1, 1]} : vector<28x168xf32> to vector<1x168xf32>
    %293 = vector.extract_strided_slice %271 {offsets = [11, 0], sizes = [1, 168], strides = [1, 1]} : vector<28x168xf32> to vector<1x168xf32>
    %294 = arith.maximumf %292, %293 : vector<1x168xf32>
    %c5_179 = arith.constant 5 : index
    %c0_180 = arith.constant 0 : index
    %295 = vector.load %arg16[%c5_179, %c0_180] : memref<14x168xf32, #tpu.memory_space<vmem>>, vector<1x168xf32>
    tpu.vector_store %arg16[%c5_179, %c0_180], %294 {strides = array<i32>} : memref<14x168xf32, #tpu.memory_space<vmem>>, vector<1x168xf32>,
    %296 = vector.extract_strided_slice %271 {offsets = [12, 0], sizes = [1, 168], strides = [1, 1]} : vector<28x168xf32> to vector<1x168xf32>
    %297 = vector.extract_strided_slice %271 {offsets = [13, 0], sizes = [1, 168], strides = [1, 1]} : vector<28x168xf32> to vector<1x168xf32>
    %298 = arith.maximumf %296, %297 : vector<1x168xf32>
    %c6_181 = arith.constant 6 : index
    %c0_182 = arith.constant 0 : index
    %299 = vector.load %arg16[%c6_181, %c0_182] : memref<14x168xf32, #tpu.memory_space<vmem>>, vector<1x168xf32>
    tpu.vector_store %arg16[%c6_181, %c0_182], %298 {strides = array<i32>} : memref<14x168xf32, #tpu.memory_space<vmem>>, vector<1x168xf32>,
    %300 = vector.extract_strided_slice %271 {offsets = [14, 0], sizes = [1, 168], strides = [1, 1]} : vector<28x168xf32> to vector<1x168xf32>
    %301 = vector.extract_strided_slice %271 {offsets = [15, 0], sizes = [1, 168], strides = [1, 1]} : vector<28x168xf32> to vector<1x168xf32>
    %302 = arith.maximumf %300, %301 : vector<1x168xf32>
    %c7_183 = arith.constant 7 : index
    %c0_184 = arith.constant 0 : index
    %303 = vector.load %arg16[%c7_183, %c0_184] : memref<14x168xf32, #tpu.memory_space<vmem>>, vector<1x168xf32>
    tpu.vector_store %arg16[%c7_183, %c0_184], %302 {strides = array<i32>} : memref<14x168xf32, #tpu.memory_space<vmem>>, vector<1x168xf32>,
    %304 = vector.extract_strided_slice %271 {offsets = [16, 0], sizes = [1, 168], strides = [1, 1]} : vector<28x168xf32> to vector<1x168xf32>
    %305 = vector.extract_strided_slice %271 {offsets = [17, 0], sizes = [1, 168], strides = [1, 1]} : vector<28x168xf32> to vector<1x168xf32>
    %306 = arith.maximumf %304, %305 : vector<1x168xf32>
    %c8_185 = arith.constant 8 : index
    %c0_186 = arith.constant 0 : index
    %307 = vector.load %arg16[%c8_185, %c0_186] : memref<14x168xf32, #tpu.memory_space<vmem>>, vector<1x168xf32>
    tpu.vector_store %arg16[%c8_185, %c0_186], %306 {strides = array<i32>} : memref<14x168xf32, #tpu.memory_space<vmem>>, vector<1x168xf32>,
    %308 = vector.extract_strided_slice %271 {offsets = [18, 0], sizes = [1, 168], strides = [1, 1]} : vector<28x168xf32> to vector<1x168xf32>
    %309 = vector.extract_strided_slice %271 {offsets = [19, 0], sizes = [1, 168], strides = [1, 1]} : vector<28x168xf32> to vector<1x168xf32>
    %310 = arith.maximumf %308, %309 : vector<1x168xf32>
    %c9_187 = arith.constant 9 : index
    %c0_188 = arith.constant 0 : index
    %311 = vector.load %arg16[%c9_187, %c0_188] : memref<14x168xf32, #tpu.memory_space<vmem>>, vector<1x168xf32>
    tpu.vector_store %arg16[%c9_187, %c0_188], %310 {strides = array<i32>} : memref<14x168xf32, #tpu.memory_space<vmem>>, vector<1x168xf32>,
    %312 = vector.extract_strided_slice %271 {offsets = [20, 0], sizes = [1, 168], strides = [1, 1]} : vector<28x168xf32> to vector<1x168xf32>
    %313 = vector.extract_strided_slice %271 {offsets = [21, 0], sizes = [1, 168], strides = [1, 1]} : vector<28x168xf32> to vector<1x168xf32>
    %314 = arith.maximumf %312, %313 : vector<1x168xf32>
    %c10_189 = arith.constant 10 : index
    %c0_190 = arith.constant 0 : index
    %315 = vector.load %arg16[%c10_189, %c0_190] : memref<14x168xf32, #tpu.memory_space<vmem>>, vector<1x168xf32>
    tpu.vector_store %arg16[%c10_189, %c0_190], %314 {strides = array<i32>} : memref<14x168xf32, #tpu.memory_space<vmem>>, vector<1x168xf32>,
    %316 = vector.extract_strided_slice %271 {offsets = [22, 0], sizes = [1, 168], strides = [1, 1]} : vector<28x168xf32> to vector<1x168xf32>
    %317 = vector.extract_strided_slice %271 {offsets = [23, 0], sizes = [1, 168], strides = [1, 1]} : vector<28x168xf32> to vector<1x168xf32>
    %318 = arith.maximumf %316, %317 : vector<1x168xf32>
    %c11_191 = arith.constant 11 : index
    %c0_192 = arith.constant 0 : index
    %319 = vector.load %arg16[%c11_191, %c0_192] : memref<14x168xf32, #tpu.memory_space<vmem>>, vector<1x168xf32>
    tpu.vector_store %arg16[%c11_191, %c0_192], %318 {strides = array<i32>} : memref<14x168xf32, #tpu.memory_space<vmem>>, vector<1x168xf32>,
    %320 = vector.extract_strided_slice %271 {offsets = [24, 0], sizes = [1, 168], strides = [1, 1]} : vector<28x168xf32> to vector<1x168xf32>
    %321 = vector.extract_strided_slice %271 {offsets = [25, 0], sizes = [1, 168], strides = [1, 1]} : vector<28x168xf32> to vector<1x168xf32>
    %322 = arith.maximumf %320, %321 : vector<1x168xf32>
    %c12_193 = arith.constant 12 : index
    %c0_194 = arith.constant 0 : index
    %323 = vector.load %arg16[%c12_193, %c0_194] : memref<14x168xf32, #tpu.memory_space<vmem>>, vector<1x168xf32>
    tpu.vector_store %arg16[%c12_193, %c0_194], %322 {strides = array<i32>} : memref<14x168xf32, #tpu.memory_space<vmem>>, vector<1x168xf32>,
    %324 = vector.extract_strided_slice %271 {offsets = [26, 0], sizes = [1, 168], strides = [1, 1]} : vector<28x168xf32> to vector<1x168xf32>
    %325 = vector.extract_strided_slice %271 {offsets = [27, 0], sizes = [1, 168], strides = [1, 1]} : vector<28x168xf32> to vector<1x168xf32>
    %326 = arith.maximumf %324, %325 : vector<1x168xf32>
    %c13_195 = arith.constant 13 : index
    %c0_196 = arith.constant 0 : index
    %327 = vector.load %arg16[%c13_195, %c0_196] : memref<14x168xf32, #tpu.memory_space<vmem>>, vector<1x168xf32>
    tpu.vector_store %arg16[%c13_195, %c0_196], %326 {strides = array<i32>} : memref<14x168xf32, #tpu.memory_space<vmem>>, vector<1x168xf32>,
    %c0_197 = arith.constant 0 : index
    %c0_198 = arith.constant 0 : index
    %328 = vector.load %arg16[%c0_197, %c0_198] : memref<14x168xf32, #tpu.memory_space<vmem>>, vector<14x168xf32>
    %329 = vector.extract_strided_slice %328 {offsets = [0, 0], sizes = [14, 6], strides = [1, 1]} : vector<14x168xf32> to vector<14x6xf32>
    %330 = vector.extract_strided_slice %328 {offsets = [0, 6], sizes = [14, 6], strides = [1, 1]} : vector<14x168xf32> to vector<14x6xf32>
    %331 = arith.maximumf %329, %330 : vector<14x6xf32>
    %c14 = arith.constant 14 : index
    %c0_199 = arith.constant 0 : index
    %332 = vector.load %arg14[%c14, %c0_199] : memref<28x84xf32, #tpu.memory_space<vmem>>, vector<14x6xf32>
    tpu.vector_store %arg14[%c14, %c0_199], %331 {strides = array<i32>} : memref<28x84xf32, #tpu.memory_space<vmem>>, vector<14x6xf32>,
    %333 = vector.extract_strided_slice %328 {offsets = [0, 12], sizes = [14, 6], strides = [1, 1]} : vector<14x168xf32> to vector<14x6xf32>
    %334 = vector.extract_strided_slice %328 {offsets = [0, 18], sizes = [14, 6], strides = [1, 1]} : vector<14x168xf32> to vector<14x6xf32>
    %335 = arith.maximumf %333, %334 : vector<14x6xf32>
    %c14_200 = arith.constant 14 : index
    %c6_201 = arith.constant 6 : index
    %336 = vector.load %arg14[%c14_200, %c6_201] : memref<28x84xf32, #tpu.memory_space<vmem>>, vector<14x6xf32>
    tpu.vector_store %arg14[%c14_200, %c6_201], %335 {strides = array<i32>} : memref<28x84xf32, #tpu.memory_space<vmem>>, vector<14x6xf32>,
    %337 = vector.extract_strided_slice %328 {offsets = [0, 24], sizes = [14, 6], strides = [1, 1]} : vector<14x168xf32> to vector<14x6xf32>
    %338 = vector.extract_strided_slice %328 {offsets = [0, 30], sizes = [14, 6], strides = [1, 1]} : vector<14x168xf32> to vector<14x6xf32>
    %339 = arith.maximumf %337, %338 : vector<14x6xf32>
    %c14_202 = arith.constant 14 : index
    %c12_203 = arith.constant 12 : index
    %340 = vector.load %arg14[%c14_202, %c12_203] : memref<28x84xf32, #tpu.memory_space<vmem>>, vector<14x6xf32>
    tpu.vector_store %arg14[%c14_202, %c12_203], %339 {strides = array<i32>} : memref<28x84xf32, #tpu.memory_space<vmem>>, vector<14x6xf32>,
    %341 = vector.extract_strided_slice %328 {offsets = [0, 36], sizes = [14, 6], strides = [1, 1]} : vector<14x168xf32> to vector<14x6xf32>
    %342 = vector.extract_strided_slice %328 {offsets = [0, 42], sizes = [14, 6], strides = [1, 1]} : vector<14x168xf32> to vector<14x6xf32>
    %343 = arith.maximumf %341, %342 : vector<14x6xf32>
    %c14_204 = arith.constant 14 : index
    %c18_205 = arith.constant 18 : index
    %344 = vector.load %arg14[%c14_204, %c18_205] : memref<28x84xf32, #tpu.memory_space<vmem>>, vector<14x6xf32>
    tpu.vector_store %arg14[%c14_204, %c18_205], %343 {strides = array<i32>} : memref<28x84xf32, #tpu.memory_space<vmem>>, vector<14x6xf32>,
    %345 = vector.extract_strided_slice %328 {offsets = [0, 48], sizes = [14, 6], strides = [1, 1]} : vector<14x168xf32> to vector<14x6xf32>
    %346 = vector.extract_strided_slice %328 {offsets = [0, 54], sizes = [14, 6], strides = [1, 1]} : vector<14x168xf32> to vector<14x6xf32>
    %347 = arith.maximumf %345, %346 : vector<14x6xf32>
    %c14_206 = arith.constant 14 : index
    %c24_207 = arith.constant 24 : index
    %348 = vector.load %arg14[%c14_206, %c24_207] : memref<28x84xf32, #tpu.memory_space<vmem>>, vector<14x6xf32>
    tpu.vector_store %arg14[%c14_206, %c24_207], %347 {strides = array<i32>} : memref<28x84xf32, #tpu.memory_space<vmem>>, vector<14x6xf32>,
    %349 = vector.extract_strided_slice %328 {offsets = [0, 60], sizes = [14, 6], strides = [1, 1]} : vector<14x168xf32> to vector<14x6xf32>
    %350 = vector.extract_strided_slice %328 {offsets = [0, 66], sizes = [14, 6], strides = [1, 1]} : vector<14x168xf32> to vector<14x6xf32>
    %351 = arith.maximumf %349, %350 : vector<14x6xf32>
    %c14_208 = arith.constant 14 : index
    %c30_209 = arith.constant 30 : index
    %352 = vector.load %arg14[%c14_208, %c30_209] : memref<28x84xf32, #tpu.memory_space<vmem>>, vector<14x6xf32>
    tpu.vector_store %arg14[%c14_208, %c30_209], %351 {strides = array<i32>} : memref<28x84xf32, #tpu.memory_space<vmem>>, vector<14x6xf32>,
    %353 = vector.extract_strided_slice %328 {offsets = [0, 72], sizes = [14, 6], strides = [1, 1]} : vector<14x168xf32> to vector<14x6xf32>
    %354 = vector.extract_strided_slice %328 {offsets = [0, 78], sizes = [14, 6], strides = [1, 1]} : vector<14x168xf32> to vector<14x6xf32>
    %355 = arith.maximumf %353, %354 : vector<14x6xf32>
    %c14_210 = arith.constant 14 : index
    %c36_211 = arith.constant 36 : index
    %356 = vector.load %arg14[%c14_210, %c36_211] : memref<28x84xf32, #tpu.memory_space<vmem>>, vector<14x6xf32>
    tpu.vector_store %arg14[%c14_210, %c36_211], %355 {strides = array<i32>} : memref<28x84xf32, #tpu.memory_space<vmem>>, vector<14x6xf32>,
    %357 = vector.extract_strided_slice %328 {offsets = [0, 84], sizes = [14, 6], strides = [1, 1]} : vector<14x168xf32> to vector<14x6xf32>
    %358 = vector.extract_strided_slice %328 {offsets = [0, 90], sizes = [14, 6], strides = [1, 1]} : vector<14x168xf32> to vector<14x6xf32>
    %359 = arith.maximumf %357, %358 : vector<14x6xf32>
    %c14_212 = arith.constant 14 : index
    %c42_213 = arith.constant 42 : index
    %360 = vector.load %arg14[%c14_212, %c42_213] : memref<28x84xf32, #tpu.memory_space<vmem>>, vector<14x6xf32>
    tpu.vector_store %arg14[%c14_212, %c42_213], %359 {strides = array<i32>} : memref<28x84xf32, #tpu.memory_space<vmem>>, vector<14x6xf32>,
    %361 = vector.extract_strided_slice %328 {offsets = [0, 96], sizes = [14, 6], strides = [1, 1]} : vector<14x168xf32> to vector<14x6xf32>
    %362 = vector.extract_strided_slice %328 {offsets = [0, 102], sizes = [14, 6], strides = [1, 1]} : vector<14x168xf32> to vector<14x6xf32>
    %363 = arith.maximumf %361, %362 : vector<14x6xf32>
    %c14_214 = arith.constant 14 : index
    %c48_215 = arith.constant 48 : index
    %364 = vector.load %arg14[%c14_214, %c48_215] : memref<28x84xf32, #tpu.memory_space<vmem>>, vector<14x6xf32>
    tpu.vector_store %arg14[%c14_214, %c48_215], %363 {strides = array<i32>} : memref<28x84xf32, #tpu.memory_space<vmem>>, vector<14x6xf32>,
    %365 = vector.extract_strided_slice %328 {offsets = [0, 108], sizes = [14, 6], strides = [1, 1]} : vector<14x168xf32> to vector<14x6xf32>
    %366 = vector.extract_strided_slice %328 {offsets = [0, 114], sizes = [14, 6], strides = [1, 1]} : vector<14x168xf32> to vector<14x6xf32>
    %367 = arith.maximumf %365, %366 : vector<14x6xf32>
    %c14_216 = arith.constant 14 : index
    %c54_217 = arith.constant 54 : index
    %368 = vector.load %arg14[%c14_216, %c54_217] : memref<28x84xf32, #tpu.memory_space<vmem>>, vector<14x6xf32>
    tpu.vector_store %arg14[%c14_216, %c54_217], %367 {strides = array<i32>} : memref<28x84xf32, #tpu.memory_space<vmem>>, vector<14x6xf32>,
    %369 = vector.extract_strided_slice %328 {offsets = [0, 120], sizes = [14, 6], strides = [1, 1]} : vector<14x168xf32> to vector<14x6xf32>
    %370 = vector.extract_strided_slice %328 {offsets = [0, 126], sizes = [14, 6], strides = [1, 1]} : vector<14x168xf32> to vector<14x6xf32>
    %371 = arith.maximumf %369, %370 : vector<14x6xf32>
    %c14_218 = arith.constant 14 : index
    %c60_219 = arith.constant 60 : index
    %372 = vector.load %arg14[%c14_218, %c60_219] : memref<28x84xf32, #tpu.memory_space<vmem>>, vector<14x6xf32>
    tpu.vector_store %arg14[%c14_218, %c60_219], %371 {strides = array<i32>} : memref<28x84xf32, #tpu.memory_space<vmem>>, vector<14x6xf32>,
    %373 = vector.extract_strided_slice %328 {offsets = [0, 132], sizes = [14, 6], strides = [1, 1]} : vector<14x168xf32> to vector<14x6xf32>
    %374 = vector.extract_strided_slice %328 {offsets = [0, 138], sizes = [14, 6], strides = [1, 1]} : vector<14x168xf32> to vector<14x6xf32>
    %375 = arith.maximumf %373, %374 : vector<14x6xf32>
    %c14_220 = arith.constant 14 : index
    %c66_221 = arith.constant 66 : index
    %376 = vector.load %arg14[%c14_220, %c66_221] : memref<28x84xf32, #tpu.memory_space<vmem>>, vector<14x6xf32>
    tpu.vector_store %arg14[%c14_220, %c66_221], %375 {strides = array<i32>} : memref<28x84xf32, #tpu.memory_space<vmem>>, vector<14x6xf32>,
    %377 = vector.extract_strided_slice %328 {offsets = [0, 144], sizes = [14, 6], strides = [1, 1]} : vector<14x168xf32> to vector<14x6xf32>
    %378 = vector.extract_strided_slice %328 {offsets = [0, 150], sizes = [14, 6], strides = [1, 1]} : vector<14x168xf32> to vector<14x6xf32>
    %379 = arith.maximumf %377, %378 : vector<14x6xf32>
    %c14_222 = arith.constant 14 : index
    %c72_223 = arith.constant 72 : index
    %380 = vector.load %arg14[%c14_222, %c72_223] : memref<28x84xf32, #tpu.memory_space<vmem>>, vector<14x6xf32>
    tpu.vector_store %arg14[%c14_222, %c72_223], %379 {strides = array<i32>} : memref<28x84xf32, #tpu.memory_space<vmem>>, vector<14x6xf32>,
    %381 = vector.extract_strided_slice %328 {offsets = [0, 156], sizes = [14, 6], strides = [1, 1]} : vector<14x168xf32> to vector<14x6xf32>
    %382 = vector.extract_strided_slice %328 {offsets = [0, 162], sizes = [14, 6], strides = [1, 1]} : vector<14x168xf32> to vector<14x6xf32>
    %383 = arith.maximumf %381, %382 : vector<14x6xf32>
    %c14_224 = arith.constant 14 : index
    %c78_225 = arith.constant 78 : index
    %384 = vector.load %arg14[%c14_224, %c78_225] : memref<28x84xf32, #tpu.memory_space<vmem>>, vector<14x6xf32>
    tpu.vector_store %arg14[%c14_224, %c78_225], %383 {strides = array<i32>} : memref<28x84xf32, #tpu.memory_space<vmem>>, vector<14x6xf32>,
    %c14_226 = arith.constant 14 : index
    %c0_227 = arith.constant 0 : index
    %385 = vector.load %arg14[%c14_226, %c0_227] : memref<28x84xf32, #tpu.memory_space<vmem>>, vector<12x84xf32>
    %c0_228 = arith.constant 0 : index
    %c0_229 = arith.constant 0 : index
    %c0_230 = arith.constant 0 : index
    %386 = vector.load %arg3[%c0_228, %c0_229, %c0_230] : memref<3x84x192xf32, #tpu.memory_space<vmem>>, vector<1x84x192xf32>
    %387 = vector.shape_cast %386 : vector<1x84x192xf32> to vector<84x192xf32>
    %cst_231 = arith.constant dense<0.000000e+00> : vector<12x192xf32>
    %388 = tpu.matmul %385, %387, %cst_231 {dimension_numbers = #tpu.dot_dimension_numbers<[1], [0], [0], [1], [0, 0, 1, 1], [], []>} : vector<12x84xf32>, vector<84x192xf32>, vector<12x192xf32> -> vector<12x192xf32>
    %c15 = arith.constant 15 : index
    %c0_232 = arith.constant 0 : index
    %389 = vector.load %arg14[%c15, %c0_232] : memref<28x84xf32, #tpu.memory_space<vmem>>, vector<12x84xf32>
    %c1_233 = arith.constant 1 : index
    %c0_234 = arith.constant 0 : index
    %c0_235 = arith.constant 0 : index
    %390 = vector.load %arg3[%c1_233, %c0_234, %c0_235] : memref<3x84x192xf32, #tpu.memory_space<vmem>>, vector<1x84x192xf32>
    %391 = vector.shape_cast %390 : vector<1x84x192xf32> to vector<84x192xf32>
    %cst_236 = arith.constant dense<0.000000e+00> : vector<12x192xf32>
    %392 = tpu.matmul %389, %391, %cst_236 {dimension_numbers = #tpu.dot_dimension_numbers<[1], [0], [0], [1], [0, 0, 1, 1], [], []>} : vector<12x84xf32>, vector<84x192xf32>, vector<12x192xf32> -> vector<12x192xf32>
    %393 = arith.addf %388, %392 : vector<12x192xf32>
    %c16_237 = arith.constant 16 : index
    %c0_238 = arith.constant 0 : index
    %394 = vector.load %arg14[%c16_237, %c0_238] : memref<28x84xf32, #tpu.memory_space<vmem>>, vector<12x84xf32>
    %c2_239 = arith.constant 2 : index
    %c0_240 = arith.constant 0 : index
    %c0_241 = arith.constant 0 : index
    %395 = vector.load %arg3[%c2_239, %c0_240, %c0_241] : memref<3x84x192xf32, #tpu.memory_space<vmem>>, vector<1x84x192xf32>
    %396 = vector.shape_cast %395 : vector<1x84x192xf32> to vector<84x192xf32>
    %cst_242 = arith.constant dense<0.000000e+00> : vector<12x192xf32>
    %397 = tpu.matmul %394, %396, %cst_242 {dimension_numbers = #tpu.dot_dimension_numbers<[1], [0], [0], [1], [0, 0, 1, 1], [], []>} : vector<12x84xf32>, vector<84x192xf32>, vector<12x192xf32> -> vector<12x192xf32>
    %398 = arith.addf %393, %397 : vector<12x192xf32>
    %c0_243 = arith.constant 0 : index
    %c0_244 = arith.constant 0 : index
    %399 = vector.load %arg4[%c0_243, %c0_244] : memref<1x192xf32, #tpu.memory_space<vmem>>, vector<1x192xf32>
    %400 = vector.broadcast %399 : vector<1x192xf32> to vector<12x192xf32>
    %401 = arith.addf %398, %400 : vector<12x192xf32>
    %cst_245 = arith.constant 0.000000e+00 : f32
    %402 = vector.broadcast %cst_245 : f32 to vector<12x192xf32>
    %403 = arith.maximumf %401, %402 : vector<12x192xf32>
    %404 = vector.extract_strided_slice %403 {offsets = [0, 0], sizes = [1, 192], strides = [1, 1]} : vector<12x192xf32> to vector<1x192xf32>
    %405 = vector.extract_strided_slice %403 {offsets = [1, 0], sizes = [1, 192], strides = [1, 1]} : vector<12x192xf32> to vector<1x192xf32>
    %406 = arith.maximumf %404, %405 : vector<1x192xf32>
    %c0_246 = arith.constant 0 : index
    %c0_247 = arith.constant 0 : index
    %407 = vector.load %arg17[%c0_246, %c0_247] : memref<6x192xf32, #tpu.memory_space<vmem>>, vector<1x192xf32>
    tpu.vector_store %arg17[%c0_246, %c0_247], %406 {strides = array<i32>} : memref<6x192xf32, #tpu.memory_space<vmem>>, vector<1x192xf32>,
    %408 = vector.extract_strided_slice %403 {offsets = [2, 0], sizes = [1, 192], strides = [1, 1]} : vector<12x192xf32> to vector<1x192xf32>
    %409 = vector.extract_strided_slice %403 {offsets = [3, 0], sizes = [1, 192], strides = [1, 1]} : vector<12x192xf32> to vector<1x192xf32>
    %410 = arith.maximumf %408, %409 : vector<1x192xf32>
    %c1_248 = arith.constant 1 : index
    %c0_249 = arith.constant 0 : index
    %411 = vector.load %arg17[%c1_248, %c0_249] : memref<6x192xf32, #tpu.memory_space<vmem>>, vector<1x192xf32>
    tpu.vector_store %arg17[%c1_248, %c0_249], %410 {strides = array<i32>} : memref<6x192xf32, #tpu.memory_space<vmem>>, vector<1x192xf32>,
    %412 = vector.extract_strided_slice %403 {offsets = [4, 0], sizes = [1, 192], strides = [1, 1]} : vector<12x192xf32> to vector<1x192xf32>
    %413 = vector.extract_strided_slice %403 {offsets = [5, 0], sizes = [1, 192], strides = [1, 1]} : vector<12x192xf32> to vector<1x192xf32>
    %414 = arith.maximumf %412, %413 : vector<1x192xf32>
    %c2_250 = arith.constant 2 : index
    %c0_251 = arith.constant 0 : index
    %415 = vector.load %arg17[%c2_250, %c0_251] : memref<6x192xf32, #tpu.memory_space<vmem>>, vector<1x192xf32>
    tpu.vector_store %arg17[%c2_250, %c0_251], %414 {strides = array<i32>} : memref<6x192xf32, #tpu.memory_space<vmem>>, vector<1x192xf32>,
    %416 = vector.extract_strided_slice %403 {offsets = [6, 0], sizes = [1, 192], strides = [1, 1]} : vector<12x192xf32> to vector<1x192xf32>
    %417 = vector.extract_strided_slice %403 {offsets = [7, 0], sizes = [1, 192], strides = [1, 1]} : vector<12x192xf32> to vector<1x192xf32>
    %418 = arith.maximumf %416, %417 : vector<1x192xf32>
    %c3_252 = arith.constant 3 : index
    %c0_253 = arith.constant 0 : index
    %419 = vector.load %arg17[%c3_252, %c0_253] : memref<6x192xf32, #tpu.memory_space<vmem>>, vector<1x192xf32>
    tpu.vector_store %arg17[%c3_252, %c0_253], %418 {strides = array<i32>} : memref<6x192xf32, #tpu.memory_space<vmem>>, vector<1x192xf32>,
    %420 = vector.extract_strided_slice %403 {offsets = [8, 0], sizes = [1, 192], strides = [1, 1]} : vector<12x192xf32> to vector<1x192xf32>
    %421 = vector.extract_strided_slice %403 {offsets = [9, 0], sizes = [1, 192], strides = [1, 1]} : vector<12x192xf32> to vector<1x192xf32>
    %422 = arith.maximumf %420, %421 : vector<1x192xf32>
    %c4_254 = arith.constant 4 : index
    %c0_255 = arith.constant 0 : index
    %423 = vector.load %arg17[%c4_254, %c0_255] : memref<6x192xf32, #tpu.memory_space<vmem>>, vector<1x192xf32>
    tpu.vector_store %arg17[%c4_254, %c0_255], %422 {strides = array<i32>} : memref<6x192xf32, #tpu.memory_space<vmem>>, vector<1x192xf32>,
    %424 = vector.extract_strided_slice %403 {offsets = [10, 0], sizes = [1, 192], strides = [1, 1]} : vector<12x192xf32> to vector<1x192xf32>
    %425 = vector.extract_strided_slice %403 {offsets = [11, 0], sizes = [1, 192], strides = [1, 1]} : vector<12x192xf32> to vector<1x192xf32>
    %426 = arith.maximumf %424, %425 : vector<1x192xf32>
    %c5_256 = arith.constant 5 : index
    %c0_257 = arith.constant 0 : index
    %427 = vector.load %arg17[%c5_256, %c0_257] : memref<6x192xf32, #tpu.memory_space<vmem>>, vector<1x192xf32>
    tpu.vector_store %arg17[%c5_256, %c0_257], %426 {strides = array<i32>} : memref<6x192xf32, #tpu.memory_space<vmem>>, vector<1x192xf32>,
    %c0_258 = arith.constant 0 : index
    %c0_259 = arith.constant 0 : index
    %428 = vector.load %arg17[%c0_258, %c0_259] : memref<6x192xf32, #tpu.memory_space<vmem>>, vector<6x192xf32>
    %429 = vector.extract_strided_slice %428 {offsets = [0, 0], sizes = [6, 16], strides = [1, 1]} : vector<6x192xf32> to vector<6x16xf32>
    %430 = vector.extract_strided_slice %428 {offsets = [0, 16], sizes = [6, 16], strides = [1, 1]} : vector<6x192xf32> to vector<6x16xf32>
    %431 = arith.maximumf %429, %430 : vector<6x16xf32>
    %c6_260 = arith.constant 6 : index
    %c0_261 = arith.constant 0 : index
    %432 = vector.load %arg15[%c6_260, %c0_261] : memref<12x96xf32, #tpu.memory_space<vmem>>, vector<6x16xf32>
    tpu.vector_store %arg15[%c6_260, %c0_261], %431 {strides = array<i32>} : memref<12x96xf32, #tpu.memory_space<vmem>>, vector<6x16xf32>,
    %433 = vector.extract_strided_slice %428 {offsets = [0, 32], sizes = [6, 16], strides = [1, 1]} : vector<6x192xf32> to vector<6x16xf32>
    %434 = vector.extract_strided_slice %428 {offsets = [0, 48], sizes = [6, 16], strides = [1, 1]} : vector<6x192xf32> to vector<6x16xf32>
    %435 = arith.maximumf %433, %434 : vector<6x16xf32>
    %c6_262 = arith.constant 6 : index
    %c16_263 = arith.constant 16 : index
    %436 = vector.load %arg15[%c6_262, %c16_263] : memref<12x96xf32, #tpu.memory_space<vmem>>, vector<6x16xf32>
    tpu.vector_store %arg15[%c6_262, %c16_263], %435 {strides = array<i32>} : memref<12x96xf32, #tpu.memory_space<vmem>>, vector<6x16xf32>,
    %437 = vector.extract_strided_slice %428 {offsets = [0, 64], sizes = [6, 16], strides = [1, 1]} : vector<6x192xf32> to vector<6x16xf32>
    %438 = vector.extract_strided_slice %428 {offsets = [0, 80], sizes = [6, 16], strides = [1, 1]} : vector<6x192xf32> to vector<6x16xf32>
    %439 = arith.maximumf %437, %438 : vector<6x16xf32>
    %c6_264 = arith.constant 6 : index
    %c32_265 = arith.constant 32 : index
    %440 = vector.load %arg15[%c6_264, %c32_265] : memref<12x96xf32, #tpu.memory_space<vmem>>, vector<6x16xf32>
    tpu.vector_store %arg15[%c6_264, %c32_265], %439 {strides = array<i32>} : memref<12x96xf32, #tpu.memory_space<vmem>>, vector<6x16xf32>,
    %441 = vector.extract_strided_slice %428 {offsets = [0, 96], sizes = [6, 16], strides = [1, 1]} : vector<6x192xf32> to vector<6x16xf32>
    %442 = vector.extract_strided_slice %428 {offsets = [0, 112], sizes = [6, 16], strides = [1, 1]} : vector<6x192xf32> to vector<6x16xf32>
    %443 = arith.maximumf %441, %442 : vector<6x16xf32>
    %c6_266 = arith.constant 6 : index
    %c48_267 = arith.constant 48 : index
    %444 = vector.load %arg15[%c6_266, %c48_267] : memref<12x96xf32, #tpu.memory_space<vmem>>, vector<6x16xf32>
    tpu.vector_store %arg15[%c6_266, %c48_267], %443 {strides = array<i32>} : memref<12x96xf32, #tpu.memory_space<vmem>>, vector<6x16xf32>,
    %445 = vector.extract_strided_slice %428 {offsets = [0, 128], sizes = [6, 16], strides = [1, 1]} : vector<6x192xf32> to vector<6x16xf32>
    %446 = vector.extract_strided_slice %428 {offsets = [0, 144], sizes = [6, 16], strides = [1, 1]} : vector<6x192xf32> to vector<6x16xf32>
    %447 = arith.maximumf %445, %446 : vector<6x16xf32>
    %c6_268 = arith.constant 6 : index
    %c64_269 = arith.constant 64 : index
    %448 = vector.load %arg15[%c6_268, %c64_269] : memref<12x96xf32, #tpu.memory_space<vmem>>, vector<6x16xf32>
    tpu.vector_store %arg15[%c6_268, %c64_269], %447 {strides = array<i32>} : memref<12x96xf32, #tpu.memory_space<vmem>>, vector<6x16xf32>,
    %449 = vector.extract_strided_slice %428 {offsets = [0, 160], sizes = [6, 16], strides = [1, 1]} : vector<6x192xf32> to vector<6x16xf32>
    %450 = vector.extract_strided_slice %428 {offsets = [0, 176], sizes = [6, 16], strides = [1, 1]} : vector<6x192xf32> to vector<6x16xf32>
    %451 = arith.maximumf %449, %450 : vector<6x16xf32>
    %c6_270 = arith.constant 6 : index
    %c80_271 = arith.constant 80 : index
    %452 = vector.load %arg15[%c6_270, %c80_271] : memref<12x96xf32, #tpu.memory_space<vmem>>, vector<6x16xf32>
    tpu.vector_store %arg15[%c6_270, %c80_271], %451 {strides = array<i32>} : memref<12x96xf32, #tpu.memory_space<vmem>>, vector<6x16xf32>,
    %c6_272 = arith.constant 6 : index
    %c0_273 = arith.constant 0 : index
    %453 = vector.load %arg15[%c6_272, %c0_273] : memref<12x96xf32, #tpu.memory_space<vmem>>, vector<4x96xf32>
    %c0_274 = arith.constant 0 : index
    %c0_275 = arith.constant 0 : index
    %c0_276 = arith.constant 0 : index
    %454 = vector.load %arg5[%c0_274, %c0_275, %c0_276] : memref<3x96x64xf32, #tpu.memory_space<vmem>>, vector<1x96x64xf32>
    %455 = vector.shape_cast %454 : vector<1x96x64xf32> to vector<96x64xf32>
    %cst_277 = arith.constant dense<0.000000e+00> : vector<4x64xf32>
    %456 = tpu.matmul %453, %455, %cst_277 {dimension_numbers = #tpu.dot_dimension_numbers<[1], [0], [0], [1], [0, 0, 1, 1], [], []>} : vector<4x96xf32>, vector<96x64xf32>, vector<4x64xf32> -> vector<4x64xf32>
    %c7_278 = arith.constant 7 : index
    %c0_279 = arith.constant 0 : index
    %457 = vector.load %arg15[%c7_278, %c0_279] : memref<12x96xf32, #tpu.memory_space<vmem>>, vector<4x96xf32>
    %c1_280 = arith.constant 1 : index
    %c0_281 = arith.constant 0 : index
    %c0_282 = arith.constant 0 : index
    %458 = vector.load %arg5[%c1_280, %c0_281, %c0_282] : memref<3x96x64xf32, #tpu.memory_space<vmem>>, vector<1x96x64xf32>
    %459 = vector.shape_cast %458 : vector<1x96x64xf32> to vector<96x64xf32>
    %cst_283 = arith.constant dense<0.000000e+00> : vector<4x64xf32>
    %460 = tpu.matmul %457, %459, %cst_283 {dimension_numbers = #tpu.dot_dimension_numbers<[1], [0], [0], [1], [0, 0, 1, 1], [], []>} : vector<4x96xf32>, vector<96x64xf32>, vector<4x64xf32> -> vector<4x64xf32>
    %461 = arith.addf %456, %460 : vector<4x64xf32>
    %c8_284 = arith.constant 8 : index
    %c0_285 = arith.constant 0 : index
    %462 = vector.load %arg15[%c8_284, %c0_285] : memref<12x96xf32, #tpu.memory_space<vmem>>, vector<4x96xf32>
    %c2_286 = arith.constant 2 : index
    %c0_287 = arith.constant 0 : index
    %c0_288 = arith.constant 0 : index
    %463 = vector.load %arg5[%c2_286, %c0_287, %c0_288] : memref<3x96x64xf32, #tpu.memory_space<vmem>>, vector<1x96x64xf32>
    %464 = vector.shape_cast %463 : vector<1x96x64xf32> to vector<96x64xf32>
    %cst_289 = arith.constant dense<0.000000e+00> : vector<4x64xf32>
    %465 = tpu.matmul %462, %464, %cst_289 {dimension_numbers = #tpu.dot_dimension_numbers<[1], [0], [0], [1], [0, 0, 1, 1], [], []>} : vector<4x96xf32>, vector<96x64xf32>, vector<4x64xf32> -> vector<4x64xf32>
    %466 = arith.addf %461, %465 : vector<4x64xf32>
    %c0_290 = arith.constant 0 : index
    %c0_291 = arith.constant 0 : index
    %467 = vector.load %arg6[%c0_290, %c0_291] : memref<1x64xf32, #tpu.memory_space<vmem>>, vector<1x64xf32>
    %468 = vector.broadcast %467 : vector<1x64xf32> to vector<4x64xf32>
    %469 = arith.addf %466, %468 : vector<4x64xf32>
    %cst_292 = arith.constant 0.000000e+00 : f32
    %470 = vector.broadcast %cst_292 : f32 to vector<4x64xf32>
    %471 = arith.maximumf %469, %470 : vector<4x64xf32>
    %c0_293 = arith.constant 0 : index
    %c0_294 = arith.constant 0 : index
    %472 = vector.load %arg8[%c0_293, %c0_294] : memref<1x128xf32, #tpu.memory_space<vmem>>, vector<1x128xf32>
    %473 = vector.extract_strided_slice %471 {offsets = [0, 0], sizes = [1, 64], strides = [1, 1]} : vector<4x64xf32> to vector<1x64xf32>
    %c0_295 = arith.constant 0 : index
    %c0_296 = arith.constant 0 : index
    %c0_297 = arith.constant 0 : index
    %474 = vector.load %arg7[%c0_295, %c0_296, %c0_297] : memref<4x64x128xf32, #tpu.memory_space<vmem>>, vector<1x64x128xf32>
    %475 = vector.shape_cast %474 : vector<1x64x128xf32> to vector<64x128xf32>
    %cst_298 = arith.constant dense<0.000000e+00> : vector<1x128xf32>
    %476 = tpu.matmul %473, %475, %cst_298 {dimension_numbers = #tpu.dot_dimension_numbers<[1], [0], [0], [1], [0, 0, 1, 1], [], []>} : vector<1x64xf32>, vector<64x128xf32>, vector<1x128xf32> -> vector<1x128xf32>
    %477 = arith.addf %472, %476 : vector<1x128xf32>
    %478 = vector.extract_strided_slice %471 {offsets = [1, 0], sizes = [1, 64], strides = [1, 1]} : vector<4x64xf32> to vector<1x64xf32>
    %c1_299 = arith.constant 1 : index
    %c0_300 = arith.constant 0 : index
    %c0_301 = arith.constant 0 : index
    %479 = vector.load %arg7[%c1_299, %c0_300, %c0_301] : memref<4x64x128xf32, #tpu.memory_space<vmem>>, vector<1x64x128xf32>
    %480 = vector.shape_cast %479 : vector<1x64x128xf32> to vector<64x128xf32>
    %cst_302 = arith.constant dense<0.000000e+00> : vector<1x128xf32>
    %481 = tpu.matmul %478, %480, %cst_302 {dimension_numbers = #tpu.dot_dimension_numbers<[1], [0], [0], [1], [0, 0, 1, 1], [], []>} : vector<1x64xf32>, vector<64x128xf32>, vector<1x128xf32> -> vector<1x128xf32>
    %482 = arith.addf %477, %481 : vector<1x128xf32>
    %483 = vector.extract_strided_slice %471 {offsets = [2, 0], sizes = [1, 64], strides = [1, 1]} : vector<4x64xf32> to vector<1x64xf32>
    %c2_303 = arith.constant 2 : index
    %c0_304 = arith.constant 0 : index
    %c0_305 = arith.constant 0 : index
    %484 = vector.load %arg7[%c2_303, %c0_304, %c0_305] : memref<4x64x128xf32, #tpu.memory_space<vmem>>, vector<1x64x128xf32>
    %485 = vector.shape_cast %484 : vector<1x64x128xf32> to vector<64x128xf32>
    %cst_306 = arith.constant dense<0.000000e+00> : vector<1x128xf32>
    %486 = tpu.matmul %483, %485, %cst_306 {dimension_numbers = #tpu.dot_dimension_numbers<[1], [0], [0], [1], [0, 0, 1, 1], [], []>} : vector<1x64xf32>, vector<64x128xf32>, vector<1x128xf32> -> vector<1x128xf32>
    %487 = arith.addf %482, %486 : vector<1x128xf32>
    %488 = vector.extract_strided_slice %471 {offsets = [3, 0], sizes = [1, 64], strides = [1, 1]} : vector<4x64xf32> to vector<1x64xf32>
    %c3_307 = arith.constant 3 : index
    %c0_308 = arith.constant 0 : index
    %c0_309 = arith.constant 0 : index
    %489 = vector.load %arg7[%c3_307, %c0_308, %c0_309] : memref<4x64x128xf32, #tpu.memory_space<vmem>>, vector<1x64x128xf32>
    %490 = vector.shape_cast %489 : vector<1x64x128xf32> to vector<64x128xf32>
    %cst_310 = arith.constant dense<0.000000e+00> : vector<1x128xf32>
    %491 = tpu.matmul %488, %490, %cst_310 {dimension_numbers = #tpu.dot_dimension_numbers<[1], [0], [0], [1], [0, 0, 1, 1], [], []>} : vector<1x64xf32>, vector<64x128xf32>, vector<1x128xf32> -> vector<1x128xf32>
    %492 = arith.addf %487, %491 : vector<1x128xf32>
    %cst_311 = arith.constant 0.000000e+00 : f32
    %493 = vector.broadcast %cst_311 : f32 to vector<1x128xf32>
    %494 = arith.maximumf %492, %493 : vector<1x128xf32>
    %c0_312 = arith.constant 0 : index
    %c0_313 = arith.constant 0 : index
    %495 = vector.load %arg9[%c0_312, %c0_313] : memref<128x128xf32, #tpu.memory_space<vmem>>, vector<128x128xf32>
    %cst_314 = arith.constant dense<0.000000e+00> : vector<1x128xf32>
    %496 = tpu.matmul %494, %495, %cst_314 {dimension_numbers = #tpu.dot_dimension_numbers<[1], [0], [0], [1], [0, 0, 1, 1], [], []>} : vector<1x128xf32>, vector<128x128xf32>, vector<1x128xf32> -> vector<1x128xf32>
    %c0_315 = arith.constant 0 : index
    %c0_316 = arith.constant 0 : index
    %497 = vector.load %arg10[%c0_315, %c0_316] : memref<1x128xf32, #tpu.memory_space<vmem>>, vector<1x128xf32>
    %498 = arith.addf %496, %497 : vector<1x128xf32>
    %cst_317 = arith.constant 0.000000e+00 : f32
    %499 = vector.broadcast %cst_317 : f32 to vector<1x128xf32>
    %500 = arith.maximumf %498, %499 : vector<1x128xf32>
    %c0_318 = arith.constant 0 : index
    %c0_319 = arith.constant 0 : index
    %501 = vector.load %arg11[%c0_318, %c0_319] : memref<128x128xf32, #tpu.memory_space<vmem>>, vector<128x128xf32>
    %cst_320 = arith.constant dense<0.000000e+00> : vector<1x128xf32>
    %502 = tpu.matmul %500, %501, %cst_320 {dimension_numbers = #tpu.dot_dimension_numbers<[1], [0], [0], [1], [0, 0, 1, 1], [], []>} : vector<1x128xf32>, vector<128x128xf32>, vector<1x128xf32> -> vector<1x128xf32>
    %c0_321 = arith.constant 0 : index
    %c0_322 = arith.constant 0 : index
    %503 = vector.load %arg12[%c0_321, %c0_322] : memref<1x128xf32, #tpu.memory_space<vmem>>, vector<1x128xf32>
    %504 = arith.addf %502, %503 : vector<1x128xf32>
    %c1_323 = arith.constant 1 : index
    %c0_324 = arith.constant 0 : index
    %505 = vector.load %arg13[%c1_323, %c0_324] : memref<2x128xf32, #tpu.memory_space<vmem>>, vector<1x128xf32>
    tpu.vector_store %arg13[%c1_323, %c0_324], %504 {strides = array<i32>} : memref<2x128xf32, #tpu.memory_space<vmem>>, vector<1x128xf32>,
    return
  }
}

</mosaic_0001>

<llo_original>
// kernel: lenet5_forward.1
$region0: #{lenet5_forward.1}
  #allocation0 [shape = 'u32[]', space=smem, size = 0x4, offset = 0x4, fixed_abs, tag = 'smem constant byte address 0x4 - core index']
  #allocation1 [shape = 'u32[144,128]{1,0:T(1,128)}', space=vmem, size = 0x12000, scoped, tag = 'internal scratch']
  #allocation2 [shape = 'f32[28,84]{1,0:T(8,128)}', space=vmem, size = 0x4000, scoped, tag = 'scratch operand']
  #allocation3 [shape = 'f32[12,96]{1,0:T(8,128)}', space=vmem, size = 0x2000, scoped, tag = 'scratch operand']
  #allocation4 [shape = 'f32[14,168]{1,0:T(8,128)}', space=vmem, size = 0x4000, scoped, tag = 'scratch operand']
  #allocation5 [shape = 'f32[6,192]{1,0:T(8,128)}', space=vmem, size = 0x2000, scoped, tag = 'scratch operand']
  %s0 = inlined_call_operand.vmem [shape: f32[60,30], index: 0, kind: input, shape index: {}]
  %s1 = inlined_call_operand.vmem [shape: f32[3,30,168], index: 1, kind: input, shape index: {}]
  %s2 = inlined_call_operand.vmem [shape: f32[1,168], index: 2, kind: input, shape index: {}]
  %s3 = inlined_call_operand.vmem [shape: f32[3,84,192], index: 3, kind: input, shape index: {}]
  %s4 = inlined_call_operand.vmem [shape: f32[1,192], index: 4, kind: input, shape index: {}]
  %s5 = inlined_call_operand.vmem [shape: f32[3,96,64], index: 5, kind: input, shape index: {}]
  %s6 = inlined_call_operand.vmem [shape: f32[1,64], index: 6, kind: input, shape index: {}]
  %s7 = inlined_call_operand.vmem [shape: f32[4,64,128], index: 7, kind: input, shape index: {}]
  %s8 = inlined_call_operand.vmem [shape: f32[1,128], index: 8, kind: input, shape index: {}]
  %s9 = inlined_call_operand.hbm [shape: f32[128,128], index: 9, kind: input, shape index: {}]
  %s10 = inlined_call_operand.vmem [shape: f32[1,128], index: 10, kind: input, shape index: {}]
  %s11 = inlined_call_operand.hbm [shape: f32[128,128], index: 11, kind: input, shape index: {}]
  %s12 = inlined_call_operand.vmem [shape: f32[1,128], index: 12, kind: input, shape index: {}]
  %s13 = inlined_call_operand.hbm [shape: f32[2,128], index: 13, kind: output, shape index: {}]
  %s14 = sld [smem:[#allocation0]]
  $region70: #{lenet5_forward.1} parent=0
    _
  %s16 = ssub.s32 1, %s14
  %s17 = scalar_select 0, %s16, %s14
  $region1: #{lenet5_forward.1} parent=0
    #allocation6 [shape = 'u8[65536]{0}', space=vmem, size = 0x10000, scoped, tag = 'input window, operand 9, single buffered']
    #allocation7 [shape = 's32[1]{0}', space=sflag, size = 0x4, scoped, tag = 'scoped memory for lenet5_forward.1']
    #allocation8 [shape = 's32[1]{0}', space=sflag, size = 0x4, scoped, tag = 'scoped memory for lenet5_forward.1']
    #allocation9 [shape = 'u8[65536]{0}', space=vmem, size = 0x10000, scoped, tag = 'input window, operand 11, single buffered']
    #allocation10 [shape = 's32[1]{0}', space=sflag, size = 0x4, scoped, tag = 'scoped memory for lenet5_forward.1']
    #allocation11 [shape = 'u8[1024]{0}', space=vmem, size = 0x400, scoped, tag = 'output window, operand 0, single buffered']
    %18 = vsyncpa [#allocation7], 0
    %19 = vsyncpa [#allocation10], 0
    %20 = vsyncpa [#allocation8], 0
    // Predicated region
    $region2: #{lenet5_forward.1} parent=1 // pred_check
      _
    $region3: #{lenet5_forward.1} parent=1 // pred_check_branch
      %22 = sbr.rel (0) target = $region5
    $region4: #{lenet5_forward.1} parent=1 // pred_region
      _
    $region5: #{lenet5_forward.1} parent=1 // pred_fallthru
      _
    // Predicated region
    $region6: #{lenet5_forward.1} parent=1 // pred_check
      _
    $region7: #{lenet5_forward.1} parent=1 // pred_check_branch
      %24 = sbr.rel (0) target = $region9
    $region8: #{lenet5_forward.1} parent=1 // pred_region
      _
    $region9: #{lenet5_forward.1} parent=1 // pred_fallthru
      _
    // Predicated region
    $region10: #{lenet5_forward.1} parent=1 // pred_check
      _
    $region11: #{lenet5_forward.1} parent=1 // pred_check_branch
      %26 = sbr.rel (0) target = $region13
    $region12: #{lenet5_forward.1} parent=1 // pred_region
      _
    $region13: #{lenet5_forward.1} parent=1 // pred_fallthru
      _
    // Predicated region
    $region14: #{lenet5_forward.1} parent=1 // pred_check
      _
    $region15: #{lenet5_forward.1} parent=1 // pred_check_branch
      %28 = sbr.rel (0) target = $region17
    $region16: #{lenet5_forward.1} parent=1 // pred_region
      _
    $region17: #{lenet5_forward.1} parent=1 // pred_fallthru
      _
    // Predicated region
    $region18: #{lenet5_forward.1} parent=1 // pred_check
      _
    $region19: #{lenet5_forward.1} parent=1 // pred_check_branch
      %30 = sbr.rel (0) target = $region21
    $region20: #{lenet5_forward.1} parent=1 // pred_region
      _
    $region21: #{lenet5_forward.1} parent=1 // pred_fallthru
      _
    // Predicated region
    $region22: #{lenet5_forward.1} parent=1 // pred_check
      _
    $region23: #{lenet5_forward.1} parent=1 // pred_check_branch
      %32 = sbr.rel (0) target = $region25
    $region24: #{lenet5_forward.1} parent=1 // pred_region
      _
    $region25: #{lenet5_forward.1} parent=1 // pred_fallthru
      _
    // Predicated region
    $region26: #{lenet5_forward.1} parent=1 // pred_check
      _
    $region27: #{lenet5_forward.1} parent=1 // pred_check_branch
      %34 = sbr.rel (0) target = $region29
    $region28: #{lenet5_forward.1} parent=1 // pred_region
      _
    $region29: #{lenet5_forward.1} parent=1 // pred_fallthru
      _
    // Predicated region
    $region30: #{lenet5_forward.1} parent=1 // pred_check
      _
    $region31: #{lenet5_forward.1} parent=1 // pred_check_branch
      %36 = sbr.rel (0) target = $region33
    $region32: #{lenet5_forward.1} parent=1 // pred_region
      _
    $region33: #{lenet5_forward.1} parent=1 // pred_fallthru
      _
    // Predicated region
    $region34: #{lenet5_forward.1} parent=1 // pred_check
      _
    $region35: #{lenet5_forward.1} parent=1 // pred_check_branch
      %38 = sbr.rel (0) target = $region37
    $region36: #{lenet5_forward.1} parent=1 // pred_region
      _
    $region37: #{lenet5_forward.1} parent=1 // pred_fallthru
      _
    // Predicated region
    $region38: #{lenet5_forward.1} parent=1 // pred_check
      _
    $region39: #{lenet5_forward.1} parent=1 // pred_check_branch
      %40 = sbr.rel (0) target = $region41
    $region40: #{lenet5_forward.1} parent=1 // pred_region
      %s42 = ssub.s32 2048, 2048
      %43 = vsyncadd [#allocation7], %s42
      %s44 = sshll.u32 [#allocation6], 4
      %s45 = int_to_ptr.vmem [resolvable:$true] %s44
      %50 = dma.hbm_to_vmem [thread:$0]  %s9, 2048, %s45, [#allocation7], 128, 128, 8
    $region41: #{lenet5_forward.1} parent=1 // pred_fallthru
      _
    // Predicated region
    $region42: #{lenet5_forward.1} parent=1 // pred_check
      _
    $region43: #{lenet5_forward.1} parent=1 // pred_check_branch
      %52 = sbr.rel (0) target = $region45
    $region44: #{lenet5_forward.1} parent=1 // pred_region
      _
    $region45: #{lenet5_forward.1} parent=1 // pred_fallthru
      _
    // Predicated region
    $region46: #{lenet5_forward.1} parent=1 // pred_check
      _
    $region47: #{lenet5_forward.1} parent=1 // pred_check_branch
      %54 = sbr.rel (0) target = $region49
    $region48: #{lenet5_forward.1} parent=1 // pred_region
      %s56 = ssub.s32 2048, 2048
      %57 = vsyncadd [#allocation10], %s56
      %s58 = sshll.u32 [#allocation9], 4
      %s59 = int_to_ptr.vmem [resolvable:$true] %s58
      %64 = dma.hbm_to_vmem [thread:$0]  %s11, 2048, %s59, [#allocation10], 128, 128, 8
    $region49: #{lenet5_forward.1} parent=1 // pred_fallthru
      _
    // Predicated region
    $region50: #{lenet5_forward.1} parent=1 // pred_check
      _
    $region51: #{lenet5_forward.1} parent=1 // pred_check_branch
      %66 = sbr.rel (0) target = $region53
    $region52: #{lenet5_forward.1} parent=1 // pred_region
      _
    $region53: #{lenet5_forward.1} parent=1 // pred_fallthru
      _
    // Predicated region
    $region54: #{lenet5_forward.1} parent=1 // pred_check
      _
    $region55: #{lenet5_forward.1} parent=1 // pred_check_branch
      %68 = sbr.rel (0) target = $region57
    $region56: #{lenet5_forward.1} parent=1 // pred_region
      %69 = dma.done [#allocation7], 2048
    $region57: #{lenet5_forward.1} parent=1 // pred_fallthru
      _
    // Predicated region
    $region58: #{lenet5_forward.1} parent=1 // pred_check
      _
    $region59: #{lenet5_forward.1} parent=1 // pred_check_branch
      %71 = sbr.rel (0) target = $region61
    $region60: #{lenet5_forward.1} parent=1 // pred_region
      %72 = dma.done [#allocation10], 2048
    $region61: #{lenet5_forward.1} parent=1 // pred_fallthru
      _
    %v73 = vld [vmem:[%s0] sm:$0xff]
    %v74 = vld [vmem:[%s0 + $0x8] sm:$0xff]
    %v75 = vld [vmem:[%s0 + $0x10] sm:$0xff]
    %v76 = vld [vmem:[%s0 + $0x18] sm:$0xf]
    %v77 = vld [vmem:[%s1] sm:$0xff]
    %v78 = vld [vmem:[%s1 + $0x8] sm:$0xff]
    %v79 = vld [vmem:[%s1 + $0x10] sm:$0xff]
    %v80 = vld [vmem:[%s1 + $0x18] sm:$0xff]
    %v81 = vld [vmem:[%s1 + $0x20] sm:$0xff]
    %v82 = vld [vmem:[%s1 + $0x28] sm:$0xff]
    %v83 = vld [vmem:[%s1 + $0x30] sm:$0x3f]
    %v84 = vld [vmem:[%s1 + $0x38] sm:$0x3f]
    %v85 = vld [vmem:[%s0 + $0x1] sm:$0xff]
    %v86 = vld [vmem:[%s0 + $0x9] sm:$0xff]
    %v87 = vld [vmem:[%s0 + $0x11] sm:$0xff]
    %v88 = vld [vmem:[%s0 + $0x19] sm:$0xf]
    %s89 = scalar_lea.vmem %s1, 64
    %v90 = vld [vmem:[%s89] sm:$0xff]
    %v91 = vld [vmem:[%s89 + $0x8] sm:$0xff]
    %v92 = vld [vmem:[%s89 + $0x10] sm:$0xff]
    %v93 = vld [vmem:[%s89 + $0x18] sm:$0xff]
    %v94 = vld [vmem:[%s89 + $0x20] sm:$0xff]
    %v95 = vld [vmem:[%s89 + $0x28] sm:$0xff]
    %v96 = vld [vmem:[%s89 + $0x30] sm:$0x3f]
    %v97 = vld [vmem:[%s89 + $0x38] sm:$0x3f]
    %vm98 = vcmask 244736
    %v100 = vsel %vm98, %v85, 0
    %v103 = vsel %vm98, %v86, 0
    %v106 = vsel %vm98, %v87, 0
    %v109 = vsel %vm98, %v88, 0
    %vm111 = vcmask 1045504
    %v113 = vsel %vm111, %v96, 0
    %v116 = vsel %vm111, %v97, 0
    %118 = vmatprep.subr.mxu0 %v91
    %119 = vmatpush1.msra.mxu0 %v90
    %120 = vmatprep.subr.mxu0 %v93
    %121 = vmatpush1.msra.mxu0 %v92
    %122 = vmatprep.subr.mxu0 %v95
    %123 = vmatpush1.msra.mxu0 %v94
    %124 = vmatprep.subr.mxu0 %v116
    %125 = vmatpush1.msra.mxu0 %v113
    %126 = vmatprep.subr.mxu0 0.0
    %127 = vmatpush1.msra.mxu0 0.0
    %128 = vmatprep.subr.mxu0 0.0
    %129 = vmatpush1.msra.mxu0 0.0
    %130 = vmatprep.subr.mxu0 0.0
    %131 = vmatpush1.msra.mxu0 0.0
    %132 = vmatprep.subr.mxu0 0.0
    %133 = vmatpush1.msra.mxu0 0.0
    %134 = vmatprep.subr.mxu0 0.0
    %135 = vmatpush1.msra.mxu0 0.0
    %136 = vmatprep.subr.mxu0 0.0
    %137 = vmatpush1.msra.mxu0 0.0
    %138 = vmatprep.subr.mxu0 0.0
    %139 = vmatpush1.msra.mxu0 0.0
    %140 = vmatprep.subr.mxu0 0.0
    %141 = vmatpush1.msra.mxu0 0.0
    %142 = vmatprep.subr.mxu0 0.0
    %143 = vmatpush1.msra.mxu0 0.0
    %144 = vmatprep.subr.mxu0 0.0
    %145 = vmatpush1.msra.mxu0 0.0
    %146 = vmatprep.subr.mxu0 0.0
    %147 = vmatpush1.msra.mxu0 0.0
    %148 = vmatprep.subr.mxu0 0.0
    %149 = vmatpush1.msra.mxu0 0.0
    %150 = vmatprep.subr.mxu0 0.0
    %151 = vmatpush1.msra.mxu0 0.0
    %152 = vmatprep.subr.mxu0 0.0
    %153 = vmatpush1.msra.mxu0 0.0
    %154 = vmatprep.subr.mxu0 0.0
    %155 = vmatpush1.msra.mxu0 0.0
    %156 = vmatprep.subr.mxu0 0.0
    %157 = vmatpush1.msra.mxu0 0.0
    %158 = vmatprep.subr.mxu0 0.0
    %159 = vmatpush1.msra.mxu0 0.0
    %160 = vmatprep.subr.mxu0 0.0
    %161 = vmatpush1.msra.mxu0 0.0
    %162 = vmatprep.subr.mxu0 0.0
    %163 = vmatpush1.msra.mxu0 0.0
    %164 = vmatprep.subr.mxu0 0.0
    %165 = vmatpush1.msra.mxu0 0.0
    %166 = vmatprep.subr.mxu0 0.0
    %167 = vmatpush1.msra.mxu0 0.0
    %168 = vmatprep.subr.mxu0 0.0
    %169 = vmatpush1.msra.mxu0 0.0
    %170 = vmatprep.subr.mxu0 0.0
    %171 = vmatpush1.msra.mxu0 0.0
    %172 = vmatprep.subr.mxu0 0.0
    %173 = vmatpush1.msra.mxu0 0.0
    %174 = vmatprep.subr.mxu0 0.0
    %175 = vmatpush1.msra.mxu0 0.0
    %176 = vmatprep.subr.mxu0 0.0
    %177 = vmatpush1.msra.mxu0 0.0
    %178 = vmatprep.subr.mxu0 0.0
    %179 = vmatpush1.msra.mxu0 0.0
    %180 = vmatprep.subr.mxu0 0.0
    %181 = vmatpush1.msra.mxu0 0.0
    %182 = vmatprep.mubr.f32.mxu0 0.0
    %183 = vmatmul.mubr.f32.gmra.mrb[0].mxu0 %v100
    %v184 = vpop.f32.mrb[0].mxu0
    %v185 = vadd.f32 0.0, %v184
    %v186 = vpop.f32.mrb[0].mxu0
    %v187 = vadd.f32 0.0, %v186
    %188 = vmatprep.mubr.f32.mxu0 0.0
    %189 = vmatmul.mubr.f32.gmra.mrb[0].mxu0 %v103
    %v190 = vpop.f32.mrb[0].mxu0
    %v191 = vadd.f32 0.0, %v190
    %v192 = vpop.f32.mrb[0].mxu0
    %v193 = vadd.f32 0.0, %v192
    %194 = vmatprep.mubr.f32.mxu0 0.0
    %195 = vmatmul.mubr.f32.gmra.mrb[0].mxu0 %v106
    %v196 = vpop.f32.mrb[0].mxu0
    %v197 = vadd.f32 0.0, %v196
    %v198 = vpop.f32.mrb[0].mxu0
    %v199 = vadd.f32 0.0, %v198
    %200 = vmatprep.mubr.f32.mxu0 0.0
    %201 = vmatmul.mubr.f32.gmra.mrb[0].mxu0 %v109
    %v202 = vpop.f32.mrb[0].mxu0
    %v203 = vadd.f32 0.0, %v202
    %v204 = vpop.f32.mrb[0].mxu0
    %v205 = vadd.f32 0.0, %v204
    %206 = vdwg.mxu0
    %v208 = vsel %vm98, %v73, 0
    %v211 = vsel %vm98, %v74, 0
    %v214 = vsel %vm98, %v75, 0
    %v217 = vsel %vm98, %v76, 0
    %v220 = vsel %vm111, %v83, 0
    %v223 = vsel %vm111, %v84, 0
    %225 = vmatprep.subr.mxu0 %v78
    %226 = vmatpush1.msra.mxu0 %v77
    %227 = vmatprep.subr.mxu0 %v80
    %228 = vmatpush1.msra.mxu0 %v79
    %229 = vmatprep.subr.mxu0 %v82
    %230 = vmatpush1.msra.mxu0 %v81
    %231 = vmatprep.subr.mxu0 %v223
    %232 = vmatpush1.msra.mxu0 %v220
    %233 = vmatprep.subr.mxu0 0.0
    %234 = vmatpush1.msra.mxu0 0.0
    %235 = vmatprep.subr.mxu0 0.0
    %236 = vmatpush1.msra.mxu0 0.0
    %237 = vmatprep.subr.mxu0 0.0
    %238 = vmatpush1.msra.mxu0 0.0
    %239 = vmatprep.subr.mxu0 0.0
    %240 = vmatpush1.msra.mxu0 0.0
    %241 = vmatprep.subr.mxu0 0.0
    %242 = vmatpush1.msra.mxu0 0.0
    %243 = vmatprep.subr.mxu0 0.0
    %244 = vmatpush1.msra.mxu0 0.0
    %245 = vmatprep.subr.mxu0 0.0
    %246 = vmatpush1.msra.mxu0 0.0
    %247 = vmatprep.subr.mxu0 0.0
    %248 = vmatpush1.msra.mxu0 0.0
    %249 = vmatprep.subr.mxu0 0.0
    %250 = vmatpush1.msra.mxu0 0.0
    %251 = vmatprep.subr.mxu0 0.0
    %252 = vmatpush1.msra.mxu0 0.0
    %253 = vmatprep.subr.mxu0 0.0
    %254 = vmatpush1.msra.mxu0 0.0
    %255 = vmatprep.subr.mxu0 0.0
    %256 = vmatpush1.msra.mxu0 0.0
    %257 = vmatprep.subr.mxu0 0.0
    %258 = vmatpush1.msra.mxu0 0.0
    %259 = vmatprep.subr.mxu0 0.0
    %260 = vmatpush1.msra.mxu0 0.0
    %261 = vmatprep.subr.mxu0 0.0
    %262 = vmatpush1.msra.mxu0 0.0
    %263 = vmatprep.subr.mxu0 0.0
    %264 = vmatpush1.msra.mxu0 0.0
    %265 = vmatprep.subr.mxu0 0.0
    %266 = vmatpush1.msra.mxu0 0.0
    %267 = vmatprep.subr.mxu0 0.0
    %268 = vmatpush1.msra.mxu0 0.0
    %269 = vmatprep.subr.mxu0 0.0
    %270 = vmatpush1.msra.mxu0 0.0
    %271 = vmatprep.subr.mxu0 0.0
    %272 = vmatpush1.msra.mxu0 0.0
    %273 = vmatprep.subr.mxu0 0.0
    %274 = vmatpush1.msra.mxu0 0.0
    %275 = vmatprep.subr.mxu0 0.0
    %276 = vmatpush1.msra.mxu0 0.0
    %277 = vmatprep.subr.mxu0 0.0
    %278 = vmatpush1.msra.mxu0 0.0
    %279 = vmatprep.subr.mxu0 0.0
    %280 = vmatpush1.msra.mxu0 0.0
    %281 = vmatprep.subr.mxu0 0.0
    %282 = vmatpush1.msra.mxu0 0.0
    %283 = vmatprep.subr.mxu0 0.0
    %284 = vmatpush1.msra.mxu0 0.0
    %285 = vmatprep.subr.mxu0 0.0
    %286 = vmatpush1.msra.mxu0 0.0
    %287 = vmatprep.subr.mxu0 0.0
    %288 = vmatpush1.msra.mxu0 0.0
    %289 = vmatprep.mubr.f32.mxu0 0.0
    %290 = vmatmul.mubr.f32.gmra.mrb[0].mxu0 %v208
    %v291 = vpop.f32.mrb[0].mxu0
    %v292 = vadd.f32 %v185, %v291
    %v293 = vpop.f32.mrb[0].mxu0
    %v294 = vadd.f32 %v187, %v293
    %295 = vmatprep.mubr.f32.mxu0 0.0
    %296 = vmatmul.mubr.f32.gmra.mrb[0].mxu0 %v211
    %v297 = vpop.f32.mrb[0].mxu0
    %v298 = vadd.f32 %v191, %v297
    %v299 = vpop.f32.mrb[0].mxu0
    %v300 = vadd.f32 %v193, %v299
    %301 = vmatprep.mubr.f32.mxu0 0.0
    %302 = vmatmul.mubr.f32.gmra.mrb[0].mxu0 %v214
    %v303 = vpop.f32.mrb[0].mxu0
    %v304 = vadd.f32 %v197, %v303
    %v305 = vpop.f32.mrb[0].mxu0
    %v306 = vadd.f32 %v199, %v305
    %307 = vmatprep.mubr.f32.mxu0 0.0
    %308 = vmatmul.mubr.f32.gmra.mrb[0].mxu0 %v217
    %v309 = vpop.f32.mrb[0].mxu0
    %v310 = vadd.f32 %v203, %v309
    %v311 = vpop.f32.mrb[0].mxu0
    %v312 = vadd.f32 %v205, %v311
    %313 = vdwg.mxu0
    %v314 = vld [vmem:[%s0 + $0x2] sm:$0xff]
    %v315 = vld [vmem:[%s0 + $0xa] sm:$0xff]
    %v316 = vld [vmem:[%s0 + $0x12] sm:$0xff]
    %v317 = vld [vmem:[%s0 + $0x1a] sm:$0xf]
    %s318 = scalar_lea.vmem %s1, 128
    %v319 = vld [vmem:[%s318] sm:$0xff]
    %v320 = vld [vmem:[%s318 + $0x8] sm:$0xff]
    %v321 = vld [vmem:[%s318 + $0x10] sm:$0xff]
    %v322 = vld [vmem:[%s318 + $0x18] sm:$0xff]
    %v323 = vld [vmem:[%s318 + $0x20] sm:$0xff]
    %v324 = vld [vmem:[%s318 + $0x28] sm:$0xff]
    %v325 = vld [vmem:[%s318 + $0x30] sm:$0x3f]
    %v326 = vld [vmem:[%s318 + $0x38] sm:$0x3f]
    %v328 = vsel %vm98, %v314, 0
    %v331 = vsel %vm98, %v315, 0
    %v334 = vsel %vm98, %v316, 0
    %v337 = vsel %vm98, %v317, 0
    %v340 = vsel %vm111, %v325, 0
    %v343 = vsel %vm111, %v326, 0
    %345 = vmatprep.subr.mxu0 %v320
    %346 = vmatpush1.msra.mxu0 %v319
    %347 = vmatprep.subr.mxu0 %v322
    %348 = vmatpush1.msra.mxu0 %v321
    %349 = vmatprep.subr.mxu0 %v324
    %350 = vmatpush1.msra.mxu0 %v323
    %351 = vmatprep.subr.mxu0 %v343
    %352 = vmatpush1.msra.mxu0 %v340
    %353 = vmatprep.subr.mxu0 0.0
    %354 = vmatpush1.msra.mxu0 0.0
    %355 = vmatprep.subr.mxu0 0.0
    %356 = vmatpush1.msra.mxu0 0.0
    %357 = vmatprep.subr.mxu0 0.0
    %358 = vmatpush1.msra.mxu0 0.0
    %359 = vmatprep.subr.mxu0 0.0
    %360 = vmatpush1.msra.mxu0 0.0
    %361 = vmatprep.subr.mxu0 0.0
    %362 = vmatpush1.msra.mxu0 0.0
    %363 = vmatprep.subr.mxu0 0.0
    %364 = vmatpush1.msra.mxu0 0.0
    %365 = vmatprep.subr.mxu0 0.0
    %366 = vmatpush1.msra.mxu0 0.0
    %367 = vmatprep.subr.mxu0 0.0
    %368 = vmatpush1.msra.mxu0 0.0
    %369 = vmatprep.subr.mxu0 0.0
    %370 = vmatpush1.msra.mxu0 0.0
    %371 = vmatprep.subr.mxu0 0.0
    %372 = vmatpush1.msra.mxu0 0.0
    %373 = vmatprep.subr.mxu0 0.0
    %374 = vmatpush1.msra.mxu0 0.0
    %375 = vmatprep.subr.mxu0 0.0
    %376 = vmatpush1.msra.mxu0 0.0
    %377 = vmatprep.subr.mxu0 0.0
    %378 = vmatpush1.msra.mxu0 0.0
    %379 = vmatprep.subr.mxu0 0.0
    %380 = vmatpush1.msra.mxu0 0.0
    %381 = vmatprep.subr.mxu0 0.0
    %382 = vmatpush1.msra.mxu0 0.0
    %383 = vmatprep.subr.mxu0 0.0
    %384 = vmatpush1.msra.mxu0 0.0
    %385 = vmatprep.subr.mxu0 0.0
    %386 = vmatpush1.msra.mxu0 0.0
    %387 = vmatprep.subr.mxu0 0.0
    %388 = vmatpush1.msra.mxu0 0.0
    %389 = vmatprep.subr.mxu0 0.0
    %390 = vmatpush1.msra.mxu0 0.0
    %391 = vmatprep.subr.mxu0 0.0
    %392 = vmatpush1.msra.mxu0 0.0
    %393 = vmatprep.subr.mxu0 0.0
    %394 = vmatpush1.msra.mxu0 0.0
    %395 = vmatprep.subr.mxu0 0.0
    %396 = vmatpush1.msra.mxu0 0.0
    %397 = vmatprep.subr.mxu0 0.0
    %398 = vmatpush1.msra.mxu0 0.0
    %399 = vmatprep.subr.mxu0 0.0
    %400 = vmatpush1.msra.mxu0 0.0
    %401 = vmatprep.subr.mxu0 0.0
    %402 = vmatpush1.msra.mxu0 0.0
    %403 = vmatprep.subr.mxu0 0.0
    %404 = vmatpush1.msra.mxu0 0.0
    %405 = vmatprep.subr.mxu0 0.0
    %406 = vmatpush1.msra.mxu0 0.0
    %407 = vmatprep.subr.mxu0 0.0
    %408 = vmatpush1.msra.mxu0 0.0
    %409 = vmatprep.mubr.f32.mxu0 0.0
    %410 = vmatmul.mubr.f32.gmra.mrb[0].mxu0 %v328
    %v411 = vpop.f32.mrb[0].mxu0
    %v412 = vadd.f32 0.0, %v411
    %v413 = vpop.f32.mrb[0].mxu0
    %v414 = vadd.f32 0.0, %v413
    %415 = vmatprep.mubr.f32.mxu0 0.0
    %416 = vmatmul.mubr.f32.gmra.mrb[0].mxu0 %v331
    %v417 = vpop.f32.mrb[0].mxu0
    %v418 = vadd.f32 0.0, %v417
    %v419 = vpop.f32.mrb[0].mxu0
    %v420 = vadd.f32 0.0, %v419
    %421 = vmatprep.mubr.f32.mxu0 0.0
    %422 = vmatmul.mubr.f32.gmra.mrb[0].mxu0 %v334
    %v423 = vpop.f32.mrb[0].mxu0
    %v424 = vadd.f32 0.0, %v423
    %v425 = vpop.f32.mrb[0].mxu0
    %v426 = vadd.f32 0.0, %v425
    %427 = vmatprep.mubr.f32.mxu0 0.0
    %428 = vmatmul.mubr.f32.gmra.mrb[0].mxu0 %v337
    %v429 = vpop.f32.mrb[0].mxu0
    %v430 = vadd.f32 0.0, %v429
    %v431 = vpop.f32.mrb[0].mxu0
    %v432 = vadd.f32 0.0, %v431
    %433 = vdwg.mxu0
    %v434 = vadd.f32 %v292, %v412
    %v435 = vadd.f32 %v294, %v414
    %v436 = vadd.f32 %v298, %v418
    %v437 = vadd.f32 %v300, %v420
    %v438 = vadd.f32 %v304, %v424
    %v439 = vadd.f32 %v306, %v426
    %v440 = vadd.f32 %v310, %v430
    %v441 = vadd.f32 %v312, %v432
    %v442 = vld [vmem:[%s2] sm:$0x3]
    %v444 = vlaneseq
    %v445 = vshrl.u32 %v444, 7
    %v446 = vsub.s32 0, %v445
    %v447 = vrot.slane %v442, %v446
    %v448 = vlaneseq
    %v449 = vshrl.u32 %v448, 7
    %v450 = vsub.s32 1, %v449
    %v451 = vrot.slane %v442, %v450
    %v454 = vadd.f32 %v434, %v447
    %v455 = vadd.f32 %v435, %v451
    %v456 = vadd.f32 %v436, %v447
    %v457 = vadd.f32 %v437, %v451
    %v458 = vadd.f32 %v438, %v447
    %v459 = vadd.f32 %v439, %v451
    %v460 = vadd.f32 %v440, %v447
    %v461 = vadd.f32 %v441, %v451
    %v462 = vmax.f32 %v454, 0.0
    %v463 = vmax.f32 %v455, 0.0
    %v464 = vmax.f32 %v456, 0.0
    %v465 = vmax.f32 %v457, 0.0
    %v466 = vmax.f32 %v458, 0.0
    %v467 = vmax.f32 %v459, 0.0
    %v468 = vmax.f32 %v460, 0.0
    %v469 = vmax.f32 %v461, 0.0
    %v472 = vrot.slane %v462, 1
    %v473 = vrot.slane %v463, 1
    %v476 = vmax.f32 %v462, %v472
    %v477 = vmax.f32 %v463, %v473
    %v480 = vcombine.low %v476, %v477
    %v482 = vunpack.c.l.s4 1966171168
    %v483 = vunpack.c.0.s8 %v482
    %v484 = vlaneseq
    %v485 = vshrl.u32 %v484, 7
    %v486 = vsub.s32 %v483, %v485
    %v487 = vrot.slane %v480, %v486
    %v489 = vunpack.c.l.s4 1966171168
    %v490 = vunpack.c.0.s8 %v489
    %v491 = vlaneseq
    %v492 = vshrl.u32 %v491, 7
    %v493 = vsub.s32 %v490, %v492
    %v494 = vrot.slane %v487, %v493
    %v496 = vlaneseq
    %vm497 = vcmp.ge.s32.totalorder %v496, 0
    %vm498 = vcmp.lt.s32.totalorder %v496, 168
    %vm499 = vmand %vm497, %vm498
    %500 = vst.msk [vmem:[#allocation4] ss:$8 sm:$0x3] %vm499, %v494
    %501 = vst.msk [vmem:[#allocation4] ss:$8 sm:$0x0] %vm499, %v494
    %v502 = vcombine.high %v494, %v494
    %s504 = scalar_lea.vmem [#allocation4], 1
    %505 = vst.msk [vmem:[%s504] ss:$8 sm:$0x3] %vm499, %v502
    %506 = vst.msk [vmem:[%s504] ss:$8 sm:$0x0] %vm499, %v502
    %v507 = vcombine.high %v476, %v477
    %v509 = vunpack.c.l.s4 1966171168
    %v510 = vunpack.c.0.s8 %v509
    %v511 = vlaneseq
    %v512 = vshrl.u32 %v511, 7
    %v513 = vsub.s32 %v510, %v512
    %v514 = vrot.slane %v507, %v513
    %v516 = vunpack.c.l.s4 1966171168
    %v517 = vunpack.c.0.s8 %v516
    %v518 = vlaneseq
    %v519 = vshrl.u32 %v518, 7
    %v520 = vsub.s32 %v517, %v519
    %v521 = vrot.slane %v514, %v520
    %s523 = scalar_lea.vmem [#allocation4], 2
    %524 = vst.msk [vmem:[%s523] ss:$8 sm:$0x3] %vm499, %v521
    %525 = vst.msk [vmem:[%s523] ss:$8 sm:$0x0] %vm499, %v521
    %v526 = vcombine.high %v521, %v521
    %s528 = scalar_lea.vmem [#allocation4], 3
    %529 = vst.msk [vmem:[%s528] ss:$8 sm:$0x3] %vm499, %v526
    %530 = vst.msk [vmem:[%s528] ss:$8 sm:$0x0] %vm499, %v526
    %v533 = vrot.slane %v464, 1
    %v534 = vrot.slane %v465, 1
    %v537 = vmax.f32 %v464, %v533
    %v538 = vmax.f32 %v465, %v534
    %v541 = vcombine.low %v537, %v538
    %v543 = vunpack.c.l.s4 1966171168
    %v544 = vunpack.c.0.s8 %v543
    %v545 = vlaneseq
    %v546 = vshrl.u32 %v545, 7
    %v547 = vsub.s32 %v544, %v546
    %v548 = vrot.slane %v541, %v547
    %v550 = vunpack.c.l.s4 1966171168
    %v551 = vunpack.c.0.s8 %v550
    %v552 = vlaneseq
    %v553 = vshrl.u32 %v552, 7
    %v554 = vsub.s32 %v551, %v553
    %v555 = vrot.slane %v548, %v554
    %s557 = scalar_lea.vmem [#allocation4], 4
    %558 = vst.msk [vmem:[%s557] ss:$8 sm:$0x3] %vm499, %v555
    %559 = vst.msk [vmem:[%s557] ss:$8 sm:$0x0] %vm499, %v555
    %v560 = vcombine.high %v555, %v555
    %s562 = scalar_lea.vmem [#allocation4], 5
    %563 = vst.msk [vmem:[%s562] ss:$8 sm:$0x3] %vm499, %v560
    %564 = vst.msk [vmem:[%s562] ss:$8 sm:$0x0] %vm499, %v560
    %v565 = vcombine.high %v537, %v538
    %v567 = vunpack.c.l.s4 1966171168
    %v568 = vunpack.c.0.s8 %v567
    %v569 = vlaneseq
    %v570 = vshrl.u32 %v569, 7
    %v571 = vsub.s32 %v568, %v570
    %v572 = vrot.slane %v565, %v571
    %v574 = vunpack.c.l.s4 1966171168
    %v575 = vunpack.c.0.s8 %v574
    %v576 = vlaneseq
    %v577 = vshrl.u32 %v576, 7
    %v578 = vsub.s32 %v575, %v577
    %v579 = vrot.slane %v572, %v578
    %s581 = scalar_lea.vmem [#allocation4], 6
    %582 = vst.msk [vmem:[%s581] ss:$8 sm:$0x3] %vm499, %v579
    %583 = vst.msk [vmem:[%s581] ss:$8 sm:$0x0] %vm499, %v579
    %v584 = vcombine.high %v579, %v579
    %s586 = scalar_lea.vmem [#allocation4], 7
    %587 = vst.msk [vmem:[%s586] ss:$8 sm:$0x3] %vm499, %v584
    %588 = vst.msk [vmem:[%s586] ss:$8 sm:$0x0] %vm499, %v584
    %v591 = vrot.slane %v466, 1
    %v592 = vrot.slane %v467, 1
    %v595 = vmax.f32 %v466, %v591
    %v596 = vmax.f32 %v467, %v592
    %v599 = vcombine.low %v595, %v596
    %v601 = vunpack.c.l.s4 1966171168
    %v602 = vunpack.c.0.s8 %v601
    %v603 = vlaneseq
    %v604 = vshrl.u32 %v603, 7
    %v605 = vsub.s32 %v602, %v604
    %v606 = vrot.slane %v599, %v605
    %v608 = vunpack.c.l.s4 1966171168
    %v609 = vunpack.c.0.s8 %v608
    %v610 = vlaneseq
    %v611 = vshrl.u32 %v610, 7
    %v612 = vsub.s32 %v609, %v611
    %v613 = vrot.slane %v606, %v612
    %s615 = scalar_lea.vmem [#allocation4], 16
    %616 = vst.msk [vmem:[%s615] ss:$8 sm:$0x3] %vm499, %v613
    %617 = vst.msk [vmem:[%s615] ss:$8 sm:$0x0] %vm499, %v613
    %v618 = vcombine.high %v613, %v613
    %s620 = scalar_lea.vmem [#allocation4], 17
    %621 = vst.msk [vmem:[%s620] ss:$8 sm:$0x3] %vm499, %v618
    %622 = vst.msk [vmem:[%s620] ss:$8 sm:$0x0] %vm499, %v618
    %v623 = vcombine.high %v595, %v596
    %v625 = vunpack.c.l.s4 1966171168
    %v626 = vunpack.c.0.s8 %v625
    %v627 = vlaneseq
    %v628 = vshrl.u32 %v627, 7
    %v629 = vsub.s32 %v626, %v628
    %v630 = vrot.slane %v623, %v629
    %v632 = vunpack.c.l.s4 1966171168
    %v633 = vunpack.c.0.s8 %v632
    %v634 = vlaneseq
    %v635 = vshrl.u32 %v634, 7
    %v636 = vsub.s32 %v633, %v635
    %v637 = vrot.slane %v630, %v636
    %s639 = scalar_lea.vmem [#allocation4], 18
    %640 = vst.msk [vmem:[%s639] ss:$8 sm:$0x3] %vm499, %v637
    %641 = vst.msk [vmem:[%s639] ss:$8 sm:$0x0] %vm499, %v637
    %v642 = vcombine.high %v637, %v637
    %s644 = scalar_lea.vmem [#allocation4], 19
    %645 = vst.msk [vmem:[%s644] ss:$8 sm:$0x3] %vm499, %v642
    %646 = vst.msk [vmem:[%s644] ss:$8 sm:$0x0] %vm499, %v642
    %v649 = vrot.slane %v468, 1
    %v650 = vrot.slane %v469, 1
    %v653 = vmax.f32 %v468, %v649
    %v654 = vmax.f32 %v469, %v650
    %v657 = vcombine.low %v653, %v654
    %v659 = vunpack.c.l.s4 1966171168
    %v660 = vunpack.c.0.s8 %v659
    %v661 = vlaneseq
    %v662 = vshrl.u32 %v661, 7
    %v663 = vsub.s32 %v660, %v662
    %v664 = vrot.slane %v657, %v663
    %v666 = vunpack.c.l.s4 1966171168
    %v667 = vunpack.c.0.s8 %v666
    %v668 = vlaneseq
    %v669 = vshrl.u32 %v668, 7
    %v670 = vsub.s32 %v667, %v669
    %v671 = vrot.slane %v664, %v670
    %s673 = scalar_lea.vmem [#allocation4], 20
    %674 = vst.msk [vmem:[%s673] ss:$8 sm:$0x3] %vm499, %v671
    %675 = vst.msk [vmem:[%s673] ss:$8 sm:$0x0] %vm499, %v671
    %v676 = vcombine.high %v671, %v671
    %s678 = scalar_lea.vmem [#allocation4], 21
    %679 = vst.msk [vmem:[%s678] ss:$8 sm:$0x3] %vm499, %v676
    %680 = vst.msk [vmem:[%s678] ss:$8 sm:$0x0] %vm499, %v676
    %v681 = vld [vmem:[#allocation4] sm:$0xff]
    %v682 = vld [vmem:[#allocation4 + $0x8] sm:$0xff]
    %v683 = vld [vmem:[#allocation4 + $0x10] sm:$0x3f]
    %v684 = vld [vmem:[#allocation4 + $0x18] sm:$0x3f]
    %687 = vrot.lane.b32.xlu0 %v681, 122
    %v688 = vpop.permute.xlu0 %687
    %689 = vrot.lane.b32.xlu0 %v683, 122
    %v690 = vpop.permute.xlu0 %689
    %v693 = vmax.f32 %v681, %v688
    %v694 = vmax.f32 %v683, %v690
    %vm695 = vcmask 48128
    %696 = vst.msk [vmem:[#allocation2] sm:$0xff] %vm695, %v693
    %vm697 = vcmask 46080
    %698 = vst.msk [vmem:[#allocation2 + $0x8] sm:$0x3f] %vm697, %v694
    %701 = vrot.lane.b32.xlu0 %v693, 122
    %v702 = vpop.permute.xlu0 %701
    %703 = vrot.lane.b32.xlu0 %v694, 122
    %v704 = vpop.permute.xlu0 %703
    %vm707 = vcmask 97328
    %708 = vst.msk [vmem:[#allocation2] sm:$0xff] %vm707, %v702
    %vm709 = vcmask 95280
    %710 = vst.msk [vmem:[#allocation2 + $0x8] sm:$0x3f] %vm709, %v704
    %711 = vrot.lane.b32.xlu0 %v693, 116
    %v712 = vpop.permute.xlu0 %711
    %713 = vrot.lane.b32.xlu0 %v694, 116
    %v714 = vpop.permute.xlu0 %713
    %vm717 = vcmask 146528
    %718 = vst.msk [vmem:[#allocation2] sm:$0xff] %vm717, %v712
    %vm719 = vcmask 144480
    %720 = vst.msk [vmem:[#allocation2 + $0x8] sm:$0x3f] %vm719, %v714
    %721 = vrot.lane.b32.xlu0 %v693, 110
    %v722 = vpop.permute.xlu0 %721
    %723 = vrot.lane.b32.xlu0 %v694, 110
    %v724 = vpop.permute.xlu0 %723
    %vm727 = vcmask 195728
    %728 = vst.msk [vmem:[#allocation2] sm:$0xff] %vm727, %v722
    %vm729 = vcmask 193680
    %730 = vst.msk [vmem:[#allocation2 + $0x8] sm:$0x3f] %vm729, %v724
    %731 = vrot.lane.b32.xlu0 %v693, 104
    %v732 = vpop.permute.xlu0 %731
    %733 = vrot.lane.b32.xlu0 %v694, 104
    %v734 = vpop.permute.xlu0 %733
    %vm737 = vcmask 244928
    %738 = vst.msk [vmem:[#allocation2] sm:$0xff] %vm737, %v732
    %vm739 = vcmask 242880
    %740 = vst.msk [vmem:[#allocation2 + $0x8] sm:$0x3f] %vm739, %v734
    %741 = vrot.lane.b32.xlu0 %v693, 98
    %v742 = vpop.permute.xlu0 %741
    %743 = vrot.lane.b32.xlu0 %v694, 98
    %v744 = vpop.permute.xlu0 %743
    %vm747 = vcmask 294128
    %748 = vst.msk [vmem:[#allocation2] sm:$0xff] %vm747, %v742
    %vm749 = vcmask 292080
    %750 = vst.msk [vmem:[#allocation2 + $0x8] sm:$0x3f] %vm749, %v744
    %751 = vrot.lane.b32.xlu0 %v693, 92
    %v752 = vpop.permute.xlu0 %751
    %753 = vrot.lane.b32.xlu0 %v694, 92
    %v754 = vpop.permute.xlu0 %753
    %vm757 = vcmask 343328
    %758 = vst.msk [vmem:[#allocation2] sm:$0xff] %vm757, %v752
    %vm759 = vcmask 341280
    %760 = vst.msk [vmem:[#allocation2 + $0x8] sm:$0x3f] %vm759, %v754
    %761 = vrot.lane.b32.xlu0 %v693, 86
    %v762 = vpop.permute.xlu0 %761
    %763 = vrot.lane.b32.xlu0 %v694, 86
    %v764 = vpop.permute.xlu0 %763
    %vm767 = vcmask 392528
    %768 = vst.msk [vmem:[#allocation2] sm:$0xff] %vm767, %v762
    %vm769 = vcmask 390480
    %770 = vst.msk [vmem:[#allocation2 + $0x8] sm:$0x3f] %vm769, %v764
    %771 = vrot.lane.b32.xlu0 %v693, 80
    %v772 = vpop.permute.xlu0 %771
    %773 = vrot.lane.b32.xlu0 %v694, 80
    %v774 = vpop.permute.xlu0 %773
    %vm777 = vcmask 441728
    %778 = vst.msk [vmem:[#allocation2] sm:$0xff] %vm777, %v772
    %vm779 = vcmask 439680
    %780 = vst.msk [vmem:[#allocation2 + $0x8] sm:$0x3f] %vm779, %v774
    %781 = vrot.lane.b32.xlu0 %v693, 74
    %v782 = vpop.permute.xlu0 %781
    %783 = vrot.lane.b32.xlu0 %v694, 74
    %v784 = vpop.permute.xlu0 %783
    %vm787 = vcmask 490928
    %788 = vst.msk [vmem:[#allocation2] sm:$0xff] %vm787, %v782
    %vm789 = vcmask 488880
    %790 = vst.msk [vmem:[#allocation2 + $0x8] sm:$0x3f] %vm789, %v784
    %793 = vrot.lane.b32.xlu0 %v682, 122
    %v794 = vpop.permute.xlu0 %793
    %795 = vrot.lane.b32.xlu0 %v684, 122
    %v796 = vpop.permute.xlu0 %795
    %vm797 = vcmask 998400
    %v798 = vsel %vm797, %v688, %v794
    %v799 = vsel %vm797, %v690, %v796
    %v802 = vmax.f32 %v681, %v798
    %v803 = vmax.f32 %v683, %v799
    %806 = vrot.lane.b32.xlu0 %v802, 68
    %v807 = vpop.permute.xlu0 %806
    %808 = vrot.lane.b32.xlu0 %v803, 68
    %v809 = vpop.permute.xlu0 %808
    %vm812 = vcmask 540128
    %813 = vst.msk [vmem:[#allocation2] sm:$0xff] %vm812, %v807
    %vm814 = vcmask 538080
    %815 = vst.msk [vmem:[#allocation2 + $0x8] sm:$0x3f] %vm814, %v809
    %v818 = vmax.f32 %v682, %v794
    %v819 = vmax.f32 %v684, %v796
    %822 = vrot.lane.b32.xlu0 %v818, 62
    %v823 = vpop.permute.xlu0 %822
    %824 = vrot.lane.b32.xlu0 %v819, 62
    %v825 = vpop.permute.xlu0 %824
    %vm828 = vcmask 589328
    %829 = vst.msk [vmem:[#allocation2] sm:$0xff] %vm828, %v823
    %vm830 = vcmask 587280
    %831 = vst.msk [vmem:[#allocation2 + $0x8] sm:$0x3f] %vm830, %v825
    %832 = vrot.lane.b32.xlu0 %v818, 56
    %v833 = vpop.permute.xlu0 %832
    %834 = vrot.lane.b32.xlu0 %v819, 56
    %v835 = vpop.permute.xlu0 %834
    %vm838 = vcmask 638528
    %839 = vst.msk [vmem:[#allocation2] sm:$0xff] %vm838, %v833
    %vm840 = vcmask 636480
    %841 = vst.msk [vmem:[#allocation2 + $0x8] sm:$0x3f] %vm840, %v835
    %842 = vrot.lane.b32.xlu0 %v818, 50
    %v843 = vpop.permute.xlu0 %842
    %844 = vrot.lane.b32.xlu0 %v819, 50
    %v845 = vpop.permute.xlu0 %844
    %vm848 = vcmask 687728
    %849 = vst.msk [vmem:[#allocation2] sm:$0xff] %vm848, %v843
    %vm850 = vcmask 685680
    %851 = vst.msk [vmem:[#allocation2 + $0x8] sm:$0x3f] %vm850, %v845
    %v852 = vld [vmem:[#allocation2] sm:$0xff]
    %v853 = vld [vmem:[#allocation2 + $0x8] sm:$0xf]
    %v854 = vld [vmem:[%s3] sm:$0xff]
    %v855 = vld [vmem:[%s3 + $0x8] sm:$0xff]
    %v856 = vld [vmem:[%s3 + $0x10] sm:$0xff]
    %v857 = vld [vmem:[%s3 + $0x18] sm:$0xff]
    %v858 = vld [vmem:[%s3 + $0x20] sm:$0xff]
    %v859 = vld [vmem:[%s3 + $0x28] sm:$0xff]
    %v860 = vld [vmem:[%s3 + $0x30] sm:$0xff]
    %v861 = vld [vmem:[%s3 + $0x38] sm:$0xff]
    %v862 = vld [vmem:[%s3 + $0x40] sm:$0xff]
    %v863 = vld [vmem:[%s3 + $0x48] sm:$0xff]
    %v864 = vld [vmem:[%s3 + $0x50] sm:$0xff]
    %v865 = vld [vmem:[%s3 + $0x58] sm:$0xff]
    %v866 = vld [vmem:[%s3 + $0x60] sm:$0xff]
    %v867 = vld [vmem:[%s3 + $0x68] sm:$0xff]
    %v868 = vld [vmem:[%s3 + $0x70] sm:$0xff]
    %v869 = vld [vmem:[%s3 + $0x78] sm:$0xff]
    %v870 = vld [vmem:[%s3 + $0x80] sm:$0xff]
    %v871 = vld [vmem:[%s3 + $0x88] sm:$0xff]
    %v872 = vld [vmem:[%s3 + $0x90] sm:$0xff]
    %v873 = vld [vmem:[%s3 + $0x98] sm:$0xff]
    %v874 = vld [vmem:[%s3 + $0xa0] sm:$0xf]
    %v875 = vld [vmem:[%s3 + $0xa8] sm:$0xf]
    %v876 = vld [vmem:[#allocation2 + $0x1] sm:$0xff]
    %v877 = vld [vmem:[#allocation2 + $0x9] sm:$0xf]
    %s878 = scalar_lea.vmem %s3, 176
    %v879 = vld [vmem:[%s878] sm:$0xff]
    %v880 = vld [vmem:[%s878 + $0x8] sm:$0xff]
    %v881 = vld [vmem:[%s878 + $0x10] sm:$0xff]
    %v882 = vld [vmem:[%s878 + $0x18] sm:$0xff]
    %v883 = vld [vmem:[%s878 + $0x20] sm:$0xff]
    %v884 = vld [vmem:[%s878 + $0x28] sm:$0xff]
    %v885 = vld [vmem:[%s878 + $0x30] sm:$0xff]
    %v886 = vld [vmem:[%s878 + $0x38] sm:$0xff]
    %v887 = vld [vmem:[%s878 + $0x40] sm:$0xff]
    %v888 = vld [vmem:[%s878 + $0x48] sm:$0xff]
    %v889 = vld [vmem:[%s878 + $0x50] sm:$0xff]
    %v890 = vld [vmem:[%s878 + $0x58] sm:$0xff]
    %v891 = vld [vmem:[%s878 + $0x60] sm:$0xff]
    %v892 = vld [vmem:[%s878 + $0x68] sm:$0xff]
    %v893 = vld [vmem:[%s878 + $0x70] sm:$0xff]
    %v894 = vld [vmem:[%s878 + $0x78] sm:$0xff]
    %v895 = vld [vmem:[%s878 + $0x80] sm:$0xff]
    %v896 = vld [vmem:[%s878 + $0x88] sm:$0xff]
    %v897 = vld [vmem:[%s878 + $0x90] sm:$0xff]
    %v898 = vld [vmem:[%s878 + $0x98] sm:$0xff]
    %v899 = vld [vmem:[%s878 + $0xa0] sm:$0xf]
    %v900 = vld [vmem:[%s878 + $0xa8] sm:$0xf]
    %vm901 = vcmask 687104
    %v903 = vsel %vm901, %v876, 0
    %v906 = vsel %vm901, %v877, 0
    %vm908 = vcmask 1043456
    %v910 = vsel %vm908, %v899, 0
    %v913 = vsel %vm908, %v900, 0
    %915 = vmatprep.subr.mxu0 %v880
    %916 = vmatpush1.msra.mxu0 %v879
    %917 = vmatprep.subr.mxu0 %v882
    %918 = vmatpush1.msra.mxu0 %v881
    %919 = vmatprep.subr.mxu0 %v884
    %920 = vmatpush1.msra.mxu0 %v883
    %921 = vmatprep.subr.mxu0 %v886
    %922 = vmatpush1.msra.mxu0 %v885
    %923 = vmatprep.subr.mxu0 %v888
    %924 = vmatpush1.msra.mxu0 %v887
    %925 = vmatprep.subr.mxu0 %v890
    %926 = vmatpush1.msra.mxu0 %v889
    %927 = vmatprep.subr.mxu0 %v892
    %928 = vmatpush1.msra.mxu0 %v891
    %929 = vmatprep.subr.mxu0 %v894
    %930 = vmatpush1.msra.mxu0 %v893
    %931 = vmatprep.subr.mxu0 %v896
    %932 = vmatpush1.msra.mxu0 %v895
    %933 = vmatprep.subr.mxu0 %v898
    %934 = vmatpush1.msra.mxu0 %v897
    %935 = vmatprep.subr.mxu0 %v913
    %936 = vmatpush1.msra.mxu0 %v910
    %937 = vmatprep.subr.mxu0 0.0
    %938 = vmatpush1.msra.mxu0 0.0
    %939 = vmatprep.subr.mxu0 0.0
    %940 = vmatpush1.msra.mxu0 0.0
    %941 = vmatprep.subr.mxu0 0.0
    %942 = vmatpush1.msra.mxu0 0.0
    %943 = vmatprep.subr.mxu0 0.0
    %944 = vmatpush1.msra.mxu0 0.0
    %945 = vmatprep.subr.mxu0 0.0
    %946 = vmatpush1.msra.mxu0 0.0
    %947 = vmatprep.subr.mxu0 0.0
    %948 = vmatpush1.msra.mxu0 0.0
    %949 = vmatprep.subr.mxu0 0.0
    %950 = vmatpush1.msra.mxu0 0.0
    %951 = vmatprep.subr.mxu0 0.0
    %952 = vmatpush1.msra.mxu0 0.0
    %953 = vmatprep.subr.mxu0 0.0
    %954 = vmatpush1.msra.mxu0 0.0
    %955 = vmatprep.subr.mxu0 0.0
    %956 = vmatpush1.msra.mxu0 0.0
    %957 = vmatprep.subr.mxu0 0.0
    %958 = vmatpush1.msra.mxu0 0.0
    %959 = vmatprep.subr.mxu0 0.0
    %960 = vmatpush1.msra.mxu0 0.0
    %961 = vmatprep.subr.mxu0 0.0
    %962 = vmatpush1.msra.mxu0 0.0
    %963 = vmatprep.subr.mxu0 0.0
    %964 = vmatpush1.msra.mxu0 0.0
    %965 = vmatprep.subr.mxu0 0.0
    %966 = vmatpush1.msra.mxu0 0.0
    %967 = vmatprep.subr.mxu0 0.0
    %968 = vmatpush1.msra.mxu0 0.0
    %969 = vmatprep.subr.mxu0 0.0
    %970 = vmatpush1.msra.mxu0 0.0
    %971 = vmatprep.subr.mxu0 0.0
    %972 = vmatpush1.msra.mxu0 0.0
    %973 = vmatprep.subr.mxu0 0.0
    %974 = vmatpush1.msra.mxu0 0.0
    %975 = vmatprep.subr.mxu0 0.0
    %976 = vmatpush1.msra.mxu0 0.0
    %977 = vmatprep.subr.mxu0 0.0
    %978 = vmatpush1.msra.mxu0 0.0
    %979 = vmatprep.mubr.f32.mxu0 0.0
    %980 = vmatmul.mubr.f32.gmra.mrb[0].mxu0 %v903
    %v981 = vpop.f32.mrb[0].mxu0
    %v982 = vadd.f32 0.0, %v981
    %v983 = vpop.f32.mrb[0].mxu0
    %v984 = vadd.f32 0.0, %v983
    %985 = vmatprep.mubr.f32.mxu0 0.0
    %986 = vmatmul.mubr.f32.gmra.mrb[0].mxu0 %v906
    %v987 = vpop.f32.mrb[0].mxu0
    %v988 = vadd.f32 0.0, %v987
    %v989 = vpop.f32.mrb[0].mxu0
    %v990 = vadd.f32 0.0, %v989
    %991 = vdwg.mxu0
    %v993 = vsel %vm901, %v852, 0
    %v996 = vsel %vm901, %v853, 0
    %v999 = vsel %vm908, %v874, 0
    %v1002 = vsel %vm908, %v875, 0
    %1004 = vmatprep.subr.mxu0 %v855
    %1005 = vmatpush1.msra.mxu0 %v854
    %1006 = vmatprep.subr.mxu0 %v857
    %1007 = vmatpush1.msra.mxu0 %v856
    %1008 = vmatprep.subr.mxu0 %v859
    %1009 = vmatpush1.msra.mxu0 %v858
    %1010 = vmatprep.subr.mxu0 %v861
    %1011 = vmatpush1.msra.mxu0 %v860
    %1012 = vmatprep.subr.mxu0 %v863
    %1013 = vmatpush1.msra.mxu0 %v862
    %1014 = vmatprep.subr.mxu0 %v865
    %1015 = vmatpush1.msra.mxu0 %v864
    %1016 = vmatprep.subr.mxu0 %v867
    %1017 = vmatpush1.msra.mxu0 %v866
    %1018 = vmatprep.subr.mxu0 %v869
    %1019 = vmatpush1.msra.mxu0 %v868
    %1020 = vmatprep.subr.mxu0 %v871
    %1021 = vmatpush1.msra.mxu0 %v870
    %1022 = vmatprep.subr.mxu0 %v873
    %1023 = vmatpush1.msra.mxu0 %v872
    %1024 = vmatprep.subr.mxu0 %v1002
    %1025 = vmatpush1.msra.mxu0 %v999
    %1026 = vmatprep.subr.mxu0 0.0
    %1027 = vmatpush1.msra.mxu0 0.0
    %1028 = vmatprep.subr.mxu0 0.0
    %1029 = vmatpush1.msra.mxu0 0.0
    %1030 = vmatprep.subr.mxu0 0.0
    %1031 = vmatpush1.msra.mxu0 0.0
    %1032 = vmatprep.subr.mxu0 0.0
    %1033 = vmatpush1.msra.mxu0 0.0
    %1034 = vmatprep.subr.mxu0 0.0
    %1035 = vmatpush1.msra.mxu0 0.0
    %1036 = vmatprep.subr.mxu0 0.0
    %1037 = vmatpush1.msra.mxu0 0.0
    %1038 = vmatprep.subr.mxu0 0.0
    %1039 = vmatpush1.msra.mxu0 0.0
    %1040 = vmatprep.subr.mxu0 0.0
    %1041 = vmatpush1.msra.mxu0 0.0
    %1042 = vmatprep.subr.mxu0 0.0
    %1043 = vmatpush1.msra.mxu0 0.0
    %1044 = vmatprep.subr.mxu0 0.0
    %1045 = vmatpush1.msra.mxu0 0.0
    %1046 = vmatprep.subr.mxu0 0.0
    %1047 = vmatpush1.msra.mxu0 0.0
    %1048 = vmatprep.subr.mxu0 0.0
    %1049 = vmatpush1.msra.mxu0 0.0
    %1050 = vmatprep.subr.mxu0 0.0
    %1051 = vmatpush1.msra.mxu0 0.0
    %1052 = vmatprep.subr.mxu0 0.0
    %1053 = vmatpush1.msra.mxu0 0.0
    %1054 = vmatprep.subr.mxu0 0.0
    %1055 = vmatpush1.msra.mxu0 0.0
    %1056 = vmatprep.subr.mxu0 0.0
    %1057 = vmatpush1.msra.mxu0 0.0
    %1058 = vmatprep.subr.mxu0 0.0
    %1059 = vmatpush1.msra.mxu0 0.0
    %1060 = vmatprep.subr.mxu0 0.0
    %1061 = vmatpush1.msra.mxu0 0.0
    %1062 = vmatprep.subr.mxu0 0.0
    %1063 = vmatpush1.msra.mxu0 0.0
    %1064 = vmatprep.subr.mxu0 0.0
    %1065 = vmatpush1.msra.mxu0 0.0
    %1066 = vmatprep.subr.mxu0 0.0
    %1067 = vmatpush1.msra.mxu0 0.0
    %1068 = vmatprep.mubr.f32.mxu0 0.0
    %1069 = vmatmul.mubr.f32.gmra.mrb[0].mxu0 %v993
    %v1070 = vpop.f32.mrb[0].mxu0
    %v1071 = vadd.f32 %v982, %v1070
    %v1072 = vpop.f32.mrb[0].mxu0
    %v1073 = vadd.f32 %v984, %v1072
    %1074 = vmatprep.mubr.f32.mxu0 0.0
    %1075 = vmatmul.mubr.f32.gmra.mrb[0].mxu0 %v996
    %v1076 = vpop.f32.mrb[0].mxu0
    %v1077 = vadd.f32 %v988, %v1076
    %v1078 = vpop.f32.mrb[0].mxu0
    %v1079 = vadd.f32 %v990, %v1078
    %1080 = vdwg.mxu0
    %v1081 = vld [vmem:[#allocation2 + $0x2] sm:$0xff]
    %v1082 = vld [vmem:[#allocation2 + $0xa] sm:$0xf]
    %s1083 = scalar_lea.vmem %s3, 352
    %v1084 = vld [vmem:[%s1083] sm:$0xff]
    %v1085 = vld [vmem:[%s1083 + $0x8] sm:$0xff]
    %v1086 = vld [vmem:[%s1083 + $0x10] sm:$0xff]
    %v1087 = vld [vmem:[%s1083 + $0x18] sm:$0xff]
    %v1088 = vld [vmem:[%s1083 + $0x20] sm:$0xff]
    %v1089 = vld [vmem:[%s1083 + $0x28] sm:$0xff]
    %v1090 = vld [vmem:[%s1083 + $0x30] sm:$0xff]
    %v1091 = vld [vmem:[%s1083 + $0x38] sm:$0xff]
    %v1092 = vld [vmem:[%s1083 + $0x40] sm:$0xff]
    %v1093 = vld [vmem:[%s1083 + $0x48] sm:$0xff]
    %v1094 = vld [vmem:[%s1083 + $0x50] sm:$0xff]
    %v1095 = vld [vmem:[%s1083 + $0x58] sm:$0xff]
    %v1096 = vld [vmem:[%s1083 + $0x60] sm:$0xff]
    %v1097 = vld [vmem:[%s1083 + $0x68] sm:$0xff]
    %v1098 = vld [vmem:[%s1083 + $0x70] sm:$0xff]
    %v1099 = vld [vmem:[%s1083 + $0x78] sm:$0xff]
    %v1100 = vld [vmem:[%s1083 + $0x80] sm:$0xff]
    %v1101 = vld [vmem:[%s1083 + $0x88] sm:$0xff]
    %v1102 = vld [vmem:[%s1083 + $0x90] sm:$0xff]
    %v1103 = vld [vmem:[%s1083 + $0x98] sm:$0xff]
    %v1104 = vld [vmem:[%s1083 + $0xa0] sm:$0xf]
    %v1105 = vld [vmem:[%s1083 + $0xa8] sm:$0xf]
    %v1107 = vsel %vm901, %v1081, 0
    %v1110 = vsel %vm901, %v1082, 0
    %v1113 = vsel %vm908, %v1104, 0
    %v1116 = vsel %vm908, %v1105, 0
    %1118 = vmatprep.subr.mxu0 %v1085
    %1119 = vmatpush1.msra.mxu0 %v1084
    %1120 = vmatprep.subr.mxu0 %v1087
    %1121 = vmatpush1.msra.mxu0 %v1086
    %1122 = vmatprep.subr.mxu0 %v1089
    %1123 = vmatpush1.msra.mxu0 %v1088
    %1124 = vmatprep.subr.mxu0 %v1091
    %1125 = vmatpush1.msra.mxu0 %v1090
    %1126 = vmatprep.subr.mxu0 %v1093
    %1127 = vmatpush1.msra.mxu0 %v1092
    %1128 = vmatprep.subr.mxu0 %v1095
    %1129 = vmatpush1.msra.mxu0 %v1094
    %1130 = vmatprep.subr.mxu0 %v1097
    %1131 = vmatpush1.msra.mxu0 %v1096
    %1132 = vmatprep.subr.mxu0 %v1099
    %1133 = vmatpush1.msra.mxu0 %v1098
    %1134 = vmatprep.subr.mxu0 %v1101
    %1135 = vmatpush1.msra.mxu0 %v1100
    %1136 = vmatprep.subr.mxu0 %v1103
    %1137 = vmatpush1.msra.mxu0 %v1102
    %1138 = vmatprep.subr.mxu0 %v1116
    %1139 = vmatpush1.msra.mxu0 %v1113
    %1140 = vmatprep.subr.mxu0 0.0
    %1141 = vmatpush1.msra.mxu0 0.0
    %1142 = vmatprep.subr.mxu0 0.0
    %1143 = vmatpush1.msra.mxu0 0.0
    %1144 = vmatprep.subr.mxu0 0.0
    %1145 = vmatpush1.msra.mxu0 0.0
    %1146 = vmatprep.subr.mxu0 0.0
    %1147 = vmatpush1.msra.mxu0 0.0
    %1148 = vmatprep.subr.mxu0 0.0
    %1149 = vmatpush1.msra.mxu0 0.0
    %1150 = vmatprep.subr.mxu0 0.0
    %1151 = vmatpush1.msra.mxu0 0.0
    %1152 = vmatprep.subr.mxu0 0.0
    %1153 = vmatpush1.msra.mxu0 0.0
    %1154 = vmatprep.subr.mxu0 0.0
    %1155 = vmatpush1.msra.mxu0 0.0
    %1156 = vmatprep.subr.mxu0 0.0
    %1157 = vmatpush1.msra.mxu0 0.0
    %1158 = vmatprep.subr.mxu0 0.0
    %1159 = vmatpush1.msra.mxu0 0.0
    %1160 = vmatprep.subr.mxu0 0.0
    %1161 = vmatpush1.msra.mxu0 0.0
    %1162 = vmatprep.subr.mxu0 0.0
    %1163 = vmatpush1.msra.mxu0 0.0
    %1164 = vmatprep.subr.mxu0 0.0
    %1165 = vmatpush1.msra.mxu0 0.0
    %1166 = vmatprep.subr.mxu0 0.0
    %1167 = vmatpush1.msra.mxu0 0.0
    %1168 = vmatprep.subr.mxu0 0.0
    %1169 = vmatpush1.msra.mxu0 0.0
    %1170 = vmatprep.subr.mxu0 0.0
    %1171 = vmatpush1.msra.mxu0 0.0
    %1172 = vmatprep.subr.mxu0 0.0
    %1173 = vmatpush1.msra.mxu0 0.0
    %1174 = vmatprep.subr.mxu0 0.0
    %1175 = vmatpush1.msra.mxu0 0.0
    %1176 = vmatprep.subr.mxu0 0.0
    %1177 = vmatpush1.msra.mxu0 0.0
    %1178 = vmatprep.subr.mxu0 0.0
    %1179 = vmatpush1.msra.mxu0 0.0
    %1180 = vmatprep.subr.mxu0 0.0
    %1181 = vmatpush1.msra.mxu0 0.0
    %1182 = vmatprep.mubr.f32.mxu0 0.0
    %1183 = vmatmul.mubr.f32.gmra.mrb[0].mxu0 %v1107
    %v1184 = vpop.f32.mrb[0].mxu0
    %v1185 = vadd.f32 0.0, %v1184
    %v1186 = vpop.f32.mrb[0].mxu0
    %v1187 = vadd.f32 0.0, %v1186
    %1188 = vmatprep.mubr.f32.mxu0 0.0
    %1189 = vmatmul.mubr.f32.gmra.mrb[0].mxu0 %v1110
    %v1190 = vpop.f32.mrb[0].mxu0
    %v1191 = vadd.f32 0.0, %v1190
    %v1192 = vpop.f32.mrb[0].mxu0
    %v1193 = vadd.f32 0.0, %v1192
    %1194 = vdwg.mxu0
    %v1195 = vadd.f32 %v1071, %v1185
    %v1196 = vadd.f32 %v1073, %v1187
    %v1197 = vadd.f32 %v1077, %v1191
    %v1198 = vadd.f32 %v1079, %v1193
    %v1199 = vld [vmem:[%s4] sm:$0x3]
    %v1201 = vlaneseq
    %v1202 = vshrl.u32 %v1201, 7
    %v1203 = vsub.s32 0, %v1202
    %v1204 = vrot.slane %v1199, %v1203
    %v1205 = vlaneseq
    %v1206 = vshrl.u32 %v1205, 7
    %v1207 = vsub.s32 1, %v1206
    %v1208 = vrot.slane %v1199, %v1207
    %v1211 = vadd.f32 %v1195, %v1204
    %v1212 = vadd.f32 %v1196, %v1208
    %v1213 = vadd.f32 %v1197, %v1204
    %v1214 = vadd.f32 %v1198, %v1208
    %v1215 = vmax.f32 %v1211, 0.0
    %v1216 = vmax.f32 %v1212, 0.0
    %v1217 = vmax.f32 %v1213, 0.0
    %v1218 = vmax.f32 %v1214, 0.0
    %v1221 = vrot.slane %v1215, 1
    %v1222 = vrot.slane %v1216, 1
    %v1225 = vmax.f32 %v1215, %v1221
    %v1226 = vmax.f32 %v1216, %v1222
    %v1229 = vcombine.low %v1225, %v1226
    %v1231 = vunpack.c.l.s4 1966171168
    %v1232 = vunpack.c.0.s8 %v1231
    %v1233 = vlaneseq
    %v1234 = vshrl.u32 %v1233, 7
    %v1235 = vsub.s32 %v1232, %v1234
    %v1236 = vrot.slane %v1229, %v1235
    %v1238 = vunpack.c.l.s4 1966171168
    %v1239 = vunpack.c.0.s8 %v1238
    %v1240 = vlaneseq
    %v1241 = vshrl.u32 %v1240, 7
    %v1242 = vsub.s32 %v1239, %v1241
    %v1243 = vrot.slane %v1236, %v1242
    %vm1245 = vcmp.lt.s32.totalorder %v496, 192
    %vm1246 = vmand %vm497, %vm1245
    %1247 = vst.msk [vmem:[#allocation5] ss:$8 sm:$0x3] %vm1246, %v1243
    %1248 = vst.msk [vmem:[#allocation5] ss:$8 sm:$0x0] %vm1246, %v1243
    %v1249 = vcombine.high %v1243, %v1243
    %s1251 = scalar_lea.vmem [#allocation5], 1
    %1252 = vst.msk [vmem:[%s1251] ss:$8 sm:$0x3] %vm1246, %v1249
    %1253 = vst.msk [vmem:[%s1251] ss:$8 sm:$0x0] %vm1246, %v1249
    %v1254 = vcombine.high %v1225, %v1226
    %v1256 = vunpack.c.l.s4 1966171168
    %v1257 = vunpack.c.0.s8 %v1256
    %v1258 = vlaneseq
    %v1259 = vshrl.u32 %v1258, 7
    %v1260 = vsub.s32 %v1257, %v1259
    %v1261 = vrot.slane %v1254, %v1260
    %v1263 = vunpack.c.l.s4 1966171168
    %v1264 = vunpack.c.0.s8 %v1263
    %v1265 = vlaneseq
    %v1266 = vshrl.u32 %v1265, 7
    %v1267 = vsub.s32 %v1264, %v1266
    %v1268 = vrot.slane %v1261, %v1267
    %s1270 = scalar_lea.vmem [#allocation5], 2
    %1271 = vst.msk [vmem:[%s1270] ss:$8 sm:$0x3] %vm1246, %v1268
    %1272 = vst.msk [vmem:[%s1270] ss:$8 sm:$0x0] %vm1246, %v1268
    %v1273 = vcombine.high %v1268, %v1268
    %s1275 = scalar_lea.vmem [#allocation5], 3
    %1276 = vst.msk [vmem:[%s1275] ss:$8 sm:$0x3] %vm1246, %v1273
    %1277 = vst.msk [vmem:[%s1275] ss:$8 sm:$0x0] %vm1246, %v1273
    %v1280 = vrot.slane %v1217, 1
    %v1281 = vrot.slane %v1218, 1
    %v1284 = vmax.f32 %v1217, %v1280
    %v1285 = vmax.f32 %v1218, %v1281
    %v1288 = vcombine.low %v1284, %v1285
    %v1290 = vunpack.c.l.s4 1966171168
    %v1291 = vunpack.c.0.s8 %v1290
    %v1292 = vlaneseq
    %v1293 = vshrl.u32 %v1292, 7
    %v1294 = vsub.s32 %v1291, %v1293
    %v1295 = vrot.slane %v1288, %v1294
    %v1297 = vunpack.c.l.s4 1966171168
    %v1298 = vunpack.c.0.s8 %v1297
    %v1299 = vlaneseq
    %v1300 = vshrl.u32 %v1299, 7
    %v1301 = vsub.s32 %v1298, %v1300
    %v1302 = vrot.slane %v1295, %v1301
    %s1304 = scalar_lea.vmem [#allocation5], 4
    %1305 = vst.msk [vmem:[%s1304] ss:$8 sm:$0x3] %vm1246, %v1302
    %1306 = vst.msk [vmem:[%s1304] ss:$8 sm:$0x0] %vm1246, %v1302
    %v1307 = vcombine.high %v1302, %v1302
    %s1309 = scalar_lea.vmem [#allocation5], 5
    %1310 = vst.msk [vmem:[%s1309] ss:$8 sm:$0x3] %vm1246, %v1307
    %1311 = vst.msk [vmem:[%s1309] ss:$8 sm:$0x0] %vm1246, %v1307
    %v1312 = vld [vmem:[#allocation5] sm:$0x3f]
    %v1313 = vld [vmem:[#allocation5 + $0x8] sm:$0x3f]
    %1315 = vrot.lane.b32.xlu0 %v1312, 112
    %v1316 = vpop.permute.xlu0 %1315
    %v1318 = vmax.f32 %v1312, %v1316
    %vm1319 = vcmask 128000
    %1320 = vst.msk [vmem:[#allocation3] sm:$0x3f] %vm1319, %v1318
    %1322 = vrot.lane.b32.xlu0 %v1318, 112
    %v1323 = vpop.permute.xlu0 %1322
    %vm1325 = vcmask 259200
    %1326 = vst.msk [vmem:[#allocation3] sm:$0x3f] %vm1325, %v1323
    %1327 = vrot.lane.b32.xlu0 %v1318, 96
    %v1328 = vpop.permute.xlu0 %1327
    %vm1330 = vcmask 390400
    %1331 = vst.msk [vmem:[#allocation3] sm:$0x3f] %vm1330, %v1328
    %1332 = vrot.lane.b32.xlu0 %v1318, 80
    %v1333 = vpop.permute.xlu0 %1332
    %vm1335 = vcmask 521600
    %1336 = vst.msk [vmem:[#allocation3] sm:$0x3f] %vm1335, %v1333
    %1338 = vrot.lane.b32.xlu0 %v1313, 112
    %v1339 = vpop.permute.xlu0 %1338
    %v1341 = vmax.f32 %v1313, %v1339
    %1343 = vrot.lane.b32.xlu0 %v1341, 64
    %v1344 = vpop.permute.xlu0 %1343
    %vm1346 = vcmask 652800
    %1347 = vst.msk [vmem:[#allocation3] sm:$0x3f] %vm1346, %v1344
    %1348 = vrot.lane.b32.xlu0 %v1341, 48
    %v1349 = vpop.permute.xlu0 %1348
    %vm1351 = vcmask 784000
    %1352 = vst.msk [vmem:[#allocation3] sm:$0x3f] %vm1351, %v1349
    %v1353 = vld [vmem:[#allocation3] sm:$0xf]
    %v1354 = vld [vmem:[%s5] sm:$0xff]
    %v1355 = vld [vmem:[%s5 + $0x8] sm:$0xff]
    %v1356 = vld [vmem:[%s5 + $0x10] sm:$0xff]
    %v1357 = vld [vmem:[%s5 + $0x18] sm:$0xff]
    %v1358 = vld [vmem:[%s5 + $0x20] sm:$0xff]
    %v1359 = vld [vmem:[%s5 + $0x28] sm:$0xff]
    %v1360 = vld [vmem:[%s5 + $0x30] sm:$0xff]
    %v1361 = vld [vmem:[%s5 + $0x38] sm:$0xff]
    %v1362 = vld [vmem:[%s5 + $0x40] sm:$0xff]
    %v1363 = vld [vmem:[%s5 + $0x48] sm:$0xff]
    %v1364 = vld [vmem:[%s5 + $0x50] sm:$0xff]
    %v1365 = vld [vmem:[%s5 + $0x58] sm:$0xff]
    %v1366 = vld [vmem:[#allocation3 + $0x1] sm:$0xf]
    %s1367 = scalar_lea.vmem %s5, 96
    %v1368 = vld [vmem:[%s1367] sm:$0xff]
    %v1369 = vld [vmem:[%s1367 + $0x8] sm:$0xff]
    %v1370 = vld [vmem:[%s1367 + $0x10] sm:$0xff]
    %v1371 = vld [vmem:[%s1367 + $0x18] sm:$0xff]
    %v1372 = vld [vmem:[%s1367 + $0x20] sm:$0xff]
    %v1373 = vld [vmem:[%s1367 + $0x28] sm:$0xff]
    %v1374 = vld [vmem:[%s1367 + $0x30] sm:$0xff]
    %v1375 = vld [vmem:[%s1367 + $0x38] sm:$0xff]
    %v1376 = vld [vmem:[%s1367 + $0x40] sm:$0xff]
    %v1377 = vld [vmem:[%s1367 + $0x48] sm:$0xff]
    %v1378 = vld [vmem:[%s1367 + $0x50] sm:$0xff]
    %v1379 = vld [vmem:[%s1367 + $0x58] sm:$0xff]
    %vm1380 = vcmask 785408
    %v1382 = vsel %vm1380, %v1366, 0
    %1384 = vmatprep.subr.mxu0 0.0
    %1385 = vmatpush1.msra.mxu0 %v1368
    %1386 = vmatprep.subr.mxu0 0.0
    %1387 = vmatpush1.msra.mxu0 %v1369
    %1388 = vmatprep.subr.mxu0 0.0
    %1389 = vmatpush1.msra.mxu0 %v1370
    %1390 = vmatprep.subr.mxu0 0.0
    %1391 = vmatpush1.msra.mxu0 %v1371
    %1392 = vmatprep.subr.mxu0 0.0
    %1393 = vmatpush1.msra.mxu0 %v1372
    %1394 = vmatprep.subr.mxu0 0.0
    %1395 = vmatpush1.msra.mxu0 %v1373
    %1396 = vmatprep.subr.mxu0 0.0
    %1397 = vmatpush1.msra.mxu0 %v1374
    %1398 = vmatprep.subr.mxu0 0.0
    %1399 = vmatpush1.msra.mxu0 %v1375
    %1400 = vmatprep.subr.mxu0 0.0
    %1401 = vmatpush1.msra.mxu0 %v1376
    %1402 = vmatprep.subr.mxu0 0.0
    %1403 = vmatpush1.msra.mxu0 %v1377
    %1404 = vmatprep.subr.mxu0 0.0
    %1405 = vmatpush1.msra.mxu0 %v1378
    %1406 = vmatprep.subr.mxu0 0.0
    %1407 = vmatpush1.msra.mxu0 %v1379
    %1408 = vmatprep.subr.mxu0 0.0
    %1409 = vmatpush1.msra.mxu0 0.0
    %1410 = vmatprep.subr.mxu0 0.0
    %1411 = vmatpush1.msra.mxu0 0.0
    %1412 = vmatprep.subr.mxu0 0.0
    %1413 = vmatpush1.msra.mxu0 0.0
    %1414 = vmatprep.subr.mxu0 0.0
    %1415 = vmatpush1.msra.mxu0 0.0
    %1416 = vmatprep.subr.mxu0 0.0
    %1417 = vmatpush1.msra.mxu0 0.0
    %1418 = vmatprep.subr.mxu0 0.0
    %1419 = vmatpush1.msra.mxu0 0.0
    %1420 = vmatprep.subr.mxu0 0.0
    %1421 = vmatpush1.msra.mxu0 0.0
    %1422 = vmatprep.subr.mxu0 0.0
    %1423 = vmatpush1.msra.mxu0 0.0
    %1424 = vmatprep.subr.mxu0 0.0
    %1425 = vmatpush1.msra.mxu0 0.0
    %1426 = vmatprep.subr.mxu0 0.0
    %1427 = vmatpush1.msra.mxu0 0.0
    %1428 = vmatprep.subr.mxu0 0.0
    %1429 = vmatpush1.msra.mxu0 0.0
    %1430 = vmatprep.subr.mxu0 0.0
    %1431 = vmatpush1.msra.mxu0 0.0
    %1432 = vmatprep.subr.mxu0 0.0
    %1433 = vmatpush1.msra.mxu0 0.0
    %1434 = vmatprep.subr.mxu0 0.0
    %1435 = vmatpush1.msra.mxu0 0.0
    %1436 = vmatprep.subr.mxu0 0.0
    %1437 = vmatpush1.msra.mxu0 0.0
    %1438 = vmatprep.subr.mxu0 0.0
    %1439 = vmatpush1.msra.mxu0 0.0
    %1440 = vmatprep.subr.mxu0 0.0
    %1441 = vmatpush1.msra.mxu0 0.0
    %1442 = vmatprep.subr.mxu0 0.0
    %1443 = vmatpush1.msra.mxu0 0.0
    %1444 = vmatprep.subr.mxu0 0.0
    %1445 = vmatpush1.msra.mxu0 0.0
    %1446 = vmatprep.subr.mxu0 0.0
    %1447 = vmatpush1.msra.mxu0 0.0
    %1448 = vmatprep.mubr.f32.mxu0 0.0
    %1449 = vmatmul.mubr.f32.gmra.mrb[0].mxu0 %v1382
    %v1450 = vpop.f32.mrb[0].mxu0
    %v1451 = vadd.f32 0.0, %v1450
    %v1452 = vpop.f32.mrb[0].mxu0
    %1453 = vdwg.mxu0
    %v1455 = vsel %vm1380, %v1353, 0
    %1457 = vmatprep.subr.mxu0 0.0
    %1458 = vmatpush1.msra.mxu0 %v1354
    %1459 = vmatprep.subr.mxu0 0.0
    %1460 = vmatpush1.msra.mxu0 %v1355
    %1461 = vmatprep.subr.mxu0 0.0
    %1462 = vmatpush1.msra.mxu0 %v1356
    %1463 = vmatprep.subr.mxu0 0.0
    %1464 = vmatpush1.msra.mxu0 %v1357
    %1465 = vmatprep.subr.mxu0 0.0
    %1466 = vmatpush1.msra.mxu0 %v1358
    %1467 = vmatprep.subr.mxu0 0.0
    %1468 = vmatpush1.msra.mxu0 %v1359
    %1469 = vmatprep.subr.mxu0 0.0
    %1470 = vmatpush1.msra.mxu0 %v1360
    %1471 = vmatprep.subr.mxu0 0.0
    %1472 = vmatpush1.msra.mxu0 %v1361
    %1473 = vmatprep.subr.mxu0 0.0
    %1474 = vmatpush1.msra.mxu0 %v1362
    %1475 = vmatprep.subr.mxu0 0.0
    %1476 = vmatpush1.msra.mxu0 %v1363
    %1477 = vmatprep.subr.mxu0 0.0
    %1478 = vmatpush1.msra.mxu0 %v1364
    %1479 = vmatprep.subr.mxu0 0.0
    %1480 = vmatpush1.msra.mxu0 %v1365
    %1481 = vmatprep.subr.mxu0 0.0
    %1482 = vmatpush1.msra.mxu0 0.0
    %1483 = vmatprep.subr.mxu0 0.0
    %1484 = vmatpush1.msra.mxu0 0.0
    %1485 = vmatprep.subr.mxu0 0.0
    %1486 = vmatpush1.msra.mxu0 0.0
    %1487 = vmatprep.subr.mxu0 0.0
    %1488 = vmatpush1.msra.mxu0 0.0
    %1489 = vmatprep.subr.mxu0 0.0
    %1490 = vmatpush1.msra.mxu0 0.0
    %1491 = vmatprep.subr.mxu0 0.0
    %1492 = vmatpush1.msra.mxu0 0.0
    %1493 = vmatprep.subr.mxu0 0.0
    %1494 = vmatpush1.msra.mxu0 0.0
    %1495 = vmatprep.subr.mxu0 0.0
    %1496 = vmatpush1.msra.mxu0 0.0
    %1497 = vmatprep.subr.mxu0 0.0
    %1498 = vmatpush1.msra.mxu0 0.0
    %1499 = vmatprep.subr.mxu0 0.0
    %1500 = vmatpush1.msra.mxu0 0.0
    %1501 = vmatprep.subr.mxu0 0.0
    %1502 = vmatpush1.msra.mxu0 0.0
    %1503 = vmatprep.subr.mxu0 0.0
    %1504 = vmatpush1.msra.mxu0 0.0
    %1505 = vmatprep.subr.mxu0 0.0
    %1506 = vmatpush1.msra.mxu0 0.0
    %1507 = vmatprep.subr.mxu0 0.0
    %1508 = vmatpush1.msra.mxu0 0.0
    %1509 = vmatprep.subr.mxu0 0.0
    %1510 = vmatpush1.msra.mxu0 0.0
    %1511 = vmatprep.subr.mxu0 0.0
    %1512 = vmatpush1.msra.mxu0 0.0
    %1513 = vmatprep.subr.mxu0 0.0
    %1514 = vmatpush1.msra.mxu0 0.0
    %1515 = vmatprep.subr.mxu0 0.0
    %1516 = vmatpush1.msra.mxu0 0.0
    %1517 = vmatprep.subr.mxu0 0.0
    %1518 = vmatpush1.msra.mxu0 0.0
    %1519 = vmatprep.subr.mxu0 0.0
    %1520 = vmatpush1.msra.mxu0 0.0
    %1521 = vmatprep.mubr.f32.mxu0 0.0
    %1522 = vmatmul.mubr.f32.gmra.mrb[0].mxu0 %v1455
    %v1523 = vpop.f32.mrb[0].mxu0
    %v1524 = vadd.f32 %v1451, %v1523
    %v1525 = vpop.f32.mrb[0].mxu0
    %1526 = vdwg.mxu0
    %v1527 = vld [vmem:[#allocation3 + $0x2] sm:$0xf]
    %s1528 = scalar_lea.vmem %s5, 192
    %v1529 = vld [vmem:[%s1528] sm:$0xff]
    %v1530 = vld [vmem:[%s1528 + $0x8] sm:$0xff]
    %v1531 = vld [vmem:[%s1528 + $0x10] sm:$0xff]
    %v1532 = vld [vmem:[%s1528 + $0x18] sm:$0xff]
    %v1533 = vld [vmem:[%s1528 + $0x20] sm:$0xff]
    %v1534 = vld [vmem:[%s1528 + $0x28] sm:$0xff]
    %v1535 = vld [vmem:[%s1528 + $0x30] sm:$0xff]
    %v1536 = vld [vmem:[%s1528 + $0x38] sm:$0xff]
    %v1537 = vld [vmem:[%s1528 + $0x40] sm:$0xff]
    %v1538 = vld [vmem:[%s1528 + $0x48] sm:$0xff]
    %v1539 = vld [vmem:[%s1528 + $0x50] sm:$0xff]
    %v1540 = vld [vmem:[%s1528 + $0x58] sm:$0xff]
    %v1542 = vsel %vm1380, %v1527, 0
    %1544 = vmatprep.subr.mxu0 0.0
    %1545 = vmatpush1.msra.mxu0 %v1529
    %1546 = vmatprep.subr.mxu0 0.0
    %1547 = vmatpush1.msra.mxu0 %v1530
    %1548 = vmatprep.subr.mxu0 0.0
    %1549 = vmatpush1.msra.mxu0 %v1531
    %1550 = vmatprep.subr.mxu0 0.0
    %1551 = vmatpush1.msra.mxu0 %v1532
    %1552 = vmatprep.subr.mxu0 0.0
    %1553 = vmatpush1.msra.mxu0 %v1533
    %1554 = vmatprep.subr.mxu0 0.0
    %1555 = vmatpush1.msra.mxu0 %v1534
    %1556 = vmatprep.subr.mxu0 0.0
    %1557 = vmatpush1.msra.mxu0 %v1535
    %1558 = vmatprep.subr.mxu0 0.0
    %1559 = vmatpush1.msra.mxu0 %v1536
    %1560 = vmatprep.subr.mxu0 0.0
    %1561 = vmatpush1.msra.mxu0 %v1537
    %1562 = vmatprep.subr.mxu0 0.0
    %1563 = vmatpush1.msra.mxu0 %v1538
    %1564 = vmatprep.subr.mxu0 0.0
    %1565 = vmatpush1.msra.mxu0 %v1539
    %1566 = vmatprep.subr.mxu0 0.0
    %1567 = vmatpush1.msra.mxu0 %v1540
    %1568 = vmatprep.subr.mxu0 0.0
    %1569 = vmatpush1.msra.mxu0 0.0
    %1570 = vmatprep.subr.mxu0 0.0
    %1571 = vmatpush1.msra.mxu0 0.0
    %1572 = vmatprep.subr.mxu0 0.0
    %1573 = vmatpush1.msra.mxu0 0.0
    %1574 = vmatprep.subr.mxu0 0.0
    %1575 = vmatpush1.msra.mxu0 0.0
    %1576 = vmatprep.subr.mxu0 0.0
    %1577 = vmatpush1.msra.mxu0 0.0
    %1578 = vmatprep.subr.mxu0 0.0
    %1579 = vmatpush1.msra.mxu0 0.0
    %1580 = vmatprep.subr.mxu0 0.0
    %1581 = vmatpush1.msra.mxu0 0.0
    %1582 = vmatprep.subr.mxu0 0.0
    %1583 = vmatpush1.msra.mxu0 0.0
    %1584 = vmatprep.subr.mxu0 0.0
    %1585 = vmatpush1.msra.mxu0 0.0
    %1586 = vmatprep.subr.mxu0 0.0
    %1587 = vmatpush1.msra.mxu0 0.0
    %1588 = vmatprep.subr.mxu0 0.0
    %1589 = vmatpush1.msra.mxu0 0.0
    %1590 = vmatprep.subr.mxu0 0.0
    %1591 = vmatpush1.msra.mxu0 0.0
    %1592 = vmatprep.subr.mxu0 0.0
    %1593 = vmatpush1.msra.mxu0 0.0
    %1594 = vmatprep.subr.mxu0 0.0
    %1595 = vmatpush1.msra.mxu0 0.0
    %1596 = vmatprep.subr.mxu0 0.0
    %1597 = vmatpush1.msra.mxu0 0.0
    %1598 = vmatprep.subr.mxu0 0.0
    %1599 = vmatpush1.msra.mxu0 0.0
    %1600 = vmatprep.subr.mxu0 0.0
    %1601 = vmatpush1.msra.mxu0 0.0
    %1602 = vmatprep.subr.mxu0 0.0
    %1603 = vmatpush1.msra.mxu0 0.0
    %1604 = vmatprep.subr.mxu0 0.0
    %1605 = vmatpush1.msra.mxu0 0.0
    %1606 = vmatprep.subr.mxu0 0.0
    %1607 = vmatpush1.msra.mxu0 0.0
    %1608 = vmatprep.mubr.f32.mxu0 0.0
    %1609 = vmatmul.mubr.f32.gmra.mrb[0].mxu0 %v1542
    %v1610 = vpop.f32.mrb[0].mxu0
    %v1611 = vadd.f32 0.0, %v1610
    %v1612 = vpop.f32.mrb[0].mxu0
    %1613 = vdwg.mxu0
    %v1614 = vadd.f32 %v1524, %v1611
    %v1615 = vld [vmem:[%s6] sm:$0x1]
    %v1617 = vlaneseq
    %v1618 = vshrl.u32 %v1617, 7
    %v1619 = vsub.s32 0, %v1618
    %v1620 = vrot.slane %v1615, %v1619
    %v1622 = vadd.f32 %v1614, %v1620
    %v1623 = vmax.f32 %v1622, 0.0
    %v1624 = vld [vmem:[%s8] sm:$0x1]
    %v1625 = vld [vmem:[%s7] sm:$0xff]
    %v1626 = vld [vmem:[%s7 + $0x8] sm:$0xff]
    %v1627 = vld [vmem:[%s7 + $0x10] sm:$0xff]
    %v1628 = vld [vmem:[%s7 + $0x18] sm:$0xff]
    %v1629 = vld [vmem:[%s7 + $0x20] sm:$0xff]
    %v1630 = vld [vmem:[%s7 + $0x28] sm:$0xff]
    %v1631 = vld [vmem:[%s7 + $0x30] sm:$0xff]
    %v1632 = vld [vmem:[%s7 + $0x38] sm:$0xff]
    %vm1633 = vcmask 523264
    %v1635 = vsel %vm1633, %v1623, 0
    %1637 = vmatprep.subr.mxu0 0.0
    %1638 = vmatpush1.msra.mxu0 %v1625
    %1639 = vmatprep.subr.mxu0 0.0
    %1640 = vmatpush1.msra.mxu0 %v1626
    %1641 = vmatprep.subr.mxu0 0.0
    %1642 = vmatpush1.msra.mxu0 %v1627
    %1643 = vmatprep.subr.mxu0 0.0
    %1644 = vmatpush1.msra.mxu0 %v1628
    %1645 = vmatprep.subr.mxu0 0.0
    %1646 = vmatpush1.msra.mxu0 %v1629
    %1647 = vmatprep.subr.mxu0 0.0
    %1648 = vmatpush1.msra.mxu0 %v1630
    %1649 = vmatprep.subr.mxu0 0.0
    %1650 = vmatpush1.msra.mxu0 %v1631
    %1651 = vmatprep.subr.mxu0 0.0
    %1652 = vmatpush1.msra.mxu0 %v1632
    %1653 = vmatprep.subr.mxu0 0.0
    %1654 = vmatpush1.msra.mxu0 0.0
    %1655 = vmatprep.subr.mxu0 0.0
    %1656 = vmatpush1.msra.mxu0 0.0
    %1657 = vmatprep.subr.mxu0 0.0
    %1658 = vmatpush1.msra.mxu0 0.0
    %1659 = vmatprep.subr.mxu0 0.0
    %1660 = vmatpush1.msra.mxu0 0.0
    %1661 = vmatprep.subr.mxu0 0.0
    %1662 = vmatpush1.msra.mxu0 0.0
    %1663 = vmatprep.subr.mxu0 0.0
    %1664 = vmatpush1.msra.mxu0 0.0
    %1665 = vmatprep.subr.mxu0 0.0
    %1666 = vmatpush1.msra.mxu0 0.0
    %1667 = vmatprep.subr.mxu0 0.0
    %1668 = vmatpush1.msra.mxu0 0.0
    %1669 = vmatprep.subr.mxu0 0.0
    %1670 = vmatpush1.msra.mxu0 0.0
    %1671 = vmatprep.subr.mxu0 0.0
    %1672 = vmatpush1.msra.mxu0 0.0
    %1673 = vmatprep.subr.mxu0 0.0
    %1674 = vmatpush1.msra.mxu0 0.0
    %1675 = vmatprep.subr.mxu0 0.0
    %1676 = vmatpush1.msra.mxu0 0.0
    %1677 = vmatprep.subr.mxu0 0.0
    %1678 = vmatpush1.msra.mxu0 0.0
    %1679 = vmatprep.subr.mxu0 0.0
    %1680 = vmatpush1.msra.mxu0 0.0
    %1681 = vmatprep.subr.mxu0 0.0
    %1682 = vmatpush1.msra.mxu0 0.0
    %1683 = vmatprep.subr.mxu0 0.0
    %1684 = vmatpush1.msra.mxu0 0.0
    %1685 = vmatprep.subr.mxu0 0.0
    %1686 = vmatpush1.msra.mxu0 0.0
    %1687 = vmatprep.subr.mxu0 0.0
    %1688 = vmatpush1.msra.mxu0 0.0
    %1689 = vmatprep.subr.mxu0 0.0
    %1690 = vmatpush1.msra.mxu0 0.0
    %1691 = vmatprep.subr.mxu0 0.0
    %1692 = vmatpush1.msra.mxu0 0.0
    %1693 = vmatprep.subr.mxu0 0.0
    %1694 = vmatpush1.msra.mxu0 0.0
    %1695 = vmatprep.subr.mxu0 0.0
    %1696 = vmatpush1.msra.mxu0 0.0
    %1697 = vmatprep.subr.mxu0 0.0
    %1698 = vmatpush1.msra.mxu0 0.0
    %1699 = vmatprep.subr.mxu0 0.0
    %1700 = vmatpush1.msra.mxu0 0.0
    %1701 = vmatprep.mubr.f32.mxu0 0.0
    %1702 = vmatmul.mubr.f32.gmra.mrb[0].mxu0 %v1635
    %v1703 = vpop.f32.mrb[0].mxu0
    %v1704 = vadd.f32 0.0, %v1703
    %v1705 = vpop.f32.mrb[0].mxu0
    %1706 = vdwg.mxu0
    %v1707 = vadd.f32 %v1624, %v1704
    %s1708 = scalar_lea.vmem %s7, 64
    %v1709 = vld [vmem:[%s1708] sm:$0xff]
    %v1710 = vld [vmem:[%s1708 + $0x8] sm:$0xff]
    %v1711 = vld [vmem:[%s1708 + $0x10] sm:$0xff]
    %v1712 = vld [vmem:[%s1708 + $0x18] sm:$0xff]
    %v1713 = vld [vmem:[%s1708 + $0x20] sm:$0xff]
    %v1714 = vld [vmem:[%s1708 + $0x28] sm:$0xff]
    %v1715 = vld [vmem:[%s1708 + $0x30] sm:$0xff]
    %v1716 = vld [vmem:[%s1708 + $0x38] sm:$0xff]
    %v1717 = vrot.slane %v1623, 1
    %v1718 = vsel %vm1633, %v1717, 0
    %1720 = vmatprep.subr.mxu0 0.0
    %1721 = vmatpush1.msra.mxu0 %v1709
    %1722 = vmatprep.subr.mxu0 0.0
    %1723 = vmatpush1.msra.mxu0 %v1710
    %1724 = vmatprep.subr.mxu0 0.0
    %1725 = vmatpush1.msra.mxu0 %v1711
    %1726 = vmatprep.subr.mxu0 0.0
    %1727 = vmatpush1.msra.mxu0 %v1712
    %1728 = vmatprep.subr.mxu0 0.0
    %1729 = vmatpush1.msra.mxu0 %v1713
    %1730 = vmatprep.subr.mxu0 0.0
    %1731 = vmatpush1.msra.mxu0 %v1714
    %1732 = vmatprep.subr.mxu0 0.0
    %1733 = vmatpush1.msra.mxu0 %v1715
    %1734 = vmatprep.subr.mxu0 0.0
    %1735 = vmatpush1.msra.mxu0 %v1716
    %1736 = vmatprep.subr.mxu0 0.0
    %1737 = vmatpush1.msra.mxu0 0.0
    %1738 = vmatprep.subr.mxu0 0.0
    %1739 = vmatpush1.msra.mxu0 0.0
    %1740 = vmatprep.subr.mxu0 0.0
    %1741 = vmatpush1.msra.mxu0 0.0
    %1742 = vmatprep.subr.mxu0 0.0
    %1743 = vmatpush1.msra.mxu0 0.0
    %1744 = vmatprep.subr.mxu0 0.0
    %1745 = vmatpush1.msra.mxu0 0.0
    %1746 = vmatprep.subr.mxu0 0.0
    %1747 = vmatpush1.msra.mxu0 0.0
    %1748 = vmatprep.subr.mxu0 0.0
    %1749 = vmatpush1.msra.mxu0 0.0
    %1750 = vmatprep.subr.mxu0 0.0
    %1751 = vmatpush1.msra.mxu0 0.0
    %1752 = vmatprep.subr.mxu0 0.0
    %1753 = vmatpush1.msra.mxu0 0.0
    %1754 = vmatprep.subr.mxu0 0.0
    %1755 = vmatpush1.msra.mxu0 0.0
    %1756 = vmatprep.subr.mxu0 0.0
    %1757 = vmatpush1.msra.mxu0 0.0
    %1758 = vmatprep.subr.mxu0 0.0
    %1759 = vmatpush1.msra.mxu0 0.0
    %1760 = vmatprep.subr.mxu0 0.0
    %1761 = vmatpush1.msra.mxu0 0.0
    %1762 = vmatprep.subr.mxu0 0.0
    %1763 = vmatpush1.msra.mxu0 0.0
    %1764 = vmatprep.subr.mxu0 0.0
    %1765 = vmatpush1.msra.mxu0 0.0
    %1766 = vmatprep.subr.mxu0 0.0
    %1767 = vmatpush1.msra.mxu0 0.0
    %1768 = vmatprep.subr.mxu0 0.0
    %1769 = vmatpush1.msra.mxu0 0.0
    %1770 = vmatprep.subr.mxu0 0.0
    %1771 = vmatpush1.msra.mxu0 0.0
    %1772 = vmatprep.subr.mxu0 0.0
    %1773 = vmatpush1.msra.mxu0 0.0
    %1774 = vmatprep.subr.mxu0 0.0
    %1775 = vmatpush1.msra.mxu0 0.0
    %1776 = vmatprep.subr.mxu0 0.0
    %1777 = vmatpush1.msra.mxu0 0.0
    %1778 = vmatprep.subr.mxu0 0.0
    %1779 = vmatpush1.msra.mxu0 0.0
    %1780 = vmatprep.subr.mxu0 0.0
    %1781 = vmatpush1.msra.mxu0 0.0
    %1782 = vmatprep.subr.mxu0 0.0
    %1783 = vmatpush1.msra.mxu0 0.0
    %1784 = vmatprep.mubr.f32.mxu0 0.0
    %1785 = vmatmul.mubr.f32.gmra.mrb[0].mxu0 %v1718
    %v1786 = vpop.f32.mrb[0].mxu0
    %v1787 = vadd.f32 0.0, %v1786
    %v1788 = vpop.f32.mrb[0].mxu0
    %1789 = vdwg.mxu0
    %v1790 = vadd.f32 %v1707, %v1787
    %s1791 = scalar_lea.vmem %s7, 128
    %v1792 = vld [vmem:[%s1791] sm:$0xff]
    %v1793 = vld [vmem:[%s1791 + $0x8] sm:$0xff]
    %v1794 = vld [vmem:[%s1791 + $0x10] sm:$0xff]
    %v1795 = vld [vmem:[%s1791 + $0x18] sm:$0xff]
    %v1796 = vld [vmem:[%s1791 + $0x20] sm:$0xff]
    %v1797 = vld [vmem:[%s1791 + $0x28] sm:$0xff]
    %v1798 = vld [vmem:[%s1791 + $0x30] sm:$0xff]
    %v1799 = vld [vmem:[%s1791 + $0x38] sm:$0xff]
    %v1800 = vrot.slane %v1623, 2
    %v1801 = vsel %vm1633, %v1800, 0
    %1803 = vmatprep.subr.mxu0 0.0
    %1804 = vmatpush1.msra.mxu0 %v1792
    %1805 = vmatprep.subr.mxu0 0.0
    %1806 = vmatpush1.msra.mxu0 %v1793
    %1807 = vmatprep.subr.mxu0 0.0
    %1808 = vmatpush1.msra.mxu0 %v1794
    %1809 = vmatprep.subr.mxu0 0.0
    %1810 = vmatpush1.msra.mxu0 %v1795
    %1811 = vmatprep.subr.mxu0 0.0
    %1812 = vmatpush1.msra.mxu0 %v1796
    %1813 = vmatprep.subr.mxu0 0.0
    %1814 = vmatpush1.msra.mxu0 %v1797
    %1815 = vmatprep.subr.mxu0 0.0
    %1816 = vmatpush1.msra.mxu0 %v1798
    %1817 = vmatprep.subr.mxu0 0.0
    %1818 = vmatpush1.msra.mxu0 %v1799
    %1819 = vmatprep.subr.mxu0 0.0
    %1820 = vmatpush1.msra.mxu0 0.0
    %1821 = vmatprep.subr.mxu0 0.0
    %1822 = vmatpush1.msra.mxu0 0.0
    %1823 = vmatprep.subr.mxu0 0.0
    %1824 = vmatpush1.msra.mxu0 0.0
    %1825 = vmatprep.subr.mxu0 0.0
    %1826 = vmatpush1.msra.mxu0 0.0
    %1827 = vmatprep.subr.mxu0 0.0
    %1828 = vmatpush1.msra.mxu0 0.0
    %1829 = vmatprep.subr.mxu0 0.0
    %1830 = vmatpush1.msra.mxu0 0.0
    %1831 = vmatprep.subr.mxu0 0.0
    %1832 = vmatpush1.msra.mxu0 0.0
    %1833 = vmatprep.subr.mxu0 0.0
    %1834 = vmatpush1.msra.mxu0 0.0
    %1835 = vmatprep.subr.mxu0 0.0
    %1836 = vmatpush1.msra.mxu0 0.0
    %1837 = vmatprep.subr.mxu0 0.0
    %1838 = vmatpush1.msra.mxu0 0.0
    %1839 = vmatprep.subr.mxu0 0.0
    %1840 = vmatpush1.msra.mxu0 0.0
    %1841 = vmatprep.subr.mxu0 0.0
    %1842 = vmatpush1.msra.mxu0 0.0
    %1843 = vmatprep.subr.mxu0 0.0
    %1844 = vmatpush1.msra.mxu0 0.0
    %1845 = vmatprep.subr.mxu0 0.0
    %1846 = vmatpush1.msra.mxu0 0.0
    %1847 = vmatprep.subr.mxu0 0.0
    %1848 = vmatpush1.msra.mxu0 0.0
    %1849 = vmatprep.subr.mxu0 0.0
    %1850 = vmatpush1.msra.mxu0 0.0
    %1851 = vmatprep.subr.mxu0 0.0
    %1852 = vmatpush1.msra.mxu0 0.0
    %1853 = vmatprep.subr.mxu0 0.0
    %1854 = vmatpush1.msra.mxu0 0.0
    %1855 = vmatprep.subr.mxu0 0.0
    %1856 = vmatpush1.msra.mxu0 0.0
    %1857 = vmatprep.subr.mxu0 0.0
    %1858 = vmatpush1.msra.mxu0 0.0
    %1859 = vmatprep.subr.mxu0 0.0
    %1860 = vmatpush1.msra.mxu0 0.0
    %1861 = vmatprep.subr.mxu0 0.0
    %1862 = vmatpush1.msra.mxu0 0.0
    %1863 = vmatprep.subr.mxu0 0.0
    %1864 = vmatpush1.msra.mxu0 0.0
    %1865 = vmatprep.subr.mxu0 0.0
    %1866 = vmatpush1.msra.mxu0 0.0
    %1867 = vmatprep.mubr.f32.mxu0 0.0
    %1868 = vmatmul.mubr.f32.gmra.mrb[0].mxu0 %v1801
    %v1869 = vpop.f32.mrb[0].mxu0
    %v1870 = vadd.f32 0.0, %v1869
    %v1871 = vpop.f32.mrb[0].mxu0
    %1872 = vdwg.mxu0
    %v1873 = vadd.f32 %v1790, %v1870
    %s1874 = scalar_lea.vmem %s7, 192
    %v1875 = vld [vmem:[%s1874] sm:$0xff]
    %v1876 = vld [vmem:[%s1874 + $0x8] sm:$0xff]
    %v1877 = vld [vmem:[%s1874 + $0x10] sm:$0xff]
    %v1878 = vld [vmem:[%s1874 + $0x18] sm:$0xff]
    %v1879 = vld [vmem:[%s1874 + $0x20] sm:$0xff]
    %v1880 = vld [vmem:[%s1874 + $0x28] sm:$0xff]
    %v1881 = vld [vmem:[%s1874 + $0x30] sm:$0xff]
    %v1882 = vld [vmem:[%s1874 + $0x38] sm:$0xff]
    %v1883 = vrot.slane %v1623, 3
    %v1884 = vsel %vm1633, %v1883, 0
    %1886 = vmatprep.subr.mxu0 0.0
    %1887 = vmatpush1.msra.mxu0 %v1875
    %1888 = vmatprep.subr.mxu0 0.0
    %1889 = vmatpush1.msra.mxu0 %v1876
    %1890 = vmatprep.subr.mxu0 0.0
    %1891 = vmatpush1.msra.mxu0 %v1877
    %1892 = vmatprep.subr.mxu0 0.0
    %1893 = vmatpush1.msra.mxu0 %v1878
    %1894 = vmatprep.subr.mxu0 0.0
    %1895 = vmatpush1.msra.mxu0 %v1879
    %1896 = vmatprep.subr.mxu0 0.0
    %1897 = vmatpush1.msra.mxu0 %v1880
    %1898 = vmatprep.subr.mxu0 0.0
    %1899 = vmatpush1.msra.mxu0 %v1881
    %1900 = vmatprep.subr.mxu0 0.0
    %1901 = vmatpush1.msra.mxu0 %v1882
    %1902 = vmatprep.subr.mxu0 0.0
    %1903 = vmatpush1.msra.mxu0 0.0
    %1904 = vmatprep.subr.mxu0 0.0
    %1905 = vmatpush1.msra.mxu0 0.0
    %1906 = vmatprep.subr.mxu0 0.0
    %1907 = vmatpush1.msra.mxu0 0.0
    %1908 = vmatprep.subr.mxu0 0.0
    %1909 = vmatpush1.msra.mxu0 0.0
    %1910 = vmatprep.subr.mxu0 0.0
    %1911 = vmatpush1.msra.mxu0 0.0
    %1912 = vmatprep.subr.mxu0 0.0
    %1913 = vmatpush1.msra.mxu0 0.0
    %1914 = vmatprep.subr.mxu0 0.0
    %1915 = vmatpush1.msra.mxu0 0.0
    %1916 = vmatprep.subr.mxu0 0.0
    %1917 = vmatpush1.msra.mxu0 0.0
    %1918 = vmatprep.subr.mxu0 0.0
    %1919 = vmatpush1.msra.mxu0 0.0
    %1920 = vmatprep.subr.mxu0 0.0
    %1921 = vmatpush1.msra.mxu0 0.0
    %1922 = vmatprep.subr.mxu0 0.0
    %1923 = vmatpush1.msra.mxu0 0.0
    %1924 = vmatprep.subr.mxu0 0.0
    %1925 = vmatpush1.msra.mxu0 0.0
    %1926 = vmatprep.subr.mxu0 0.0
    %1927 = vmatpush1.msra.mxu0 0.0
    %1928 = vmatprep.subr.mxu0 0.0
    %1929 = vmatpush1.msra.mxu0 0.0
    %1930 = vmatprep.subr.mxu0 0.0
    %1931 = vmatpush1.msra.mxu0 0.0
    %1932 = vmatprep.subr.mxu0 0.0
    %1933 = vmatpush1.msra.mxu0 0.0
    %1934 = vmatprep.subr.mxu0 0.0
    %1935 = vmatpush1.msra.mxu0 0.0
    %1936 = vmatprep.subr.mxu0 0.0
    %1937 = vmatpush1.msra.mxu0 0.0
    %1938 = vmatprep.subr.mxu0 0.0
    %1939 = vmatpush1.msra.mxu0 0.0
    %1940 = vmatprep.subr.mxu0 0.0
    %1941 = vmatpush1.msra.mxu0 0.0
    %1942 = vmatprep.subr.mxu0 0.0
    %1943 = vmatpush1.msra.mxu0 0.0
    %1944 = vmatprep.subr.mxu0 0.0
    %1945 = vmatpush1.msra.mxu0 0.0
    %1946 = vmatprep.subr.mxu0 0.0
    %1947 = vmatpush1.msra.mxu0 0.0
    %1948 = vmatprep.subr.mxu0 0.0
    %1949 = vmatpush1.msra.mxu0 0.0
    %1950 = vmatprep.mubr.f32.mxu0 0.0
    %1951 = vmatmul.mubr.f32.gmra.mrb[0].mxu0 %v1884
    %v1952 = vpop.f32.mrb[0].mxu0
    %v1953 = vadd.f32 0.0, %v1952
    %v1954 = vpop.f32.mrb[0].mxu0
    %1955 = vdwg.mxu0
    %v1956 = vadd.f32 %v1873, %v1953
    %v1957 = vmax.f32 %v1956, 0.0
    %v1958 = vld [vmem:[#allocation6] sm:$0xff]
    %v1959 = vld [vmem:[#allocation6 + $0x8] sm:$0xff]
    %v1960 = vld [vmem:[#allocation6 + $0x10] sm:$0xff]
    %v1961 = vld [vmem:[#allocation6 + $0x18] sm:$0xff]
    %v1962 = vld [vmem:[#allocation6 + $0x20] sm:$0xff]
    %v1963 = vld [vmem:[#allocation6 + $0x28] sm:$0xff]
    %v1964 = vld [vmem:[#allocation6 + $0x30] sm:$0xff]
    %v1965 = vld [vmem:[#allocation6 + $0x38] sm:$0xff]
    %v1966 = vld [vmem:[#allocation6 + $0x40] sm:$0xff]
    %v1967 = vld [vmem:[#allocation6 + $0x48] sm:$0xff]
    %v1968 = vld [vmem:[#allocation6 + $0x50] sm:$0xff]
    %v1969 = vld [vmem:[#allocation6 + $0x58] sm:$0xff]
    %v1970 = vld [vmem:[#allocation6 + $0x60] sm:$0xff]
    %v1971 = vld [vmem:[#allocation6 + $0x68] sm:$0xff]
    %v1972 = vld [vmem:[#allocation6 + $0x70] sm:$0xff]
    %v1973 = vld [vmem:[#allocation6 + $0x78] sm:$0xff]
    %v1974 = vld [vmem:[%s10] sm:$0x1]
    %1975 = vmatprep.subr.mxu0 0.0
    %1976 = vmatpush1.msra.mxu0 %v1958
    %1977 = vmatprep.subr.mxu0 0.0
    %1978 = vmatpush1.msra.mxu0 %v1959
    %1979 = vmatprep.subr.mxu0 0.0
    %1980 = vmatpush1.msra.mxu0 %v1960
    %1981 = vmatprep.subr.mxu0 0.0
    %1982 = vmatpush1.msra.mxu0 %v1961
    %1983 = vmatprep.subr.mxu0 0.0
    %1984 = vmatpush1.msra.mxu0 %v1962
    %1985 = vmatprep.subr.mxu0 0.0
    %1986 = vmatpush1.msra.mxu0 %v1963
    %1987 = vmatprep.subr.mxu0 0.0
    %1988 = vmatpush1.msra.mxu0 %v1964
    %1989 = vmatprep.subr.mxu0 0.0
    %1990 = vmatpush1.msra.mxu0 %v1965
    %1991 = vmatprep.subr.mxu0 0.0
    %1992 = vmatpush1.msra.mxu0 %v1966
    %1993 = vmatprep.subr.mxu0 0.0
    %1994 = vmatpush1.msra.mxu0 %v1967
    %1995 = vmatprep.subr.mxu0 0.0
    %1996 = vmatpush1.msra.mxu0 %v1968
    %1997 = vmatprep.subr.mxu0 0.0
    %1998 = vmatpush1.msra.mxu0 %v1969
    %1999 = vmatprep.subr.mxu0 0.0
    %2000 = vmatpush1.msra.mxu0 %v1970
    %2001 = vmatprep.subr.mxu0 0.0
    %2002 = vmatpush1.msra.mxu0 %v1971
    %2003 = vmatprep.subr.mxu0 0.0
    %2004 = vmatpush1.msra.mxu0 %v1972
    %2005 = vmatprep.subr.mxu0 0.0
    %2006 = vmatpush1.msra.mxu0 %v1973
    %2007 = vmatprep.subr.mxu0 0.0
    %2008 = vmatpush1.msra.mxu0 0.0
    %2009 = vmatprep.subr.mxu0 0.0
    %2010 = vmatpush1.msra.mxu0 0.0
    %2011 = vmatprep.subr.mxu0 0.0
    %2012 = vmatpush1.msra.mxu0 0.0
    %2013 = vmatprep.subr.mxu0 0.0
    %2014 = vmatpush1.msra.mxu0 0.0
    %2015 = vmatprep.subr.mxu0 0.0
    %2016 = vmatpush1.msra.mxu0 0.0
    %2017 = vmatprep.subr.mxu0 0.0
    %2018 = vmatpush1.msra.mxu0 0.0
    %2019 = vmatprep.subr.mxu0 0.0
    %2020 = vmatpush1.msra.mxu0 0.0
    %2021 = vmatprep.subr.mxu0 0.0
    %2022 = vmatpush1.msra.mxu0 0.0
    %2023 = vmatprep.subr.mxu0 0.0
    %2024 = vmatpush1.msra.mxu0 0.0
    %2025 = vmatprep.subr.mxu0 0.0
    %2026 = vmatpush1.msra.mxu0 0.0
    %2027 = vmatprep.subr.mxu0 0.0
    %2028 = vmatpush1.msra.mxu0 0.0
    %2029 = vmatprep.subr.mxu0 0.0
    %2030 = vmatpush1.msra.mxu0 0.0
    %2031 = vmatprep.subr.mxu0 0.0
    %2032 = vmatpush1.msra.mxu0 0.0
    %2033 = vmatprep.subr.mxu0 0.0
    %2034 = vmatpush1.msra.mxu0 0.0
    %2035 = vmatprep.subr.mxu0 0.0
    %2036 = vmatpush1.msra.mxu0 0.0
    %2037 = vmatprep.subr.mxu0 0.0
    %2038 = vmatpush1.msra.mxu0 0.0
    %2039 = vmatprep.mubr.f32.mxu0 0.0
    %2040 = vmatmul.mubr.f32.gmra.mrb[0].mxu0 %v1957
    %v2041 = vpop.f32.mrb[0].mxu0
    %v2042 = vadd.f32 %v1974, %v2041
    %v2043 = vpop.f32.mrb[0].mxu0
    %2044 = vdwg.mxu0
    %v2045 = vmax.f32 %v2042, 0.0
    %v2046 = vld [vmem:[#allocation9] sm:$0xff]
    %v2047 = vld [vmem:[#allocation9 + $0x8] sm:$0xff]
    %v2048 = vld [vmem:[#allocation9 + $0x10] sm:$0xff]
    %v2049 = vld [vmem:[#allocation9 + $0x18] sm:$0xff]
    %v2050 = vld [vmem:[#allocation9 + $0x20] sm:$0xff]
    %v2051 = vld [vmem:[#allocation9 + $0x28] sm:$0xff]
    %v2052 = vld [vmem:[#allocation9 + $0x30] sm:$0xff]
    %v2053 = vld [vmem:[#allocation9 + $0x38] sm:$0xff]
    %v2054 = vld [vmem:[#allocation9 + $0x40] sm:$0xff]
    %v2055 = vld [vmem:[#allocation9 + $0x48] sm:$0xff]
    %v2056 = vld [vmem:[#allocation9 + $0x50] sm:$0xff]
    %v2057 = vld [vmem:[#allocation9 + $0x58] sm:$0xff]
    %v2058 = vld [vmem:[#allocation9 + $0x60] sm:$0xff]
    %v2059 = vld [vmem:[#allocation9 + $0x68] sm:$0xff]
    %v2060 = vld [vmem:[#allocation9 + $0x70] sm:$0xff]
    %v2061 = vld [vmem:[#allocation9 + $0x78] sm:$0xff]
    %v2062 = vld [vmem:[%s12] sm:$0x1]
    %2063 = vmatprep.subr.mxu0 0.0
    %2064 = vmatpush1.msra.mxu0 %v2046
    %2065 = vmatprep.subr.mxu0 0.0
    %2066 = vmatpush1.msra.mxu0 %v2047
    %2067 = vmatprep.subr.mxu0 0.0
    %2068 = vmatpush1.msra.mxu0 %v2048
    %2069 = vmatprep.subr.mxu0 0.0
    %2070 = vmatpush1.msra.mxu0 %v2049
    %2071 = vmatprep.subr.mxu0 0.0
    %2072 = vmatpush1.msra.mxu0 %v2050
    %2073 = vmatprep.subr.mxu0 0.0
    %2074 = vmatpush1.msra.mxu0 %v2051
    %2075 = vmatprep.subr.mxu0 0.0
    %2076 = vmatpush1.msra.mxu0 %v2052
    %2077 = vmatprep.subr.mxu0 0.0
    %2078 = vmatpush1.msra.mxu0 %v2053
    %2079 = vmatprep.subr.mxu0 0.0
    %2080 = vmatpush1.msra.mxu0 %v2054
    %2081 = vmatprep.subr.mxu0 0.0
    %2082 = vmatpush1.msra.mxu0 %v2055
    %2083 = vmatprep.subr.mxu0 0.0
    %2084 = vmatpush1.msra.mxu0 %v2056
    %2085 = vmatprep.subr.mxu0 0.0
    %2086 = vmatpush1.msra.mxu0 %v2057
    %2087 = vmatprep.subr.mxu0 0.0
    %2088 = vmatpush1.msra.mxu0 %v2058
    %2089 = vmatprep.subr.mxu0 0.0
    %2090 = vmatpush1.msra.mxu0 %v2059
    %2091 = vmatprep.subr.mxu0 0.0
    %2092 = vmatpush1.msra.mxu0 %v2060
    %2093 = vmatprep.subr.mxu0 0.0
    %2094 = vmatpush1.msra.mxu0 %v2061
    %2095 = vmatprep.subr.mxu0 0.0
    %2096 = vmatpush1.msra.mxu0 0.0
    %2097 = vmatprep.subr.mxu0 0.0
    %2098 = vmatpush1.msra.mxu0 0.0
    %2099 = vmatprep.subr.mxu0 0.0
    %2100 = vmatpush1.msra.mxu0 0.0
    %2101 = vmatprep.subr.mxu0 0.0
    %2102 = vmatpush1.msra.mxu0 0.0
    %2103 = vmatprep.subr.mxu0 0.0
    %2104 = vmatpush1.msra.mxu0 0.0
    %2105 = vmatprep.subr.mxu0 0.0
    %2106 = vmatpush1.msra.mxu0 0.0
    %2107 = vmatprep.subr.mxu0 0.0
    %2108 = vmatpush1.msra.mxu0 0.0
    %2109 = vmatprep.subr.mxu0 0.0
    %2110 = vmatpush1.msra.mxu0 0.0
    %2111 = vmatprep.subr.mxu0 0.0
    %2112 = vmatpush1.msra.mxu0 0.0
    %2113 = vmatprep.subr.mxu0 0.0
    %2114 = vmatpush1.msra.mxu0 0.0
    %2115 = vmatprep.subr.mxu0 0.0
    %2116 = vmatpush1.msra.mxu0 0.0
    %2117 = vmatprep.subr.mxu0 0.0
    %2118 = vmatpush1.msra.mxu0 0.0
    %2119 = vmatprep.subr.mxu0 0.0
    %2120 = vmatpush1.msra.mxu0 0.0
    %2121 = vmatprep.subr.mxu0 0.0
    %2122 = vmatpush1.msra.mxu0 0.0
    %2123 = vmatprep.subr.mxu0 0.0
    %2124 = vmatpush1.msra.mxu0 0.0
    %2125 = vmatprep.subr.mxu0 0.0
    %2126 = vmatpush1.msra.mxu0 0.0
    %2127 = vmatprep.mubr.f32.mxu0 0.0
    %2128 = vmatmul.mubr.f32.gmra.mrb[0].mxu0 %v2045
    %v2129 = vpop.f32.mrb[0].mxu0
    %v2130 = vadd.f32 %v2062, %v2129
    %v2131 = vpop.f32.mrb[0].mxu0
    %2132 = vdwg.mxu0
    %2133 = vst [vmem:[#allocation11] sm:$0x1] %v2130
    %v2134 = vld [vmem:[%s0 + $0x1e] sm:$0xff]
    %v2135 = vld [vmem:[%s0 + $0x26] sm:$0xff]
    %v2136 = vld [vmem:[%s0 + $0x2e] sm:$0xff]
    %v2137 = vld [vmem:[%s0 + $0x36] sm:$0xf]
    %v2138 = vld [vmem:[%s1] sm:$0xff]
    %v2139 = vld [vmem:[%s1 + $0x8] sm:$0xff]
    %v2140 = vld [vmem:[%s1 + $0x10] sm:$0xff]
    %v2141 = vld [vmem:[%s1 + $0x18] sm:$0xff]
    %v2142 = vld [vmem:[%s1 + $0x20] sm:$0xff]
    %v2143 = vld [vmem:[%s1 + $0x28] sm:$0xff]
    %v2144 = vld [vmem:[%s1 + $0x30] sm:$0x3f]
    %v2145 = vld [vmem:[%s1 + $0x38] sm:$0x3f]
    %v2146 = vld [vmem:[%s0 + $0x1f] sm:$0xff]
    %v2147 = vld [vmem:[%s0 + $0x27] sm:$0xff]
    %v2148 = vld [vmem:[%s0 + $0x2f] sm:$0xff]
    %v2149 = vld [vmem:[%s0 + $0x37] sm:$0xf]
    %v2150 = vld [vmem:[%s89] sm:$0xff]
    %v2151 = vld [vmem:[%s89 + $0x8] sm:$0xff]
    %v2152 = vld [vmem:[%s89 + $0x10] sm:$0xff]
    %v2153 = vld [vmem:[%s89 + $0x18] sm:$0xff]
    %v2154 = vld [vmem:[%s89 + $0x20] sm:$0xff]
    %v2155 = vld [vmem:[%s89 + $0x28] sm:$0xff]
    %v2156 = vld [vmem:[%s89 + $0x30] sm:$0x3f]
    %v2157 = vld [vmem:[%s89 + $0x38] sm:$0x3f]
    %v2159 = vsel %vm98, %v2146, 0
    %v2162 = vsel %vm98, %v2147, 0
    %v2165 = vsel %vm98, %v2148, 0
    %v2168 = vsel %vm98, %v2149, 0
    %v2171 = vsel %vm111, %v2156, 0
    %v2174 = vsel %vm111, %v2157, 0
    %2176 = vmatprep.subr.mxu0 %v2151
    %2177 = vmatpush1.msra.mxu0 %v2150
    %2178 = vmatprep.subr.mxu0 %v2153
    %2179 = vmatpush1.msra.mxu0 %v2152
    %2180 = vmatprep.subr.mxu0 %v2155
    %2181 = vmatpush1.msra.mxu0 %v2154
    %2182 = vmatprep.subr.mxu0 %v2174
    %2183 = vmatpush1.msra.mxu0 %v2171
    %2184 = vmatprep.subr.mxu0 0.0
    %2185 = vmatpush1.msra.mxu0 0.0
    %2186 = vmatprep.subr.mxu0 0.0
    %2187 = vmatpush1.msra.mxu0 0.0
    %2188 = vmatprep.subr.mxu0 0.0
    %2189 = vmatpush1.msra.mxu0 0.0
    %2190 = vmatprep.subr.mxu0 0.0
    %2191 = vmatpush1.msra.mxu0 0.0
    %2192 = vmatprep.subr.mxu0 0.0
    %2193 = vmatpush1.msra.mxu0 0.0
    %2194 = vmatprep.subr.mxu0 0.0
    %2195 = vmatpush1.msra.mxu0 0.0
    %2196 = vmatprep.subr.mxu0 0.0
    %2197 = vmatpush1.msra.mxu0 0.0
    %2198 = vmatprep.subr.mxu0 0.0
    %2199 = vmatpush1.msra.mxu0 0.0
    %2200 = vmatprep.subr.mxu0 0.0
    %2201 = vmatpush1.msra.mxu0 0.0
    %2202 = vmatprep.subr.mxu0 0.0
    %2203 = vmatpush1.msra.mxu0 0.0
    %2204 = vmatprep.subr.mxu0 0.0
    %2205 = vmatpush1.msra.mxu0 0.0
    %2206 = vmatprep.subr.mxu0 0.0
    %2207 = vmatpush1.msra.mxu0 0.0
    %2208 = vmatprep.subr.mxu0 0.0
    %2209 = vmatpush1.msra.mxu0 0.0
    %2210 = vmatprep.subr.mxu0 0.0
    %2211 = vmatpush1.msra.mxu0 0.0
    %2212 = vmatprep.subr.mxu0 0.0
    %2213 = vmatpush1.msra.mxu0 0.0
    %2214 = vmatprep.subr.mxu0 0.0
    %2215 = vmatpush1.msra.mxu0 0.0
    %2216 = vmatprep.subr.mxu0 0.0
    %2217 = vmatpush1.msra.mxu0 0.0
    %2218 = vmatprep.subr.mxu0 0.0
    %2219 = vmatpush1.msra.mxu0 0.0
    %2220 = vmatprep.subr.mxu0 0.0
    %2221 = vmatpush1.msra.mxu0 0.0
    %2222 = vmatprep.subr.mxu0 0.0
    %2223 = vmatpush1.msra.mxu0 0.0
    %2224 = vmatprep.subr.mxu0 0.0
    %2225 = vmatpush1.msra.mxu0 0.0
    %2226 = vmatprep.subr.mxu0 0.0
    %2227 = vmatpush1.msra.mxu0 0.0
    %2228 = vmatprep.subr.mxu0 0.0
    %2229 = vmatpush1.msra.mxu0 0.0
    %2230 = vmatprep.subr.mxu0 0.0
    %2231 = vmatpush1.msra.mxu0 0.0
    %2232 = vmatprep.subr.mxu0 0.0
    %2233 = vmatpush1.msra.mxu0 0.0
    %2234 = vmatprep.subr.mxu0 0.0
    %2235 = vmatpush1.msra.mxu0 0.0
    %2236 = vmatprep.subr.mxu0 0.0
    %2237 = vmatpush1.msra.mxu0 0.0
    %2238 = vmatprep.subr.mxu0 0.0
    %2239 = vmatpush1.msra.mxu0 0.0
    %2240 = vmatprep.mubr.f32.mxu0 0.0
    %2241 = vmatmul.mubr.f32.gmra.mrb[0].mxu0 %v2159
    %v2242 = vpop.f32.mrb[0].mxu0
    %v2243 = vadd.f32 0.0, %v2242
    %v2244 = vpop.f32.mrb[0].mxu0
    %v2245 = vadd.f32 0.0, %v2244
    %2246 = vmatprep.mubr.f32.mxu0 0.0
    %2247 = vmatmul.mubr.f32.gmra.mrb[0].mxu0 %v2162
    %v2248 = vpop.f32.mrb[0].mxu0
    %v2249 = vadd.f32 0.0, %v2248
    %v2250 = vpop.f32.mrb[0].mxu0
    %v2251 = vadd.f32 0.0, %v2250
    %2252 = vmatprep.mubr.f32.mxu0 0.0
    %2253 = vmatmul.mubr.f32.gmra.mrb[0].mxu0 %v2165
    %v2254 = vpop.f32.mrb[0].mxu0
    %v2255 = vadd.f32 0.0, %v2254
    %v2256 = vpop.f32.mrb[0].mxu0
    %v2257 = vadd.f32 0.0, %v2256
    %2258 = vmatprep.mubr.f32.mxu0 0.0
    %2259 = vmatmul.mubr.f32.gmra.mrb[0].mxu0 %v2168
    %v2260 = vpop.f32.mrb[0].mxu0
    %v2261 = vadd.f32 0.0, %v2260
    %v2262 = vpop.f32.mrb[0].mxu0
    %v2263 = vadd.f32 0.0, %v2262
    %2264 = vdwg.mxu0
    %v2266 = vsel %vm98, %v2134, 0
    %v2269 = vsel %vm98, %v2135, 0
    %v2272 = vsel %vm98, %v2136, 0
    %v2275 = vsel %vm98, %v2137, 0
    %v2278 = vsel %vm111, %v2144, 0
    %v2281 = vsel %vm111, %v2145, 0
    %2283 = vmatprep.subr.mxu0 %v2139
    %2284 = vmatpush1.msra.mxu0 %v2138
    %2285 = vmatprep.subr.mxu0 %v2141
    %2286 = vmatpush1.msra.mxu0 %v2140
    %2287 = vmatprep.subr.mxu0 %v2143
    %2288 = vmatpush1.msra.mxu0 %v2142
    %2289 = vmatprep.subr.mxu0 %v2281
    %2290 = vmatpush1.msra.mxu0 %v2278
    %2291 = vmatprep.subr.mxu0 0.0
    %2292 = vmatpush1.msra.mxu0 0.0
    %2293 = vmatprep.subr.mxu0 0.0
    %2294 = vmatpush1.msra.mxu0 0.0
    %2295 = vmatprep.subr.mxu0 0.0
    %2296 = vmatpush1.msra.mxu0 0.0
    %2297 = vmatprep.subr.mxu0 0.0
    %2298 = vmatpush1.msra.mxu0 0.0
    %2299 = vmatprep.subr.mxu0 0.0
    %2300 = vmatpush1.msra.mxu0 0.0
    %2301 = vmatprep.subr.mxu0 0.0
    %2302 = vmatpush1.msra.mxu0 0.0
    %2303 = vmatprep.subr.mxu0 0.0
    %2304 = vmatpush1.msra.mxu0 0.0
    %2305 = vmatprep.subr.mxu0 0.0
    %2306 = vmatpush1.msra.mxu0 0.0
    %2307 = vmatprep.subr.mxu0 0.0
    %2308 = vmatpush1.msra.mxu0 0.0
    %2309 = vmatprep.subr.mxu0 0.0
    %2310 = vmatpush1.msra.mxu0 0.0
    %2311 = vmatprep.subr.mxu0 0.0
    %2312 = vmatpush1.msra.mxu0 0.0
    %2313 = vmatprep.subr.mxu0 0.0
    %2314 = vmatpush1.msra.mxu0 0.0
    %2315 = vmatprep.subr.mxu0 0.0
    %2316 = vmatpush1.msra.mxu0 0.0
    %2317 = vmatprep.subr.mxu0 0.0
    %2318 = vmatpush1.msra.mxu0 0.0
    %2319 = vmatprep.subr.mxu0 0.0
    %2320 = vmatpush1.msra.mxu0 0.0
    %2321 = vmatprep.subr.mxu0 0.0
    %2322 = vmatpush1.msra.mxu0 0.0
    %2323 = vmatprep.subr.mxu0 0.0
    %2324 = vmatpush1.msra.mxu0 0.0
    %2325 = vmatprep.subr.mxu0 0.0
    %2326 = vmatpush1.msra.mxu0 0.0
    %2327 = vmatprep.subr.mxu0 0.0
    %2328 = vmatpush1.msra.mxu0 0.0
    %2329 = vmatprep.subr.mxu0 0.0
    %2330 = vmatpush1.msra.mxu0 0.0
    %2331 = vmatprep.subr.mxu0 0.0
    %2332 = vmatpush1.msra.mxu0 0.0
    %2333 = vmatprep.subr.mxu0 0.0
    %2334 = vmatpush1.msra.mxu0 0.0
    %2335 = vmatprep.subr.mxu0 0.0
    %2336 = vmatpush1.msra.mxu0 0.0
    %2337 = vmatprep.subr.mxu0 0.0
    %2338 = vmatpush1.msra.mxu0 0.0
    %2339 = vmatprep.subr.mxu0 0.0
    %2340 = vmatpush1.msra.mxu0 0.0
    %2341 = vmatprep.subr.mxu0 0.0
    %2342 = vmatpush1.msra.mxu0 0.0
    %2343 = vmatprep.subr.mxu0 0.0
    %2344 = vmatpush1.msra.mxu0 0.0
    %2345 = vmatprep.subr.mxu0 0.0
    %2346 = vmatpush1.msra.mxu0 0.0
    %2347 = vmatprep.mubr.f32.mxu0 0.0
    %2348 = vmatmul.mubr.f32.gmra.mrb[0].mxu0 %v2266
    %v2349 = vpop.f32.mrb[0].mxu0
    %v2350 = vadd.f32 %v2243, %v2349
    %v2351 = vpop.f32.mrb[0].mxu0
    %v2352 = vadd.f32 %v2245, %v2351
    %2353 = vmatprep.mubr.f32.mxu0 0.0
    %2354 = vmatmul.mubr.f32.gmra.mrb[0].mxu0 %v2269
    %v2355 = vpop.f32.mrb[0].mxu0
    %v2356 = vadd.f32 %v2249, %v2355
    %v2357 = vpop.f32.mrb[0].mxu0
    %v2358 = vadd.f32 %v2251, %v2357
    %2359 = vmatprep.mubr.f32.mxu0 0.0
    %2360 = vmatmul.mubr.f32.gmra.mrb[0].mxu0 %v2272
    %v2361 = vpop.f32.mrb[0].mxu0
    %v2362 = vadd.f32 %v2255, %v2361
    %v2363 = vpop.f32.mrb[0].mxu0
    %v2364 = vadd.f32 %v2257, %v2363
    %2365 = vmatprep.mubr.f32.mxu0 0.0
    %2366 = vmatmul.mubr.f32.gmra.mrb[0].mxu0 %v2275
    %v2367 = vpop.f32.mrb[0].mxu0
    %v2368 = vadd.f32 %v2261, %v2367
    %v2369 = vpop.f32.mrb[0].mxu0
    %v2370 = vadd.f32 %v2263, %v2369
    %2371 = vdwg.mxu0
    %v2372 = vld [vmem:[%s0 + $0x20] sm:$0xff]
    %v2373 = vld [vmem:[%s0 + $0x28] sm:$0xff]
    %v2374 = vld [vmem:[%s0 + $0x30] sm:$0xff]
    %v2375 = vld [vmem:[%s0 + $0x38] sm:$0xf]
    %v2376 = vld [vmem:[%s318] sm:$0xff]
    %v2377 = vld [vmem:[%s318 + $0x8] sm:$0xff]
    %v2378 = vld [vmem:[%s318 + $0x10] sm:$0xff]
    %v2379 = vld [vmem:[%s318 + $0x18] sm:$0xff]
    %v2380 = vld [vmem:[%s318 + $0x20] sm:$0xff]
    %v2381 = vld [vmem:[%s318 + $0x28] sm:$0xff]
    %v2382 = vld [vmem:[%s318 + $0x30] sm:$0x3f]
    %v2383 = vld [vmem:[%s318 + $0x38] sm:$0x3f]
    %v2385 = vsel %vm98, %v2372, 0
    %v2388 = vsel %vm98, %v2373, 0
    %v2391 = vsel %vm98, %v2374, 0
    %v2394 = vsel %vm98, %v2375, 0
    %v2397 = vsel %vm111, %v2382, 0
    %v2400 = vsel %vm111, %v2383, 0
    %2402 = vmatprep.subr.mxu0 %v2377
    %2403 = vmatpush1.msra.mxu0 %v2376
    %2404 = vmatprep.subr.mxu0 %v2379
    %2405 = vmatpush1.msra.mxu0 %v2378
    %2406 = vmatprep.subr.mxu0 %v2381
    %2407 = vmatpush1.msra.mxu0 %v2380
    %2408 = vmatprep.subr.mxu0 %v2400
    %2409 = vmatpush1.msra.mxu0 %v2397
    %2410 = vmatprep.subr.mxu0 0.0
    %2411 = vmatpush1.msra.mxu0 0.0
    %2412 = vmatprep.subr.mxu0 0.0
    %2413 = vmatpush1.msra.mxu0 0.0
    %2414 = vmatprep.subr.mxu0 0.0
    %2415 = vmatpush1.msra.mxu0 0.0
    %2416 = vmatprep.subr.mxu0 0.0
    %2417 = vmatpush1.msra.mxu0 0.0
    %2418 = vmatprep.subr.mxu0 0.0
    %2419 = vmatpush1.msra.mxu0 0.0
    %2420 = vmatprep.subr.mxu0 0.0
    %2421 = vmatpush1.msra.mxu0 0.0
    %2422 = vmatprep.subr.mxu0 0.0
    %2423 = vmatpush1.msra.mxu0 0.0
    %2424 = vmatprep.subr.mxu0 0.0
    %2425 = vmatpush1.msra.mxu0 0.0
    %2426 = vmatprep.subr.mxu0 0.0
    %2427 = vmatpush1.msra.mxu0 0.0
    %2428 = vmatprep.subr.mxu0 0.0
    %2429 = vmatpush1.msra.mxu0 0.0
    %2430 = vmatprep.subr.mxu0 0.0
    %2431 = vmatpush1.msra.mxu0 0.0
    %2432 = vmatprep.subr.mxu0 0.0
    %2433 = vmatpush1.msra.mxu0 0.0
    %2434 = vmatprep.subr.mxu0 0.0
    %2435 = vmatpush1.msra.mxu0 0.0
    %2436 = vmatprep.subr.mxu0 0.0
    %2437 = vmatpush1.msra.mxu0 0.0
    %2438 = vmatprep.subr.mxu0 0.0
    %2439 = vmatpush1.msra.mxu0 0.0
    %2440 = vmatprep.subr.mxu0 0.0
    %2441 = vmatpush1.msra.mxu0 0.0
    %2442 = vmatprep.subr.mxu0 0.0
    %2443 = vmatpush1.msra.mxu0 0.0
    %2444 = vmatprep.subr.mxu0 0.0
    %2445 = vmatpush1.msra.mxu0 0.0
    %2446 = vmatprep.subr.mxu0 0.0
    %2447 = vmatpush1.msra.mxu0 0.0
    %2448 = vmatprep.subr.mxu0 0.0
    %2449 = vmatpush1.msra.mxu0 0.0
    %2450 = vmatprep.subr.mxu0 0.0
    %2451 = vmatpush1.msra.mxu0 0.0
    %2452 = vmatprep.subr.mxu0 0.0
    %2453 = vmatpush1.msra.mxu0 0.0
    %2454 = vmatprep.subr.mxu0 0.0
    %2455 = vmatpush1.msra.mxu0 0.0
    %2456 = vmatprep.subr.mxu0 0.0
    %2457 = vmatpush1.msra.mxu0 0.0
    %2458 = vmatprep.subr.mxu0 0.0
    %2459 = vmatpush1.msra.mxu0 0.0
    %2460 = vmatprep.subr.mxu0 0.0
    %2461 = vmatpush1.msra.mxu0 0.0
    %2462 = vmatprep.subr.mxu0 0.0
    %2463 = vmatpush1.msra.mxu0 0.0
    %2464 = vmatprep.subr.mxu0 0.0
    %2465 = vmatpush1.msra.mxu0 0.0
    %2466 = vmatprep.mubr.f32.mxu0 0.0
    %2467 = vmatmul.mubr.f32.gmra.mrb[0].mxu0 %v2385
    %v2468 = vpop.f32.mrb[0].mxu0
    %v2469 = vadd.f32 0.0, %v2468
    %v2470 = vpop.f32.mrb[0].mxu0
    %v2471 = vadd.f32 0.0, %v2470
    %2472 = vmatprep.mubr.f32.mxu0 0.0
    %2473 = vmatmul.mubr.f32.gmra.mrb[0].mxu0 %v2388
    %v2474 = vpop.f32.mrb[0].mxu0
    %v2475 = vadd.f32 0.0, %v2474
    %v2476 = vpop.f32.mrb[0].mxu0
    %v2477 = vadd.f32 0.0, %v2476
    %2478 = vmatprep.mubr.f32.mxu0 0.0
    %2479 = vmatmul.mubr.f32.gmra.mrb[0].mxu0 %v2391
    %v2480 = vpop.f32.mrb[0].mxu0
    %v2481 = vadd.f32 0.0, %v2480
    %v2482 = vpop.f32.mrb[0].mxu0
    %v2483 = vadd.f32 0.0, %v2482
    %2484 = vmatprep.mubr.f32.mxu0 0.0
    %2485 = vmatmul.mubr.f32.gmra.mrb[0].mxu0 %v2394
    %v2486 = vpop.f32.mrb[0].mxu0
    %v2487 = vadd.f32 0.0, %v2486
    %v2488 = vpop.f32.mrb[0].mxu0
    %v2489 = vadd.f32 0.0, %v2488
    %2490 = vdwg.mxu0
    %v2491 = vadd.f32 %v2350, %v2469
    %v2492 = vadd.f32 %v2352, %v2471
    %v2493 = vadd.f32 %v2356, %v2475
    %v2494 = vadd.f32 %v2358, %v2477
    %v2495 = vadd.f32 %v2362, %v2481
    %v2496 = vadd.f32 %v2364, %v2483
    %v2497 = vadd.f32 %v2368, %v2487
    %v2498 = vadd.f32 %v2370, %v2489
    %v2499 = vld [vmem:[%s2] sm:$0x3]
    %v2501 = vlaneseq
    %v2502 = vshrl.u32 %v2501, 7
    %v2503 = vsub.s32 0, %v2502
    %v2504 = vrot.slane %v2499, %v2503
    %v2505 = vlaneseq
    %v2506 = vshrl.u32 %v2505, 7
    %v2507 = vsub.s32 1, %v2506
    %v2508 = vrot.slane %v2499, %v2507
    %v2511 = vadd.f32 %v2491, %v2504
    %v2512 = vadd.f32 %v2492, %v2508
    %v2513 = vadd.f32 %v2493, %v2504
    %v2514 = vadd.f32 %v2494, %v2508
    %v2515 = vadd.f32 %v2495, %v2504
    %v2516 = vadd.f32 %v2496, %v2508
    %v2517 = vadd.f32 %v2497, %v2504
    %v2518 = vadd.f32 %v2498, %v2508
    %v2519 = vmax.f32 %v2511, 0.0
    %v2520 = vmax.f32 %v2512, 0.0
    %v2521 = vmax.f32 %v2513, 0.0
    %v2522 = vmax.f32 %v2514, 0.0
    %v2523 = vmax.f32 %v2515, 0.0
    %v2524 = vmax.f32 %v2516, 0.0
    %v2525 = vmax.f32 %v2517, 0.0
    %v2526 = vmax.f32 %v2518, 0.0
    %v2529 = vrot.slane %v2519, 1
    %v2530 = vrot.slane %v2520, 1
    %v2533 = vmax.f32 %v2519, %v2529
    %v2534 = vmax.f32 %v2520, %v2530
    %v2537 = vcombine.low %v2533, %v2534
    %v2539 = vunpack.c.l.s4 1966171168
    %v2540 = vunpack.c.0.s8 %v2539
    %v2541 = vlaneseq
    %v2542 = vshrl.u32 %v2541, 7
    %v2543 = vsub.s32 %v2540, %v2542
    %v2544 = vrot.slane %v2537, %v2543
    %v2546 = vunpack.c.l.s4 1966171168
    %v2547 = vunpack.c.0.s8 %v2546
    %v2548 = vlaneseq
    %v2549 = vshrl.u32 %v2548, 7
    %v2550 = vsub.s32 %v2547, %v2549
    %v2551 = vrot.slane %v2544, %v2550
    %2553 = vst.msk [vmem:[#allocation4] ss:$8 sm:$0x3] %vm499, %v2551
    %2554 = vst.msk [vmem:[#allocation4] ss:$8 sm:$0x0] %vm499, %v2551
    %v2555 = vcombine.high %v2551, %v2551
    %2557 = vst.msk [vmem:[%s504] ss:$8 sm:$0x3] %vm499, %v2555
    %2558 = vst.msk [vmem:[%s504] ss:$8 sm:$0x0] %vm499, %v2555
    %v2559 = vcombine.high %v2533, %v2534
    %v2561 = vunpack.c.l.s4 1966171168
    %v2562 = vunpack.c.0.s8 %v2561
    %v2563 = vlaneseq
    %v2564 = vshrl.u32 %v2563, 7
    %v2565 = vsub.s32 %v2562, %v2564
    %v2566 = vrot.slane %v2559, %v2565
    %v2568 = vunpack.c.l.s4 1966171168
    %v2569 = vunpack.c.0.s8 %v2568
    %v2570 = vlaneseq
    %v2571 = vshrl.u32 %v2570, 7
    %v2572 = vsub.s32 %v2569, %v2571
    %v2573 = vrot.slane %v2566, %v2572
    %2575 = vst.msk [vmem:[%s523] ss:$8 sm:$0x3] %vm499, %v2573
    %2576 = vst.msk [vmem:[%s523] ss:$8 sm:$0x0] %vm499, %v2573
    %v2577 = vcombine.high %v2573, %v2573
    %2579 = vst.msk [vmem:[%s528] ss:$8 sm:$0x3] %vm499, %v2577
    %2580 = vst.msk [vmem:[%s528] ss:$8 sm:$0x0] %vm499, %v2577
    %v2583 = vrot.slane %v2521, 1
    %v2584 = vrot.slane %v2522, 1
    %v2587 = vmax.f32 %v2521, %v2583
    %v2588 = vmax.f32 %v2522, %v2584
    %v2591 = vcombine.low %v2587, %v2588
    %v2593 = vunpack.c.l.s4 1966171168
    %v2594 = vunpack.c.0.s8 %v2593
    %v2595 = vlaneseq
    %v2596 = vshrl.u32 %v2595, 7
    %v2597 = vsub.s32 %v2594, %v2596
    %v2598 = vrot.slane %v2591, %v2597
    %v2600 = vunpack.c.l.s4 1966171168
    %v2601 = vunpack.c.0.s8 %v2600
    %v2602 = vlaneseq
    %v2603 = vshrl.u32 %v2602, 7
    %v2604 = vsub.s32 %v2601, %v2603
    %v2605 = vrot.slane %v2598, %v2604
    %2607 = vst.msk [vmem:[%s557] ss:$8 sm:$0x3] %vm499, %v2605
    %2608 = vst.msk [vmem:[%s557] ss:$8 sm:$0x0] %vm499, %v2605
    %v2609 = vcombine.high %v2605, %v2605
    %2611 = vst.msk [vmem:[%s562] ss:$8 sm:$0x3] %vm499, %v2609
    %2612 = vst.msk [vmem:[%s562] ss:$8 sm:$0x0] %vm499, %v2609
    %v2613 = vcombine.high %v2587, %v2588
    %v2615 = vunpack.c.l.s4 1966171168
    %v2616 = vunpack.c.0.s8 %v2615
    %v2617 = vlaneseq
    %v2618 = vshrl.u32 %v2617, 7
    %v2619 = vsub.s32 %v2616, %v2618
    %v2620 = vrot.slane %v2613, %v2619
    %v2622 = vunpack.c.l.s4 1966171168
    %v2623 = vunpack.c.0.s8 %v2622
    %v2624 = vlaneseq
    %v2625 = vshrl.u32 %v2624, 7
    %v2626 = vsub.s32 %v2623, %v2625
    %v2627 = vrot.slane %v2620, %v2626
    %2629 = vst.msk [vmem:[%s581] ss:$8 sm:$0x3] %vm499, %v2627
    %2630 = vst.msk [vmem:[%s581] ss:$8 sm:$0x0] %vm499, %v2627
    %v2631 = vcombine.high %v2627, %v2627
    %2633 = vst.msk [vmem:[%s586] ss:$8 sm:$0x3] %vm499, %v2631
    %2634 = vst.msk [vmem:[%s586] ss:$8 sm:$0x0] %vm499, %v2631
    %v2637 = vrot.slane %v2523, 1
    %v2638 = vrot.slane %v2524, 1
    %v2641 = vmax.f32 %v2523, %v2637
    %v2642 = vmax.f32 %v2524, %v2638
    %v2645 = vcombine.low %v2641, %v2642
    %v2647 = vunpack.c.l.s4 1966171168
    %v2648 = vunpack.c.0.s8 %v2647
    %v2649 = vlaneseq
    %v2650 = vshrl.u32 %v2649, 7
    %v2651 = vsub.s32 %v2648, %v2650
    %v2652 = vrot.slane %v2645, %v2651
    %v2654 = vunpack.c.l.s4 1966171168
    %v2655 = vunpack.c.0.s8 %v2654
    %v2656 = vlaneseq
    %v2657 = vshrl.u32 %v2656, 7
    %v2658 = vsub.s32 %v2655, %v2657
    %v2659 = vrot.slane %v2652, %v2658
    %2661 = vst.msk [vmem:[%s615] ss:$8 sm:$0x3] %vm499, %v2659
    %2662 = vst.msk [vmem:[%s615] ss:$8 sm:$0x0] %vm499, %v2659
    %v2663 = vcombine.high %v2659, %v2659
    %2665 = vst.msk [vmem:[%s620] ss:$8 sm:$0x3] %vm499, %v2663
    %2666 = vst.msk [vmem:[%s620] ss:$8 sm:$0x0] %vm499, %v2663
    %v2667 = vcombine.high %v2641, %v2642
    %v2669 = vunpack.c.l.s4 1966171168
    %v2670 = vunpack.c.0.s8 %v2669
    %v2671 = vlaneseq
    %v2672 = vshrl.u32 %v2671, 7
    %v2673 = vsub.s32 %v2670, %v2672
    %v2674 = vrot.slane %v2667, %v2673
    %v2676 = vunpack.c.l.s4 1966171168
    %v2677 = vunpack.c.0.s8 %v2676
    %v2678 = vlaneseq
    %v2679 = vshrl.u32 %v2678, 7
    %v2680 = vsub.s32 %v2677, %v2679
    %v2681 = vrot.slane %v2674, %v2680
    %2683 = vst.msk [vmem:[%s639] ss:$8 sm:$0x3] %vm499, %v2681
    %2684 = vst.msk [vmem:[%s639] ss:$8 sm:$0x0] %vm499, %v2681
    %v2685 = vcombine.high %v2681, %v2681
    %2687 = vst.msk [vmem:[%s644] ss:$8 sm:$0x3] %vm499, %v2685
    %2688 = vst.msk [vmem:[%s644] ss:$8 sm:$0x0] %vm499, %v2685
    %v2691 = vrot.slane %v2525, 1
    %v2692 = vrot.slane %v2526, 1
    %v2695 = vmax.f32 %v2525, %v2691
    %v2696 = vmax.f32 %v2526, %v2692
    %v2699 = vcombine.low %v2695, %v2696
    %v2701 = vunpack.c.l.s4 1966171168
    %v2702 = vunpack.c.0.s8 %v2701
    %v2703 = vlaneseq
    %v2704 = vshrl.u32 %v2703, 7
    %v2705 = vsub.s32 %v2702, %v2704
    %v2706 = vrot.slane %v2699, %v2705
    %v2708 = vunpack.c.l.s4 1966171168
    %v2709 = vunpack.c.0.s8 %v2708
    %v2710 = vlaneseq
    %v2711 = vshrl.u32 %v2710, 7
    %v2712 = vsub.s32 %v2709, %v2711
    %v2713 = vrot.slane %v2706, %v2712
    %2715 = vst.msk [vmem:[%s673] ss:$8 sm:$0x3] %vm499, %v2713
    %2716 = vst.msk [vmem:[%s673] ss:$8 sm:$0x0] %vm499, %v2713
    %v2717 = vcombine.high %v2713, %v2713
    %2719 = vst.msk [vmem:[%s678] ss:$8 sm:$0x3] %vm499, %v2717
    %2720 = vst.msk [vmem:[%s678] ss:$8 sm:$0x0] %vm499, %v2717
    %v2721 = vld [vmem:[#allocation4] sm:$0xff]
    %v2722 = vld [vmem:[#allocation4 + $0x8] sm:$0xff]
    %v2723 = vld [vmem:[#allocation4 + $0x10] sm:$0x3f]
    %v2724 = vld [vmem:[#allocation4 + $0x18] sm:$0x3f]
    %2727 = vrot.lane.b32.xlu0 %v2721, 122
    %v2728 = vpop.permute.xlu0 %2727
    %2729 = vrot.lane.b32.xlu0 %v2723, 122
    %v2730 = vpop.permute.xlu0 %2729
    %v2733 = vmax.f32 %v2721, %v2728
    %v2734 = vmax.f32 %v2723, %v2730
    %2735 = vst.msk [vmem:[#allocation2 + $0xe] sm:$0xff] %vm695, %v2733
    %2736 = vst.msk [vmem:[#allocation2 + $0x16] sm:$0x3f] %vm697, %v2734
    %2739 = vrot.lane.b32.xlu0 %v2733, 122
    %v2740 = vpop.permute.xlu0 %2739
    %2741 = vrot.lane.b32.xlu0 %v2734, 122
    %v2742 = vpop.permute.xlu0 %2741
    %2745 = vst.msk [vmem:[#allocation2 + $0xe] sm:$0xff] %vm707, %v2740
    %2746 = vst.msk [vmem:[#allocation2 + $0x16] sm:$0x3f] %vm709, %v2742
    %2747 = vrot.lane.b32.xlu0 %v2733, 116
    %v2748 = vpop.permute.xlu0 %2747
    %2749 = vrot.lane.b32.xlu0 %v2734, 116
    %v2750 = vpop.permute.xlu0 %2749
    %2753 = vst.msk [vmem:[#allocation2 + $0xe] sm:$0xff] %vm717, %v2748
    %2754 = vst.msk [vmem:[#allocation2 + $0x16] sm:$0x3f] %vm719, %v2750
    %2755 = vrot.lane.b32.xlu0 %v2733, 110
    %v2756 = vpop.permute.xlu0 %2755
    %2757 = vrot.lane.b32.xlu0 %v2734, 110
    %v2758 = vpop.permute.xlu0 %2757
    %2761 = vst.msk [vmem:[#allocation2 + $0xe] sm:$0xff] %vm727, %v2756
    %2762 = vst.msk [vmem:[#allocation2 + $0x16] sm:$0x3f] %vm729, %v2758
    %2763 = vrot.lane.b32.xlu0 %v2733, 104
    %v2764 = vpop.permute.xlu0 %2763
    %2765 = vrot.lane.b32.xlu0 %v2734, 104
    %v2766 = vpop.permute.xlu0 %2765
    %2769 = vst.msk [vmem:[#allocation2 + $0xe] sm:$0xff] %vm737, %v2764
    %2770 = vst.msk [vmem:[#allocation2 + $0x16] sm:$0x3f] %vm739, %v2766
    %2771 = vrot.lane.b32.xlu0 %v2733, 98
    %v2772 = vpop.permute.xlu0 %2771
    %2773 = vrot.lane.b32.xlu0 %v2734, 98
    %v2774 = vpop.permute.xlu0 %2773
    %2777 = vst.msk [vmem:[#allocation2 + $0xe] sm:$0xff] %vm747, %v2772
    %2778 = vst.msk [vmem:[#allocation2 + $0x16] sm:$0x3f] %vm749, %v2774
    %2779 = vrot.lane.b32.xlu0 %v2733, 92
    %v2780 = vpop.permute.xlu0 %2779
    %2781 = vrot.lane.b32.xlu0 %v2734, 92
    %v2782 = vpop.permute.xlu0 %2781
    %2785 = vst.msk [vmem:[#allocation2 + $0xe] sm:$0xff] %vm757, %v2780
    %2786 = vst.msk [vmem:[#allocation2 + $0x16] sm:$0x3f] %vm759, %v2782
    %2787 = vrot.lane.b32.xlu0 %v2733, 86
    %v2788 = vpop.permute.xlu0 %2787
    %2789 = vrot.lane.b32.xlu0 %v2734, 86
    %v2790 = vpop.permute.xlu0 %2789
    %2793 = vst.msk [vmem:[#allocation2 + $0xe] sm:$0xff] %vm767, %v2788
    %2794 = vst.msk [vmem:[#allocation2 + $0x16] sm:$0x3f] %vm769, %v2790
    %2795 = vrot.lane.b32.xlu0 %v2733, 80
    %v2796 = vpop.permute.xlu0 %2795
    %2797 = vrot.lane.b32.xlu0 %v2734, 80
    %v2798 = vpop.permute.xlu0 %2797
    %2801 = vst.msk [vmem:[#allocation2 + $0xe] sm:$0xff] %vm777, %v2796
    %2802 = vst.msk [vmem:[#allocation2 + $0x16] sm:$0x3f] %vm779, %v2798
    %2803 = vrot.lane.b32.xlu0 %v2733, 74
    %v2804 = vpop.permute.xlu0 %2803
    %2805 = vrot.lane.b32.xlu0 %v2734, 74
    %v2806 = vpop.permute.xlu0 %2805
    %2809 = vst.msk [vmem:[#allocation2 + $0xe] sm:$0xff] %vm787, %v2804
    %2810 = vst.msk [vmem:[#allocation2 + $0x16] sm:$0x3f] %vm789, %v2806
    %2813 = vrot.lane.b32.xlu0 %v2722, 122
    %v2814 = vpop.permute.xlu0 %2813
    %2815 = vrot.lane.b32.xlu0 %v2724, 122
    %v2816 = vpop.permute.xlu0 %2815
    %v2817 = vsel %vm797, %v2728, %v2814
    %v2818 = vsel %vm797, %v2730, %v2816
    %v2821 = vmax.f32 %v2721, %v2817
    %v2822 = vmax.f32 %v2723, %v2818
    %2825 = vrot.lane.b32.xlu0 %v2821, 68
    %v2826 = vpop.permute.xlu0 %2825
    %2827 = vrot.lane.b32.xlu0 %v2822, 68
    %v2828 = vpop.permute.xlu0 %2827
    %2831 = vst.msk [vmem:[#allocation2 + $0xe] sm:$0xff] %vm812, %v2826
    %2832 = vst.msk [vmem:[#allocation2 + $0x16] sm:$0x3f] %vm814, %v2828
    %v2835 = vmax.f32 %v2722, %v2814
    %v2836 = vmax.f32 %v2724, %v2816
    %2839 = vrot.lane.b32.xlu0 %v2835, 62
    %v2840 = vpop.permute.xlu0 %2839
    %2841 = vrot.lane.b32.xlu0 %v2836, 62
    %v2842 = vpop.permute.xlu0 %2841
    %2845 = vst.msk [vmem:[#allocation2 + $0xe] sm:$0xff] %vm828, %v2840
    %2846 = vst.msk [vmem:[#allocation2 + $0x16] sm:$0x3f] %vm830, %v2842
    %2847 = vrot.lane.b32.xlu0 %v2835, 56
    %v2848 = vpop.permute.xlu0 %2847
    %2849 = vrot.lane.b32.xlu0 %v2836, 56
    %v2850 = vpop.permute.xlu0 %2849
    %2853 = vst.msk [vmem:[#allocation2 + $0xe] sm:$0xff] %vm838, %v2848
    %2854 = vst.msk [vmem:[#allocation2 + $0x16] sm:$0x3f] %vm840, %v2850
    %2855 = vrot.lane.b32.xlu0 %v2835, 50
    %v2856 = vpop.permute.xlu0 %2855
    %2857 = vrot.lane.b32.xlu0 %v2836, 50
    %v2858 = vpop.permute.xlu0 %2857
    %2861 = vst.msk [vmem:[#allocation2 + $0xe] sm:$0xff] %vm848, %v2856
    %2862 = vst.msk [vmem:[#allocation2 + $0x16] sm:$0x3f] %vm850, %v2858
    %v2863 = vld [vmem:[#allocation2 + $0xe] sm:$0xff]
    %v2864 = vld [vmem:[#allocation2 + $0x16] sm:$0xf]
    %v2865 = vld [vmem:[%s3] sm:$0xff]
    %v2866 = vld [vmem:[%s3 + $0x8] sm:$0xff]
    %v2867 = vld [vmem:[%s3 + $0x10] sm:$0xff]
    %v2868 = vld [vmem:[%s3 + $0x18] sm:$0xff]
    %v2869 = vld [vmem:[%s3 + $0x20] sm:$0xff]
    %v2870 = vld [vmem:[%s3 + $0x28] sm:$0xff]
    %v2871 = vld [vmem:[%s3 + $0x30] sm:$0xff]
    %v2872 = vld [vmem:[%s3 + $0x38] sm:$0xff]
    %v2873 = vld [vmem:[%s3 + $0x40] sm:$0xff]
    %v2874 = vld [vmem:[%s3 + $0x48] sm:$0xff]
    %v2875 = vld [vmem:[%s3 + $0x50] sm:$0xff]
    %v2876 = vld [vmem:[%s3 + $0x58] sm:$0xff]
    %v2877 = vld [vmem:[%s3 + $0x60] sm:$0xff]
    %v2878 = vld [vmem:[%s3 + $0x68] sm:$0xff]
    %v2879 = vld [vmem:[%s3 + $0x70] sm:$0xff]
    %v2880 = vld [vmem:[%s3 + $0x78] sm:$0xff]
    %v2881 = vld [vmem:[%s3 + $0x80] sm:$0xff]
    %v2882 = vld [vmem:[%s3 + $0x88] sm:$0xff]
    %v2883 = vld [vmem:[%s3 + $0x90] sm:$0xff]
    %v2884 = vld [vmem:[%s3 + $0x98] sm:$0xff]
    %v2885 = vld [vmem:[%s3 + $0xa0] sm:$0xf]
    %v2886 = vld [vmem:[%s3 + $0xa8] sm:$0xf]
    %v2887 = vld [vmem:[#allocation2 + $0xf] sm:$0xff]
    %v2888 = vld [vmem:[#allocation2 + $0x17] sm:$0xf]
    %v2889 = vld [vmem:[%s878] sm:$0xff]
    %v2890 = vld [vmem:[%s878 + $0x8] sm:$0xff]
    %v2891 = vld [vmem:[%s878 + $0x10] sm:$0xff]
    %v2892 = vld [vmem:[%s878 + $0x18] sm:$0xff]
    %v2893 = vld [vmem:[%s878 + $0x20] sm:$0xff]
    %v2894 = vld [vmem:[%s878 + $0x28] sm:$0xff]
    %v2895 = vld [vmem:[%s878 + $0x30] sm:$0xff]
    %v2896 = vld [vmem:[%s878 + $0x38] sm:$0xff]
    %v2897 = vld [vmem:[%s878 + $0x40] sm:$0xff]
    %v2898 = vld [vmem:[%s878 + $0x48] sm:$0xff]
    %v2899 = vld [vmem:[%s878 + $0x50] sm:$0xff]
    %v2900 = vld [vmem:[%s878 + $0x58] sm:$0xff]
    %v2901 = vld [vmem:[%s878 + $0x60] sm:$0xff]
    %v2902 = vld [vmem:[%s878 + $0x68] sm:$0xff]
    %v2903 = vld [vmem:[%s878 + $0x70] sm:$0xff]
    %v2904 = vld [vmem:[%s878 + $0x78] sm:$0xff]
    %v2905 = vld [vmem:[%s878 + $0x80] sm:$0xff]
    %v2906 = vld [vmem:[%s878 + $0x88] sm:$0xff]
    %v2907 = vld [vmem:[%s878 + $0x90] sm:$0xff]
    %v2908 = vld [vmem:[%s878 + $0x98] sm:$0xff]
    %v2909 = vld [vmem:[%s878 + $0xa0] sm:$0xf]
    %v2910 = vld [vmem:[%s878 + $0xa8] sm:$0xf]
    %v2912 = vsel %vm901, %v2887, 0
    %v2915 = vsel %vm901, %v2888, 0
    %v2918 = vsel %vm908, %v2909, 0
    %v2921 = vsel %vm908, %v2910, 0
    %2923 = vmatprep.subr.mxu0 %v2890
    %2924 = vmatpush1.msra.mxu0 %v2889
    %2925 = vmatprep.subr.mxu0 %v2892
    %2926 = vmatpush1.msra.mxu0 %v2891
    %2927 = vmatprep.subr.mxu0 %v2894
    %2928 = vmatpush1.msra.mxu0 %v2893
    %2929 = vmatprep.subr.mxu0 %v2896
    %2930 = vmatpush1.msra.mxu0 %v2895
    %2931 = vmatprep.subr.mxu0 %v2898
    %2932 = vmatpush1.msra.mxu0 %v2897
    %2933 = vmatprep.subr.mxu0 %v2900
    %2934 = vmatpush1.msra.mxu0 %v2899
    %2935 = vmatprep.subr.mxu0 %v2902
    %2936 = vmatpush1.msra.mxu0 %v2901
    %2937 = vmatprep.subr.mxu0 %v2904
    %2938 = vmatpush1.msra.mxu0 %v2903
    %2939 = vmatprep.subr.mxu0 %v2906
    %2940 = vmatpush1.msra.mxu0 %v2905
    %2941 = vmatprep.subr.mxu0 %v2908
    %2942 = vmatpush1.msra.mxu0 %v2907
    %2943 = vmatprep.subr.mxu0 %v2921
    %2944 = vmatpush1.msra.mxu0 %v2918
    %2945 = vmatprep.subr.mxu0 0.0
    %2946 = vmatpush1.msra.mxu0 0.0
    %2947 = vmatprep.subr.mxu0 0.0
    %2948 = vmatpush1.msra.mxu0 0.0
    %2949 = vmatprep.subr.mxu0 0.0
    %2950 = vmatpush1.msra.mxu0 0.0
    %2951 = vmatprep.subr.mxu0 0.0
    %2952 = vmatpush1.msra.mxu0 0.0
    %2953 = vmatprep.subr.mxu0 0.0
    %2954 = vmatpush1.msra.mxu0 0.0
    %2955 = vmatprep.subr.mxu0 0.0
    %2956 = vmatpush1.msra.mxu0 0.0
    %2957 = vmatprep.subr.mxu0 0.0
    %2958 = vmatpush1.msra.mxu0 0.0
    %2959 = vmatprep.subr.mxu0 0.0
    %2960 = vmatpush1.msra.mxu0 0.0
    %2961 = vmatprep.subr.mxu0 0.0
    %2962 = vmatpush1.msra.mxu0 0.0
    %2963 = vmatprep.subr.mxu0 0.0
    %2964 = vmatpush1.msra.mxu0 0.0
    %2965 = vmatprep.subr.mxu0 0.0
    %2966 = vmatpush1.msra.mxu0 0.0
    %2967 = vmatprep.subr.mxu0 0.0
    %2968 = vmatpush1.msra.mxu0 0.0
    %2969 = vmatprep.subr.mxu0 0.0
    %2970 = vmatpush1.msra.mxu0 0.0
    %2971 = vmatprep.subr.mxu0 0.0
    %2972 = vmatpush1.msra.mxu0 0.0
    %2973 = vmatprep.subr.mxu0 0.0
    %2974 = vmatpush1.msra.mxu0 0.0
    %2975 = vmatprep.subr.mxu0 0.0
    %2976 = vmatpush1.msra.mxu0 0.0
    %2977 = vmatprep.subr.mxu0 0.0
    %2978 = vmatpush1.msra.mxu0 0.0
    %2979 = vmatprep.subr.mxu0 0.0
    %2980 = vmatpush1.msra.mxu0 0.0
    %2981 = vmatprep.subr.mxu0 0.0
    %2982 = vmatpush1.msra.mxu0 0.0
    %2983 = vmatprep.subr.mxu0 0.0
    %2984 = vmatpush1.msra.mxu0 0.0
    %2985 = vmatprep.subr.mxu0 0.0
    %2986 = vmatpush1.msra.mxu0 0.0
    %2987 = vmatprep.mubr.f32.mxu0 0.0
    %2988 = vmatmul.mubr.f32.gmra.mrb[0].mxu0 %v2912
    %v2989 = vpop.f32.mrb[0].mxu0
    %v2990 = vadd.f32 0.0, %v2989
    %v2991 = vpop.f32.mrb[0].mxu0
    %v2992 = vadd.f32 0.0, %v2991
    %2993 = vmatprep.mubr.f32.mxu0 0.0
    %2994 = vmatmul.mubr.f32.gmra.mrb[0].mxu0 %v2915
    %v2995 = vpop.f32.mrb[0].mxu0
    %v2996 = vadd.f32 0.0, %v2995
    %v2997 = vpop.f32.mrb[0].mxu0
    %v2998 = vadd.f32 0.0, %v2997
    %2999 = vdwg.mxu0
    %v3001 = vsel %vm901, %v2863, 0
    %v3004 = vsel %vm901, %v2864, 0
    %v3007 = vsel %vm908, %v2885, 0
    %v3010 = vsel %vm908, %v2886, 0
    %3012 = vmatprep.subr.mxu0 %v2866
    %3013 = vmatpush1.msra.mxu0 %v2865
    %3014 = vmatprep.subr.mxu0 %v2868
    %3015 = vmatpush1.msra.mxu0 %v2867
    %3016 = vmatprep.subr.mxu0 %v2870
    %3017 = vmatpush1.msra.mxu0 %v2869
    %3018 = vmatprep.subr.mxu0 %v2872
    %3019 = vmatpush1.msra.mxu0 %v2871
    %3020 = vmatprep.subr.mxu0 %v2874
    %3021 = vmatpush1.msra.mxu0 %v2873
    %3022 = vmatprep.subr.mxu0 %v2876
    %3023 = vmatpush1.msra.mxu0 %v2875
    %3024 = vmatprep.subr.mxu0 %v2878
    %3025 = vmatpush1.msra.mxu0 %v2877
    %3026 = vmatprep.subr.mxu0 %v2880
    %3027 = vmatpush1.msra.mxu0 %v2879
    %3028 = vmatprep.subr.mxu0 %v2882
    %3029 = vmatpush1.msra.mxu0 %v2881
    %3030 = vmatprep.subr.mxu0 %v2884
    %3031 = vmatpush1.msra.mxu0 %v2883
    %3032 = vmatprep.subr.mxu0 %v3010
    %3033 = vmatpush1.msra.mxu0 %v3007
    %3034 = vmatprep.subr.mxu0 0.0
    %3035 = vmatpush1.msra.mxu0 0.0
    %3036 = vmatprep.subr.mxu0 0.0
    %3037 = vmatpush1.msra.mxu0 0.0
    %3038 = vmatprep.subr.mxu0 0.0
    %3039 = vmatpush1.msra.mxu0 0.0
    %3040 = vmatprep.subr.mxu0 0.0
    %3041 = vmatpush1.msra.mxu0 0.0
    %3042 = vmatprep.subr.mxu0 0.0
    %3043 = vmatpush1.msra.mxu0 0.0
    %3044 = vmatprep.subr.mxu0 0.0
    %3045 = vmatpush1.msra.mxu0 0.0
    %3046 = vmatprep.subr.mxu0 0.0
    %3047 = vmatpush1.msra.mxu0 0.0
    %3048 = vmatprep.subr.mxu0 0.0
    %3049 = vmatpush1.msra.mxu0 0.0
    %3050 = vmatprep.subr.mxu0 0.0
    %3051 = vmatpush1.msra.mxu0 0.0
    %3052 = vmatprep.subr.mxu0 0.0
    %3053 = vmatpush1.msra.mxu0 0.0
    %3054 = vmatprep.subr.mxu0 0.0
    %3055 = vmatpush1.msra.mxu0 0.0
    %3056 = vmatprep.subr.mxu0 0.0
    %3057 = vmatpush1.msra.mxu0 0.0
    %3058 = vmatprep.subr.mxu0 0.0
    %3059 = vmatpush1.msra.mxu0 0.0
    %3060 = vmatprep.subr.mxu0 0.0
    %3061 = vmatpush1.msra.mxu0 0.0
    %3062 = vmatprep.subr.mxu0 0.0
    %3063 = vmatpush1.msra.mxu0 0.0
    %3064 = vmatprep.subr.mxu0 0.0
    %3065 = vmatpush1.msra.mxu0 0.0
    %3066 = vmatprep.subr.mxu0 0.0
    %3067 = vmatpush1.msra.mxu0 0.0
    %3068 = vmatprep.subr.mxu0 0.0
    %3069 = vmatpush1.msra.mxu0 0.0
    %3070 = vmatprep.subr.mxu0 0.0
    %3071 = vmatpush1.msra.mxu0 0.0
    %3072 = vmatprep.subr.mxu0 0.0
    %3073 = vmatpush1.msra.mxu0 0.0
    %3074 = vmatprep.subr.mxu0 0.0
    %3075 = vmatpush1.msra.mxu0 0.0
    %3076 = vmatprep.mubr.f32.mxu0 0.0
    %3077 = vmatmul.mubr.f32.gmra.mrb[0].mxu0 %v3001
    %v3078 = vpop.f32.mrb[0].mxu0
    %v3079 = vadd.f32 %v2990, %v3078
    %v3080 = vpop.f32.mrb[0].mxu0
    %v3081 = vadd.f32 %v2992, %v3080
    %3082 = vmatprep.mubr.f32.mxu0 0.0
    %3083 = vmatmul.mubr.f32.gmra.mrb[0].mxu0 %v3004
    %v3084 = vpop.f32.mrb[0].mxu0
    %v3085 = vadd.f32 %v2996, %v3084
    %v3086 = vpop.f32.mrb[0].mxu0
    %v3087 = vadd.f32 %v2998, %v3086
    %3088 = vdwg.mxu0
    %v3089 = vld [vmem:[#allocation2 + $0x10] sm:$0xff]
    %v3090 = vld [vmem:[#allocation2 + $0x18] sm:$0xf]
    %v3091 = vld [vmem:[%s1083] sm:$0xff]
    %v3092 = vld [vmem:[%s1083 + $0x8] sm:$0xff]
    %v3093 = vld [vmem:[%s1083 + $0x10] sm:$0xff]
    %v3094 = vld [vmem:[%s1083 + $0x18] sm:$0xff]
    %v3095 = vld [vmem:[%s1083 + $0x20] sm:$0xff]
    %v3096 = vld [vmem:[%s1083 + $0x28] sm:$0xff]
    %v3097 = vld [vmem:[%s1083 + $0x30] sm:$0xff]
    %v3098 = vld [vmem:[%s1083 + $0x38] sm:$0xff]
    %v3099 = vld [vmem:[%s1083 + $0x40] sm:$0xff]
    %v3100 = vld [vmem:[%s1083 + $0x48] sm:$0xff]
    %v3101 = vld [vmem:[%s1083 + $0x50] sm:$0xff]
    %v3102 = vld [vmem:[%s1083 + $0x58] sm:$0xff]
    %v3103 = vld [vmem:[%s1083 + $0x60] sm:$0xff]
    %v3104 = vld [vmem:[%s1083 + $0x68] sm:$0xff]
    %v3105 = vld [vmem:[%s1083 + $0x70] sm:$0xff]
    %v3106 = vld [vmem:[%s1083 + $0x78] sm:$0xff]
    %v3107 = vld [vmem:[%s1083 + $0x80] sm:$0xff]
    %v3108 = vld [vmem:[%s1083 + $0x88] sm:$0xff]
    %v3109 = vld [vmem:[%s1083 + $0x90] sm:$0xff]
    %v3110 = vld [vmem:[%s1083 + $0x98] sm:$0xff]
    %v3111 = vld [vmem:[%s1083 + $0xa0] sm:$0xf]
    %v3112 = vld [vmem:[%s1083 + $0xa8] sm:$0xf]
    %v3114 = vsel %vm901, %v3089, 0
    %v3117 = vsel %vm901, %v3090, 0
    %v3120 = vsel %vm908, %v3111, 0
    %v3123 = vsel %vm908, %v3112, 0
    %3125 = vmatprep.subr.mxu0 %v3092
    %3126 = vmatpush1.msra.mxu0 %v3091
    %3127 = vmatprep.subr.mxu0 %v3094
    %3128 = vmatpush1.msra.mxu0 %v3093
    %3129 = vmatprep.subr.mxu0 %v3096
    %3130 = vmatpush1.msra.mxu0 %v3095
    %3131 = vmatprep.subr.mxu0 %v3098
    %3132 = vmatpush1.msra.mxu0 %v3097
    %3133 = vmatprep.subr.mxu0 %v3100
    %3134 = vmatpush1.msra.mxu0 %v3099
    %3135 = vmatprep.subr.mxu0 %v3102
    %3136 = vmatpush1.msra.mxu0 %v3101
    %3137 = vmatprep.subr.mxu0 %v3104
    %3138 = vmatpush1.msra.mxu0 %v3103
    %3139 = vmatprep.subr.mxu0 %v3106
    %3140 = vmatpush1.msra.mxu0 %v3105
    %3141 = vmatprep.subr.mxu0 %v3108
    %3142 = vmatpush1.msra.mxu0 %v3107
    %3143 = vmatprep.subr.mxu0 %v3110
    %3144 = vmatpush1.msra.mxu0 %v3109
    %3145 = vmatprep.subr.mxu0 %v3123
    %3146 = vmatpush1.msra.mxu0 %v3120
    %3147 = vmatprep.subr.mxu0 0.0
    %3148 = vmatpush1.msra.mxu0 0.0
    %3149 = vmatprep.subr.mxu0 0.0
    %3150 = vmatpush1.msra.mxu0 0.0
    %3151 = vmatprep.subr.mxu0 0.0
    %3152 = vmatpush1.msra.mxu0 0.0
    %3153 = vmatprep.subr.mxu0 0.0
    %3154 = vmatpush1.msra.mxu0 0.0
    %3155 = vmatprep.subr.mxu0 0.0
    %3156 = vmatpush1.msra.mxu0 0.0
    %3157 = vmatprep.subr.mxu0 0.0
    %3158 = vmatpush1.msra.mxu0 0.0
    %3159 = vmatprep.subr.mxu0 0.0
    %3160 = vmatpush1.msra.mxu0 0.0
    %3161 = vmatprep.subr.mxu0 0.0
    %3162 = vmatpush1.msra.mxu0 0.0
    %3163 = vmatprep.subr.mxu0 0.0
    %3164 = vmatpush1.msra.mxu0 0.0
    %3165 = vmatprep.subr.mxu0 0.0
    %3166 = vmatpush1.msra.mxu0 0.0
    %3167 = vmatprep.subr.mxu0 0.0
    %3168 = vmatpush1.msra.mxu0 0.0
    %3169 = vmatprep.subr.mxu0 0.0
    %3170 = vmatpush1.msra.mxu0 0.0
    %3171 = vmatprep.subr.mxu0 0.0
    %3172 = vmatpush1.msra.mxu0 0.0
    %3173 = vmatprep.subr.mxu0 0.0
    %3174 = vmatpush1.msra.mxu0 0.0
    %3175 = vmatprep.subr.mxu0 0.0
    %3176 = vmatpush1.msra.mxu0 0.0
    %3177 = vmatprep.subr.mxu0 0.0
    %3178 = vmatpush1.msra.mxu0 0.0
    %3179 = vmatprep.subr.mxu0 0.0
    %3180 = vmatpush1.msra.mxu0 0.0
    %3181 = vmatprep.subr.mxu0 0.0
    %3182 = vmatpush1.msra.mxu0 0.0
    %3183 = vmatprep.subr.mxu0 0.0
    %3184 = vmatpush1.msra.mxu0 0.0
    %3185 = vmatprep.subr.mxu0 0.0
    %3186 = vmatpush1.msra.mxu0 0.0
    %3187 = vmatprep.subr.mxu0 0.0
    %3188 = vmatpush1.msra.mxu0 0.0
    %3189 = vmatprep.mubr.f32.mxu0 0.0
    %3190 = vmatmul.mubr.f32.gmra.mrb[0].mxu0 %v3114
    %v3191 = vpop.f32.mrb[0].mxu0
    %v3192 = vadd.f32 0.0, %v3191
    %v3193 = vpop.f32.mrb[0].mxu0
    %v3194 = vadd.f32 0.0, %v3193
    %3195 = vmatprep.mubr.f32.mxu0 0.0
    %3196 = vmatmul.mubr.f32.gmra.mrb[0].mxu0 %v3117
    %v3197 = vpop.f32.mrb[0].mxu0
    %v3198 = vadd.f32 0.0, %v3197
    %v3199 = vpop.f32.mrb[0].mxu0
    %v3200 = vadd.f32 0.0, %v3199
    %3201 = vdwg.mxu0
    %v3202 = vadd.f32 %v3079, %v3192
    %v3203 = vadd.f32 %v3081, %v3194
    %v3204 = vadd.f32 %v3085, %v3198
    %v3205 = vadd.f32 %v3087, %v3200
    %v3206 = vld [vmem:[%s4] sm:$0x3]
    %v3208 = vlaneseq
    %v3209 = vshrl.u32 %v3208, 7
    %v3210 = vsub.s32 0, %v3209
    %v3211 = vrot.slane %v3206, %v3210
    %v3212 = vlaneseq
    %v3213 = vshrl.u32 %v3212, 7
    %v3214 = vsub.s32 1, %v3213
    %v3215 = vrot.slane %v3206, %v3214
    %v3218 = vadd.f32 %v3202, %v3211
    %v3219 = vadd.f32 %v3203, %v3215
    %v3220 = vadd.f32 %v3204, %v3211
    %v3221 = vadd.f32 %v3205, %v3215
    %v3222 = vmax.f32 %v3218, 0.0
    %v3223 = vmax.f32 %v3219, 0.0
    %v3224 = vmax.f32 %v3220, 0.0
    %v3225 = vmax.f32 %v3221, 0.0
    %v3228 = vrot.slane %v3222, 1
    %v3229 = vrot.slane %v3223, 1
    %v3232 = vmax.f32 %v3222, %v3228
    %v3233 = vmax.f32 %v3223, %v3229
    %v3236 = vcombine.low %v3232, %v3233
    %v3238 = vunpack.c.l.s4 1966171168
    %v3239 = vunpack.c.0.s8 %v3238
    %v3240 = vlaneseq
    %v3241 = vshrl.u32 %v3240, 7
    %v3242 = vsub.s32 %v3239, %v3241
    %v3243 = vrot.slane %v3236, %v3242
    %v3245 = vunpack.c.l.s4 1966171168
    %v3246 = vunpack.c.0.s8 %v3245
    %v3247 = vlaneseq
    %v3248 = vshrl.u32 %v3247, 7
    %v3249 = vsub.s32 %v3246, %v3248
    %v3250 = vrot.slane %v3243, %v3249
    %3252 = vst.msk [vmem:[#allocation5] ss:$8 sm:$0x3] %vm1246, %v3250
    %3253 = vst.msk [vmem:[#allocation5] ss:$8 sm:$0x0] %vm1246, %v3250
    %v3254 = vcombine.high %v3250, %v3250
    %3256 = vst.msk [vmem:[%s1251] ss:$8 sm:$0x3] %vm1246, %v3254
    %3257 = vst.msk [vmem:[%s1251] ss:$8 sm:$0x0] %vm1246, %v3254
    %v3258 = vcombine.high %v3232, %v3233
    %v3260 = vunpack.c.l.s4 1966171168
    %v3261 = vunpack.c.0.s8 %v3260
    %v3262 = vlaneseq
    %v3263 = vshrl.u32 %v3262, 7
    %v3264 = vsub.s32 %v3261, %v3263
    %v3265 = vrot.slane %v3258, %v3264
    %v3267 = vunpack.c.l.s4 1966171168
    %v3268 = vunpack.c.0.s8 %v3267
    %v3269 = vlaneseq
    %v3270 = vshrl.u32 %v3269, 7
    %v3271 = vsub.s32 %v3268, %v3270
    %v3272 = vrot.slane %v3265, %v3271
    %3274 = vst.msk [vmem:[%s1270] ss:$8 sm:$0x3] %vm1246, %v3272
    %3275 = vst.msk [vmem:[%s1270] ss:$8 sm:$0x0] %vm1246, %v3272
    %v3276 = vcombine.high %v3272, %v3272
    %3278 = vst.msk [vmem:[%s1275] ss:$8 sm:$0x3] %vm1246, %v3276
    %3279 = vst.msk [vmem:[%s1275] ss:$8 sm:$0x0] %vm1246, %v3276
    %v3282 = vrot.slane %v3224, 1
    %v3283 = vrot.slane %v3225, 1
    %v3286 = vmax.f32 %v3224, %v3282
    %v3287 = vmax.f32 %v3225, %v3283
    %v3290 = vcombine.low %v3286, %v3287
    %v3292 = vunpack.c.l.s4 1966171168
    %v3293 = vunpack.c.0.s8 %v3292
    %v3294 = vlaneseq
    %v3295 = vshrl.u32 %v3294, 7
    %v3296 = vsub.s32 %v3293, %v3295
    %v3297 = vrot.slane %v3290, %v3296
    %v3299 = vunpack.c.l.s4 1966171168
    %v3300 = vunpack.c.0.s8 %v3299
    %v3301 = vlaneseq
    %v3302 = vshrl.u32 %v3301, 7
    %v3303 = vsub.s32 %v3300, %v3302
    %v3304 = vrot.slane %v3297, %v3303
    %3306 = vst.msk [vmem:[%s1304] ss:$8 sm:$0x3] %vm1246, %v3304
    %3307 = vst.msk [vmem:[%s1304] ss:$8 sm:$0x0] %vm1246, %v3304
    %v3308 = vcombine.high %v3304, %v3304
    %3310 = vst.msk [vmem:[%s1309] ss:$8 sm:$0x3] %vm1246, %v3308
    %3311 = vst.msk [vmem:[%s1309] ss:$8 sm:$0x0] %vm1246, %v3308
    %v3312 = vld [vmem:[#allocation5] sm:$0x3f]
    %v3313 = vld [vmem:[#allocation5 + $0x8] sm:$0x3f]
    %3315 = vrot.lane.b32.xlu0 %v3312, 112
    %v3316 = vpop.permute.xlu0 %3315
    %v3318 = vmax.f32 %v3312, %v3316
    %3319 = vst.msk [vmem:[#allocation3 + $0x6] sm:$0x3f] %vm1319, %v3318
    %3321 = vrot.lane.b32.xlu0 %v3318, 112
    %v3322 = vpop.permute.xlu0 %3321
    %3324 = vst.msk [vmem:[#allocation3 + $0x6] sm:$0x3f] %vm1325, %v3322
    %3325 = vrot.lane.b32.xlu0 %v3318, 96
    %v3326 = vpop.permute.xlu0 %3325
    %3328 = vst.msk [vmem:[#allocation3 + $0x6] sm:$0x3f] %vm1330, %v3326
    %3329 = vrot.lane.b32.xlu0 %v3318, 80
    %v3330 = vpop.permute.xlu0 %3329
    %3332 = vst.msk [vmem:[#allocation3 + $0x6] sm:$0x3f] %vm1335, %v3330
    %3334 = vrot.lane.b32.xlu0 %v3313, 112
    %v3335 = vpop.permute.xlu0 %3334
    %v3337 = vmax.f32 %v3313, %v3335
    %3339 = vrot.lane.b32.xlu0 %v3337, 64
    %v3340 = vpop.permute.xlu0 %3339
    %3342 = vst.msk [vmem:[#allocation3 + $0x6] sm:$0x3f] %vm1346, %v3340
    %3343 = vrot.lane.b32.xlu0 %v3337, 48
    %v3344 = vpop.permute.xlu0 %3343
    %3346 = vst.msk [vmem:[#allocation3 + $0x6] sm:$0x3f] %vm1351, %v3344
    %v3347 = vld [vmem:[#allocation3 + $0x6] sm:$0xf]
    %v3348 = vld [vmem:[%s5] sm:$0xff]
    %v3349 = vld [vmem:[%s5 + $0x8] sm:$0xff]
    %v3350 = vld [vmem:[%s5 + $0x10] sm:$0xff]
    %v3351 = vld [vmem:[%s5 + $0x18] sm:$0xff]
    %v3352 = vld [vmem:[%s5 + $0x20] sm:$0xff]
    %v3353 = vld [vmem:[%s5 + $0x28] sm:$0xff]
    %v3354 = vld [vmem:[%s5 + $0x30] sm:$0xff]
    %v3355 = vld [vmem:[%s5 + $0x38] sm:$0xff]
    %v3356 = vld [vmem:[%s5 + $0x40] sm:$0xff]
    %v3357 = vld [vmem:[%s5 + $0x48] sm:$0xff]
    %v3358 = vld [vmem:[%s5 + $0x50] sm:$0xff]
    %v3359 = vld [vmem:[%s5 + $0x58] sm:$0xff]
    %v3360 = vld [vmem:[#allocation3 + $0x7] sm:$0xf]
    %v3361 = vld [vmem:[%s1367] sm:$0xff]
    %v3362 = vld [vmem:[%s1367 + $0x8] sm:$0xff]
    %v3363 = vld [vmem:[%s1367 + $0x10] sm:$0xff]
    %v3364 = vld [vmem:[%s1367 + $0x18] sm:$0xff]
    %v3365 = vld [vmem:[%s1367 + $0x20] sm:$0xff]
    %v3366 = vld [vmem:[%s1367 + $0x28] sm:$0xff]
    %v3367 = vld [vmem:[%s1367 + $0x30] sm:$0xff]
    %v3368 = vld [vmem:[%s1367 + $0x38] sm:$0xff]
    %v3369 = vld [vmem:[%s1367 + $0x40] sm:$0xff]
    %v3370 = vld [vmem:[%s1367 + $0x48] sm:$0xff]
    %v3371 = vld [vmem:[%s1367 + $0x50] sm:$0xff]
    %v3372 = vld [vmem:[%s1367 + $0x58] sm:$0xff]
    %v3374 = vsel %vm1380, %v3360, 0
    %3376 = vmatprep.subr.mxu0 0.0
    %3377 = vmatpush1.msra.mxu0 %v3361
    %3378 = vmatprep.subr.mxu0 0.0
    %3379 = vmatpush1.msra.mxu0 %v3362
    %3380 = vmatprep.subr.mxu0 0.0
    %3381 = vmatpush1.msra.mxu0 %v3363
    %3382 = vmatprep.subr.mxu0 0.0
    %3383 = vmatpush1.msra.mxu0 %v3364
    %3384 = vmatprep.subr.mxu0 0.0
    %3385 = vmatpush1.msra.mxu0 %v3365
    %3386 = vmatprep.subr.mxu0 0.0
    %3387 = vmatpush1.msra.mxu0 %v3366
    %3388 = vmatprep.subr.mxu0 0.0
    %3389 = vmatpush1.msra.mxu0 %v3367
    %3390 = vmatprep.subr.mxu0 0.0
    %3391 = vmatpush1.msra.mxu0 %v3368
    %3392 = vmatprep.subr.mxu0 0.0
    %3393 = vmatpush1.msra.mxu0 %v3369
    %3394 = vmatprep.subr.mxu0 0.0
    %3395 = vmatpush1.msra.mxu0 %v3370
    %3396 = vmatprep.subr.mxu0 0.0
    %3397 = vmatpush1.msra.mxu0 %v3371
    %3398 = vmatprep.subr.mxu0 0.0
    %3399 = vmatpush1.msra.mxu0 %v3372
    %3400 = vmatprep.subr.mxu0 0.0
    %3401 = vmatpush1.msra.mxu0 0.0
    %3402 = vmatprep.subr.mxu0 0.0
    %3403 = vmatpush1.msra.mxu0 0.0
    %3404 = vmatprep.subr.mxu0 0.0
    %3405 = vmatpush1.msra.mxu0 0.0
    %3406 = vmatprep.subr.mxu0 0.0
    %3407 = vmatpush1.msra.mxu0 0.0
    %3408 = vmatprep.subr.mxu0 0.0
    %3409 = vmatpush1.msra.mxu0 0.0
    %3410 = vmatprep.subr.mxu0 0.0
    %3411 = vmatpush1.msra.mxu0 0.0
    %3412 = vmatprep.subr.mxu0 0.0
    %3413 = vmatpush1.msra.mxu0 0.0
    %3414 = vmatprep.subr.mxu0 0.0
    %3415 = vmatpush1.msra.mxu0 0.0
    %3416 = vmatprep.subr.mxu0 0.0
    %3417 = vmatpush1.msra.mxu0 0.0
    %3418 = vmatprep.subr.mxu0 0.0
    %3419 = vmatpush1.msra.mxu0 0.0
    %3420 = vmatprep.subr.mxu0 0.0
    %3421 = vmatpush1.msra.mxu0 0.0
    %3422 = vmatprep.subr.mxu0 0.0
    %3423 = vmatpush1.msra.mxu0 0.0
    %3424 = vmatprep.subr.mxu0 0.0
    %3425 = vmatpush1.msra.mxu0 0.0
    %3426 = vmatprep.subr.mxu0 0.0
    %3427 = vmatpush1.msra.mxu0 0.0
    %3428 = vmatprep.subr.mxu0 0.0
    %3429 = vmatpush1.msra.mxu0 0.0
    %3430 = vmatprep.subr.mxu0 0.0
    %3431 = vmatpush1.msra.mxu0 0.0
    %3432 = vmatprep.subr.mxu0 0.0
    %3433 = vmatpush1.msra.mxu0 0.0
    %3434 = vmatprep.subr.mxu0 0.0
    %3435 = vmatpush1.msra.mxu0 0.0
    %3436 = vmatprep.subr.mxu0 0.0
    %3437 = vmatpush1.msra.mxu0 0.0
    %3438 = vmatprep.subr.mxu0 0.0
    %3439 = vmatpush1.msra.mxu0 0.0
    %3440 = vmatprep.mubr.f32.mxu0 0.0
    %3441 = vmatmul.mubr.f32.gmra.mrb[0].mxu0 %v3374
    %v3442 = vpop.f32.mrb[0].mxu0
    %v3443 = vadd.f32 0.0, %v3442
    %v3444 = vpop.f32.mrb[0].mxu0
    %3445 = vdwg.mxu0
    %v3447 = vsel %vm1380, %v3347, 0
    %3449 = vmatprep.subr.mxu0 0.0
    %3450 = vmatpush1.msra.mxu0 %v3348
    %3451 = vmatprep.subr.mxu0 0.0
    %3452 = vmatpush1.msra.mxu0 %v3349
    %3453 = vmatprep.subr.mxu0 0.0
    %3454 = vmatpush1.msra.mxu0 %v3350
    %3455 = vmatprep.subr.mxu0 0.0
    %3456 = vmatpush1.msra.mxu0 %v3351
    %3457 = vmatprep.subr.mxu0 0.0
    %3458 = vmatpush1.msra.mxu0 %v3352
    %3459 = vmatprep.subr.mxu0 0.0
    %3460 = vmatpush1.msra.mxu0 %v3353
    %3461 = vmatprep.subr.mxu0 0.0
    %3462 = vmatpush1.msra.mxu0 %v3354
    %3463 = vmatprep.subr.mxu0 0.0
    %3464 = vmatpush1.msra.mxu0 %v3355
    %3465 = vmatprep.subr.mxu0 0.0
    %3466 = vmatpush1.msra.mxu0 %v3356
    %3467 = vmatprep.subr.mxu0 0.0
    %3468 = vmatpush1.msra.mxu0 %v3357
    %3469 = vmatprep.subr.mxu0 0.0
    %3470 = vmatpush1.msra.mxu0 %v3358
    %3471 = vmatprep.subr.mxu0 0.0
    %3472 = vmatpush1.msra.mxu0 %v3359
    %3473 = vmatprep.subr.mxu0 0.0
    %3474 = vmatpush1.msra.mxu0 0.0
    %3475 = vmatprep.subr.mxu0 0.0
    %3476 = vmatpush1.msra.mxu0 0.0
    %3477 = vmatprep.subr.mxu0 0.0
    %3478 = vmatpush1.msra.mxu0 0.0
    %3479 = vmatprep.subr.mxu0 0.0
    %3480 = vmatpush1.msra.mxu0 0.0
    %3481 = vmatprep.subr.mxu0 0.0
    %3482 = vmatpush1.msra.mxu0 0.0
    %3483 = vmatprep.subr.mxu0 0.0
    %3484 = vmatpush1.msra.mxu0 0.0
    %3485 = vmatprep.subr.mxu0 0.0
    %3486 = vmatpush1.msra.mxu0 0.0
    %3487 = vmatprep.subr.mxu0 0.0
    %3488 = vmatpush1.msra.mxu0 0.0
    %3489 = vmatprep.subr.mxu0 0.0
    %3490 = vmatpush1.msra.mxu0 0.0
    %3491 = vmatprep.subr.mxu0 0.0
    %3492 = vmatpush1.msra.mxu0 0.0
    %3493 = vmatprep.subr.mxu0 0.0
    %3494 = vmatpush1.msra.mxu0 0.0
    %3495 = vmatprep.subr.mxu0 0.0
    %3496 = vmatpush1.msra.mxu0 0.0
    %3497 = vmatprep.subr.mxu0 0.0
    %3498 = vmatpush1.msra.mxu0 0.0
    %3499 = vmatprep.subr.mxu0 0.0
    %3500 = vmatpush1.msra.mxu0 0.0
    %3501 = vmatprep.subr.mxu0 0.0
    %3502 = vmatpush1.msra.mxu0 0.0
    %3503 = vmatprep.subr.mxu0 0.0
    %3504 = vmatpush1.msra.mxu0 0.0
    %3505 = vmatprep.subr.mxu0 0.0
    %3506 = vmatpush1.msra.mxu0 0.0
    %3507 = vmatprep.subr.mxu0 0.0
    %3508 = vmatpush1.msra.mxu0 0.0
    %3509 = vmatprep.subr.mxu0 0.0
    %3510 = vmatpush1.msra.mxu0 0.0
    %3511 = vmatprep.subr.mxu0 0.0
    %3512 = vmatpush1.msra.mxu0 0.0
    %3513 = vmatprep.mubr.f32.mxu0 0.0
    %3514 = vmatmul.mubr.f32.gmra.mrb[0].mxu0 %v3447
    %v3515 = vpop.f32.mrb[0].mxu0
    %v3516 = vadd.f32 %v3443, %v3515
    %v3517 = vpop.f32.mrb[0].mxu0
    %3518 = vdwg.mxu0
    %v3519 = vld [vmem:[#allocation3 + $0x8] sm:$0xf]
    %v3520 = vld [vmem:[%s1528] sm:$0xff]
    %v3521 = vld [vmem:[%s1528 + $0x8] sm:$0xff]
    %v3522 = vld [vmem:[%s1528 + $0x10] sm:$0xff]
    %v3523 = vld [vmem:[%s1528 + $0x18] sm:$0xff]
    %v3524 = vld [vmem:[%s1528 + $0x20] sm:$0xff]
    %v3525 = vld [vmem:[%s1528 + $0x28] sm:$0xff]
    %v3526 = vld [vmem:[%s1528 + $0x30] sm:$0xff]
    %v3527 = vld [vmem:[%s1528 + $0x38] sm:$0xff]
    %v3528 = vld [vmem:[%s1528 + $0x40] sm:$0xff]
    %v3529 = vld [vmem:[%s1528 + $0x48] sm:$0xff]
    %v3530 = vld [vmem:[%s1528 + $0x50] sm:$0xff]
    %v3531 = vld [vmem:[%s1528 + $0x58] sm:$0xff]
    %v3533 = vsel %vm1380, %v3519, 0
    %3535 = vmatprep.subr.mxu0 0.0
    %3536 = vmatpush1.msra.mxu0 %v3520
    %3537 = vmatprep.subr.mxu0 0.0
    %3538 = vmatpush1.msra.mxu0 %v3521
    %3539 = vmatprep.subr.mxu0 0.0
    %3540 = vmatpush1.msra.mxu0 %v3522
    %3541 = vmatprep.subr.mxu0 0.0
    %3542 = vmatpush1.msra.mxu0 %v3523
    %3543 = vmatprep.subr.mxu0 0.0
    %3544 = vmatpush1.msra.mxu0 %v3524
    %3545 = vmatprep.subr.mxu0 0.0
    %3546 = vmatpush1.msra.mxu0 %v3525
    %3547 = vmatprep.subr.mxu0 0.0
    %3548 = vmatpush1.msra.mxu0 %v3526
    %3549 = vmatprep.subr.mxu0 0.0
    %3550 = vmatpush1.msra.mxu0 %v3527
    %3551 = vmatprep.subr.mxu0 0.0
    %3552 = vmatpush1.msra.mxu0 %v3528
    %3553 = vmatprep.subr.mxu0 0.0
    %3554 = vmatpush1.msra.mxu0 %v3529
    %3555 = vmatprep.subr.mxu0 0.0
    %3556 = vmatpush1.msra.mxu0 %v3530
    %3557 = vmatprep.subr.mxu0 0.0
    %3558 = vmatpush1.msra.mxu0 %v3531
    %3559 = vmatprep.subr.mxu0 0.0
    %3560 = vmatpush1.msra.mxu0 0.0
    %3561 = vmatprep.subr.mxu0 0.0
    %3562 = vmatpush1.msra.mxu0 0.0
    %3563 = vmatprep.subr.mxu0 0.0
    %3564 = vmatpush1.msra.mxu0 0.0
    %3565 = vmatprep.subr.mxu0 0.0
    %3566 = vmatpush1.msra.mxu0 0.0
    %3567 = vmatprep.subr.mxu0 0.0
    %3568 = vmatpush1.msra.mxu0 0.0
    %3569 = vmatprep.subr.mxu0 0.0
    %3570 = vmatpush1.msra.mxu0 0.0
    %3571 = vmatprep.subr.mxu0 0.0
    %3572 = vmatpush1.msra.mxu0 0.0
    %3573 = vmatprep.subr.mxu0 0.0
    %3574 = vmatpush1.msra.mxu0 0.0
    %3575 = vmatprep.subr.mxu0 0.0
    %3576 = vmatpush1.msra.mxu0 0.0
    %3577 = vmatprep.subr.mxu0 0.0
    %3578 = vmatpush1.msra.mxu0 0.0
    %3579 = vmatprep.subr.mxu0 0.0
    %3580 = vmatpush1.msra.mxu0 0.0
    %3581 = vmatprep.subr.mxu0 0.0
    %3582 = vmatpush1.msra.mxu0 0.0
    %3583 = vmatprep.subr.mxu0 0.0
    %3584 = vmatpush1.msra.mxu0 0.0
    %3585 = vmatprep.subr.mxu0 0.0
    %3586 = vmatpush1.msra.mxu0 0.0
    %3587 = vmatprep.subr.mxu0 0.0
    %3588 = vmatpush1.msra.mxu0 0.0
    %3589 = vmatprep.subr.mxu0 0.0
    %3590 = vmatpush1.msra.mxu0 0.0
    %3591 = vmatprep.subr.mxu0 0.0
    %3592 = vmatpush1.msra.mxu0 0.0
    %3593 = vmatprep.subr.mxu0 0.0
    %3594 = vmatpush1.msra.mxu0 0.0
    %3595 = vmatprep.subr.mxu0 0.0
    %3596 = vmatpush1.msra.mxu0 0.0
    %3597 = vmatprep.subr.mxu0 0.0
    %3598 = vmatpush1.msra.mxu0 0.0
    %3599 = vmatprep.mubr.f32.mxu0 0.0
    %3600 = vmatmul.mubr.f32.gmra.mrb[0].mxu0 %v3533
    %v3601 = vpop.f32.mrb[0].mxu0
    %v3602 = vadd.f32 0.0, %v3601
    %v3603 = vpop.f32.mrb[0].mxu0
    %3604 = vdwg.mxu0
    %v3605 = vadd.f32 %v3516, %v3602
    %v3606 = vld [vmem:[%s6] sm:$0x1]
    %v3608 = vlaneseq
    %v3609 = vshrl.u32 %v3608, 7
    %v3610 = vsub.s32 0, %v3609
    %v3611 = vrot.slane %v3606, %v3610
    %v3613 = vadd.f32 %v3605, %v3611
    %v3614 = vmax.f32 %v3613, 0.0
    %v3615 = vld [vmem:[%s8] sm:$0x1]
    %v3616 = vld [vmem:[%s7] sm:$0xff]
    %v3617 = vld [vmem:[%s7 + $0x8] sm:$0xff]
    %v3618 = vld [vmem:[%s7 + $0x10] sm:$0xff]
    %v3619 = vld [vmem:[%s7 + $0x18] sm:$0xff]
    %v3620 = vld [vmem:[%s7 + $0x20] sm:$0xff]
    %v3621 = vld [vmem:[%s7 + $0x28] sm:$0xff]
    %v3622 = vld [vmem:[%s7 + $0x30] sm:$0xff]
    %v3623 = vld [vmem:[%s7 + $0x38] sm:$0xff]
    %v3625 = vsel %vm1633, %v3614, 0
    %3627 = vmatprep.subr.mxu0 0.0
    %3628 = vmatpush1.msra.mxu0 %v3616
    %3629 = vmatprep.subr.mxu0 0.0
    %3630 = vmatpush1.msra.mxu0 %v3617
    %3631 = vmatprep.subr.mxu0 0.0
    %3632 = vmatpush1.msra.mxu0 %v3618
    %3633 = vmatprep.subr.mxu0 0.0
    %3634 = vmatpush1.msra.mxu0 %v3619
    %3635 = vmatprep.subr.mxu0 0.0
    %3636 = vmatpush1.msra.mxu0 %v3620
    %3637 = vmatprep.subr.mxu0 0.0
    %3638 = vmatpush1.msra.mxu0 %v3621
    %3639 = vmatprep.subr.mxu0 0.0
    %3640 = vmatpush1.msra.mxu0 %v3622
    %3641 = vmatprep.subr.mxu0 0.0
    %3642 = vmatpush1.msra.mxu0 %v3623
    %3643 = vmatprep.subr.mxu0 0.0
    %3644 = vmatpush1.msra.mxu0 0.0
    %3645 = vmatprep.subr.mxu0 0.0
    %3646 = vmatpush1.msra.mxu0 0.0
    %3647 = vmatprep.subr.mxu0 0.0
    %3648 = vmatpush1.msra.mxu0 0.0
    %3649 = vmatprep.subr.mxu0 0.0
    %3650 = vmatpush1.msra.mxu0 0.0
    %3651 = vmatprep.subr.mxu0 0.0
    %3652 = vmatpush1.msra.mxu0 0.0
    %3653 = vmatprep.subr.mxu0 0.0
    %3654 = vmatpush1.msra.mxu0 0.0
    %3655 = vmatprep.subr.mxu0 0.0
    %3656 = vmatpush1.msra.mxu0 0.0
    %3657 = vmatprep.subr.mxu0 0.0
    %3658 = vmatpush1.msra.mxu0 0.0
    %3659 = vmatprep.subr.mxu0 0.0
    %3660 = vmatpush1.msra.mxu0 0.0
    %3661 = vmatprep.subr.mxu0 0.0
    %3662 = vmatpush1.msra.mxu0 0.0
    %3663 = vmatprep.subr.mxu0 0.0
    %3664 = vmatpush1.msra.mxu0 0.0
    %3665 = vmatprep.subr.mxu0 0.0
    %3666 = vmatpush1.msra.mxu0 0.0
    %3667 = vmatprep.subr.mxu0 0.0
    %3668 = vmatpush1.msra.mxu0 0.0
    %3669 = vmatprep.subr.mxu0 0.0
    %3670 = vmatpush1.msra.mxu0 0.0
    %3671 = vmatprep.subr.mxu0 0.0
    %3672 = vmatpush1.msra.mxu0 0.0
    %3673 = vmatprep.subr.mxu0 0.0
    %3674 = vmatpush1.msra.mxu0 0.0
    %3675 = vmatprep.subr.mxu0 0.0
    %3676 = vmatpush1.msra.mxu0 0.0
    %3677 = vmatprep.subr.mxu0 0.0
    %3678 = vmatpush1.msra.mxu0 0.0
    %3679 = vmatprep.subr.mxu0 0.0
    %3680 = vmatpush1.msra.mxu0 0.0
    %3681 = vmatprep.subr.mxu0 0.0
    %3682 = vmatpush1.msra.mxu0 0.0
    %3683 = vmatprep.subr.mxu0 0.0
    %3684 = vmatpush1.msra.mxu0 0.0
    %3685 = vmatprep.subr.mxu0 0.0
    %3686 = vmatpush1.msra.mxu0 0.0
    %3687 = vmatprep.subr.mxu0 0.0
    %3688 = vmatpush1.msra.mxu0 0.0
    %3689 = vmatprep.subr.mxu0 0.0
    %3690 = vmatpush1.msra.mxu0 0.0
    %3691 = vmatprep.mubr.f32.mxu0 0.0
    %3692 = vmatmul.mubr.f32.gmra.mrb[0].mxu0 %v3625
    %v3693 = vpop.f32.mrb[0].mxu0
    %v3694 = vadd.f32 0.0, %v3693
    %v3695 = vpop.f32.mrb[0].mxu0
    %3696 = vdwg.mxu0
    %v3697 = vadd.f32 %v3615, %v3694
    %v3698 = vld [vmem:[%s1708] sm:$0xff]
    %v3699 = vld [vmem:[%s1708 + $0x8] sm:$0xff]
    %v3700 = vld [vmem:[%s1708 + $0x10] sm:$0xff]
    %v3701 = vld [vmem:[%s1708 + $0x18] sm:$0xff]
    %v3702 = vld [vmem:[%s1708 + $0x20] sm:$0xff]
    %v3703 = vld [vmem:[%s1708 + $0x28] sm:$0xff]
    %v3704 = vld [vmem:[%s1708 + $0x30] sm:$0xff]
    %v3705 = vld [vmem:[%s1708 + $0x38] sm:$0xff]
    %v3706 = vrot.slane %v3614, 1
    %v3707 = vsel %vm1633, %v3706, 0
    %3709 = vmatprep.subr.mxu0 0.0
    %3710 = vmatpush1.msra.mxu0 %v3698
    %3711 = vmatprep.subr.mxu0 0.0
    %3712 = vmatpush1.msra.mxu0 %v3699
    %3713 = vmatprep.subr.mxu0 0.0
    %3714 = vmatpush1.msra.mxu0 %v3700
    %3715 = vmatprep.subr.mxu0 0.0
    %3716 = vmatpush1.msra.mxu0 %v3701
    %3717 = vmatprep.subr.mxu0 0.0
    %3718 = vmatpush1.msra.mxu0 %v3702
    %3719 = vmatprep.subr.mxu0 0.0
    %3720 = vmatpush1.msra.mxu0 %v3703
    %3721 = vmatprep.subr.mxu0 0.0
    %3722 = vmatpush1.msra.mxu0 %v3704
    %3723 = vmatprep.subr.mxu0 0.0
    %3724 = vmatpush1.msra.mxu0 %v3705
    %3725 = vmatprep.subr.mxu0 0.0
    %3726 = vmatpush1.msra.mxu0 0.0
    %3727 = vmatprep.subr.mxu0 0.0
    %3728 = vmatpush1.msra.mxu0 0.0
    %3729 = vmatprep.subr.mxu0 0.0
    %3730 = vmatpush1.msra.mxu0 0.0
    %3731 = vmatprep.subr.mxu0 0.0
    %3732 = vmatpush1.msra.mxu0 0.0
    %3733 = vmatprep.subr.mxu0 0.0
    %3734 = vmatpush1.msra.mxu0 0.0
    %3735 = vmatprep.subr.mxu0 0.0
    %3736 = vmatpush1.msra.mxu0 0.0
    %3737 = vmatprep.subr.mxu0 0.0
    %3738 = vmatpush1.msra.mxu0 0.0
    %3739 = vmatprep.subr.mxu0 0.0
    %3740 = vmatpush1.msra.mxu0 0.0
    %3741 = vmatprep.subr.mxu0 0.0
    %3742 = vmatpush1.msra.mxu0 0.0
    %3743 = vmatprep.subr.mxu0 0.0
    %3744 = vmatpush1.msra.mxu0 0.0
    %3745 = vmatprep.subr.mxu0 0.0
    %3746 = vmatpush1.msra.mxu0 0.0
    %3747 = vmatprep.subr.mxu0 0.0
    %3748 = vmatpush1.msra.mxu0 0.0
    %3749 = vmatprep.subr.mxu0 0.0
    %3750 = vmatpush1.msra.mxu0 0.0
    %3751 = vmatprep.subr.mxu0 0.0
    %3752 = vmatpush1.msra.mxu0 0.0
    %3753 = vmatprep.subr.mxu0 0.0
    %3754 = vmatpush1.msra.mxu0 0.0
    %3755 = vmatprep.subr.mxu0 0.0
    %3756 = vmatpush1.msra.mxu0 0.0
    %3757 = vmatprep.subr.mxu0 0.0
    %3758 = vmatpush1.msra.mxu0 0.0
    %3759 = vmatprep.subr.mxu0 0.0
    %3760 = vmatpush1.msra.mxu0 0.0
    %3761 = vmatprep.subr.mxu0 0.0
    %3762 = vmatpush1.msra.mxu0 0.0
    %3763 = vmatprep.subr.mxu0 0.0
    %3764 = vmatpush1.msra.mxu0 0.0
    %3765 = vmatprep.subr.mxu0 0.0
    %3766 = vmatpush1.msra.mxu0 0.0
    %3767 = vmatprep.subr.mxu0 0.0
    %3768 = vmatpush1.msra.mxu0 0.0
    %3769 = vmatprep.subr.mxu0 0.0
    %3770 = vmatpush1.msra.mxu0 0.0
    %3771 = vmatprep.subr.mxu0 0.0
    %3772 = vmatpush1.msra.mxu0 0.0
    %3773 = vmatprep.mubr.f32.mxu0 0.0
    %3774 = vmatmul.mubr.f32.gmra.mrb[0].mxu0 %v3707
    %v3775 = vpop.f32.mrb[0].mxu0
    %v3776 = vadd.f32 0.0, %v3775
    %v3777 = vpop.f32.mrb[0].mxu0
    %3778 = vdwg.mxu0
    %v3779 = vadd.f32 %v3697, %v3776
    %v3780 = vld [vmem:[%s1791] sm:$0xff]
    %v3781 = vld [vmem:[%s1791 + $0x8] sm:$0xff]
    %v3782 = vld [vmem:[%s1791 + $0x10] sm:$0xff]
    %v3783 = vld [vmem:[%s1791 + $0x18] sm:$0xff]
    %v3784 = vld [vmem:[%s1791 + $0x20] sm:$0xff]
    %v3785 = vld [vmem:[%s1791 + $0x28] sm:$0xff]
    %v3786 = vld [vmem:[%s1791 + $0x30] sm:$0xff]
    %v3787 = vld [vmem:[%s1791 + $0x38] sm:$0xff]
    %v3788 = vrot.slane %v3614, 2
    %v3789 = vsel %vm1633, %v3788, 0
    %3791 = vmatprep.subr.mxu0 0.0
    %3792 = vmatpush1.msra.mxu0 %v3780
    %3793 = vmatprep.subr.mxu0 0.0
    %3794 = vmatpush1.msra.mxu0 %v3781
    %3795 = vmatprep.subr.mxu0 0.0
    %3796 = vmatpush1.msra.mxu0 %v3782
    %3797 = vmatprep.subr.mxu0 0.0
    %3798 = vmatpush1.msra.mxu0 %v3783
    %3799 = vmatprep.subr.mxu0 0.0
    %3800 = vmatpush1.msra.mxu0 %v3784
    %3801 = vmatprep.subr.mxu0 0.0
    %3802 = vmatpush1.msra.mxu0 %v3785
    %3803 = vmatprep.subr.mxu0 0.0
    %3804 = vmatpush1.msra.mxu0 %v3786
    %3805 = vmatprep.subr.mxu0 0.0
    %3806 = vmatpush1.msra.mxu0 %v3787
    %3807 = vmatprep.subr.mxu0 0.0
    %3808 = vmatpush1.msra.mxu0 0.0
    %3809 = vmatprep.subr.mxu0 0.0
    %3810 = vmatpush1.msra.mxu0 0.0
    %3811 = vmatprep.subr.mxu0 0.0
    %3812 = vmatpush1.msra.mxu0 0.0
    %3813 = vmatprep.subr.mxu0 0.0
    %3814 = vmatpush1.msra.mxu0 0.0
    %3815 = vmatprep.subr.mxu0 0.0
    %3816 = vmatpush1.msra.mxu0 0.0
    %3817 = vmatprep.subr.mxu0 0.0
    %3818 = vmatpush1.msra.mxu0 0.0
    %3819 = vmatprep.subr.mxu0 0.0
    %3820 = vmatpush1.msra.mxu0 0.0
    %3821 = vmatprep.subr.mxu0 0.0
    %3822 = vmatpush1.msra.mxu0 0.0
    %3823 = vmatprep.subr.mxu0 0.0
    %3824 = vmatpush1.msra.mxu0 0.0
    %3825 = vmatprep.subr.mxu0 0.0
    %3826 = vmatpush1.msra.mxu0 0.0
    %3827 = vmatprep.subr.mxu0 0.0
    %3828 = vmatpush1.msra.mxu0 0.0
    %3829 = vmatprep.subr.mxu0 0.0
    %3830 = vmatpush1.msra.mxu0 0.0
    %3831 = vmatprep.subr.mxu0 0.0
    %3832 = vmatpush1.msra.mxu0 0.0
    %3833 = vmatprep.subr.mxu0 0.0
    %3834 = vmatpush1.msra.mxu0 0.0
    %3835 = vmatprep.subr.mxu0 0.0
    %3836 = vmatpush1.msra.mxu0 0.0
    %3837 = vmatprep.subr.mxu0 0.0
    %3838 = vmatpush1.msra.mxu0 0.0
    %3839 = vmatprep.subr.mxu0 0.0
    %3840 = vmatpush1.msra.mxu0 0.0
    %3841 = vmatprep.subr.mxu0 0.0
    %3842 = vmatpush1.msra.mxu0 0.0
    %3843 = vmatprep.subr.mxu0 0.0
    %3844 = vmatpush1.msra.mxu0 0.0
    %3845 = vmatprep.subr.mxu0 0.0
    %3846 = vmatpush1.msra.mxu0 0.0
    %3847 = vmatprep.subr.mxu0 0.0
    %3848 = vmatpush1.msra.mxu0 0.0
    %3849 = vmatprep.subr.mxu0 0.0
    %3850 = vmatpush1.msra.mxu0 0.0
    %3851 = vmatprep.subr.mxu0 0.0
    %3852 = vmatpush1.msra.mxu0 0.0
    %3853 = vmatprep.subr.mxu0 0.0
    %3854 = vmatpush1.msra.mxu0 0.0
    %3855 = vmatprep.mubr.f32.mxu0 0.0
    %3856 = vmatmul.mubr.f32.gmra.mrb[0].mxu0 %v3789
    %v3857 = vpop.f32.mrb[0].mxu0
    %v3858 = vadd.f32 0.0, %v3857
    %v3859 = vpop.f32.mrb[0].mxu0
    %3860 = vdwg.mxu0
    %v3861 = vadd.f32 %v3779, %v3858
    %v3862 = vld [vmem:[%s1874] sm:$0xff]
    %v3863 = vld [vmem:[%s1874 + $0x8] sm:$0xff]
    %v3864 = vld [vmem:[%s1874 + $0x10] sm:$0xff]
    %v3865 = vld [vmem:[%s1874 + $0x18] sm:$0xff]
    %v3866 = vld [vmem:[%s1874 + $0x20] sm:$0xff]
    %v3867 = vld [vmem:[%s1874 + $0x28] sm:$0xff]
    %v3868 = vld [vmem:[%s1874 + $0x30] sm:$0xff]
    %v3869 = vld [vmem:[%s1874 + $0x38] sm:$0xff]
    %v3870 = vrot.slane %v3614, 3
    %v3871 = vsel %vm1633, %v3870, 0
    %3873 = vmatprep.subr.mxu0 0.0
    %3874 = vmatpush1.msra.mxu0 %v3862
    %3875 = vmatprep.subr.mxu0 0.0
    %3876 = vmatpush1.msra.mxu0 %v3863
    %3877 = vmatprep.subr.mxu0 0.0
    %3878 = vmatpush1.msra.mxu0 %v3864
    %3879 = vmatprep.subr.mxu0 0.0
    %3880 = vmatpush1.msra.mxu0 %v3865
    %3881 = vmatprep.subr.mxu0 0.0
    %3882 = vmatpush1.msra.mxu0 %v3866
    %3883 = vmatprep.subr.mxu0 0.0
    %3884 = vmatpush1.msra.mxu0 %v3867
    %3885 = vmatprep.subr.mxu0 0.0
    %3886 = vmatpush1.msra.mxu0 %v3868
    %3887 = vmatprep.subr.mxu0 0.0
    %3888 = vmatpush1.msra.mxu0 %v3869
    %3889 = vmatprep.subr.mxu0 0.0
    %3890 = vmatpush1.msra.mxu0 0.0
    %3891 = vmatprep.subr.mxu0 0.0
    %3892 = vmatpush1.msra.mxu0 0.0
    %3893 = vmatprep.subr.mxu0 0.0
    %3894 = vmatpush1.msra.mxu0 0.0
    %3895 = vmatprep.subr.mxu0 0.0
    %3896 = vmatpush1.msra.mxu0 0.0
    %3897 = vmatprep.subr.mxu0 0.0
    %3898 = vmatpush1.msra.mxu0 0.0
    %3899 = vmatprep.subr.mxu0 0.0
    %3900 = vmatpush1.msra.mxu0 0.0
    %3901 = vmatprep.subr.mxu0 0.0
    %3902 = vmatpush1.msra.mxu0 0.0
    %3903 = vmatprep.subr.mxu0 0.0
    %3904 = vmatpush1.msra.mxu0 0.0
    %3905 = vmatprep.subr.mxu0 0.0
    %3906 = vmatpush1.msra.mxu0 0.0
    %3907 = vmatprep.subr.mxu0 0.0
    %3908 = vmatpush1.msra.mxu0 0.0
    %3909 = vmatprep.subr.mxu0 0.0
    %3910 = vmatpush1.msra.mxu0 0.0
    %3911 = vmatprep.subr.mxu0 0.0
    %3912 = vmatpush1.msra.mxu0 0.0
    %3913 = vmatprep.subr.mxu0 0.0
    %3914 = vmatpush1.msra.mxu0 0.0
    %3915 = vmatprep.subr.mxu0 0.0
    %3916 = vmatpush1.msra.mxu0 0.0
    %3917 = vmatprep.subr.mxu0 0.0
    %3918 = vmatpush1.msra.mxu0 0.0
    %3919 = vmatprep.subr.mxu0 0.0
    %3920 = vmatpush1.msra.mxu0 0.0
    %3921 = vmatprep.subr.mxu0 0.0
    %3922 = vmatpush1.msra.mxu0 0.0
    %3923 = vmatprep.subr.mxu0 0.0
    %3924 = vmatpush1.msra.mxu0 0.0
    %3925 = vmatprep.subr.mxu0 0.0
    %3926 = vmatpush1.msra.mxu0 0.0
    %3927 = vmatprep.subr.mxu0 0.0
    %3928 = vmatpush1.msra.mxu0 0.0
    %3929 = vmatprep.subr.mxu0 0.0
    %3930 = vmatpush1.msra.mxu0 0.0
    %3931 = vmatprep.subr.mxu0 0.0
    %3932 = vmatpush1.msra.mxu0 0.0
    %3933 = vmatprep.subr.mxu0 0.0
    %3934 = vmatpush1.msra.mxu0 0.0
    %3935 = vmatprep.subr.mxu0 0.0
    %3936 = vmatpush1.msra.mxu0 0.0
    %3937 = vmatprep.mubr.f32.mxu0 0.0
    %3938 = vmatmul.mubr.f32.gmra.mrb[0].mxu0 %v3871
    %v3939 = vpop.f32.mrb[0].mxu0
    %v3940 = vadd.f32 0.0, %v3939
    %v3941 = vpop.f32.mrb[0].mxu0
    %3942 = vdwg.mxu0
    %v3943 = vadd.f32 %v3861, %v3940
    %v3944 = vmax.f32 %v3943, 0.0
    %v3945 = vld [vmem:[#allocation6] sm:$0xff]
    %v3946 = vld [vmem:[#allocation6 + $0x8] sm:$0xff]
    %v3947 = vld [vmem:[#allocation6 + $0x10] sm:$0xff]
    %v3948 = vld [vmem:[#allocation6 + $0x18] sm:$0xff]
    %v3949 = vld [vmem:[#allocation6 + $0x20] sm:$0xff]
    %v3950 = vld [vmem:[#allocation6 + $0x28] sm:$0xff]
    %v3951 = vld [vmem:[#allocation6 + $0x30] sm:$0xff]
    %v3952 = vld [vmem:[#allocation6 + $0x38] sm:$0xff]
    %v3953 = vld [vmem:[#allocation6 + $0x40] sm:$0xff]
    %v3954 = vld [vmem:[#allocation6 + $0x48] sm:$0xff]
    %v3955 = vld [vmem:[#allocation6 + $0x50] sm:$0xff]
    %v3956 = vld [vmem:[#allocation6 + $0x58] sm:$0xff]
    %v3957 = vld [vmem:[#allocation6 + $0x60] sm:$0xff]
    %v3958 = vld [vmem:[#allocation6 + $0x68] sm:$0xff]
    %v3959 = vld [vmem:[#allocation6 + $0x70] sm:$0xff]
    %v3960 = vld [vmem:[#allocation6 + $0x78] sm:$0xff]
    %v3961 = vld [vmem:[%s10] sm:$0x1]
    %3962 = vmatprep.subr.mxu0 0.0
    %3963 = vmatpush1.msra.mxu0 %v3945
    %3964 = vmatprep.subr.mxu0 0.0
    %3965 = vmatpush1.msra.mxu0 %v3946
    %3966 = vmatprep.subr.mxu0 0.0
    %3967 = vmatpush1.msra.mxu0 %v3947
    %3968 = vmatprep.subr.mxu0 0.0
    %3969 = vmatpush1.msra.mxu0 %v3948
    %3970 = vmatprep.subr.mxu0 0.0
    %3971 = vmatpush1.msra.mxu0 %v3949
    %3972 = vmatprep.subr.mxu0 0.0
    %3973 = vmatpush1.msra.mxu0 %v3950
    %3974 = vmatprep.subr.mxu0 0.0
    %3975 = vmatpush1.msra.mxu0 %v3951
    %3976 = vmatprep.subr.mxu0 0.0
    %3977 = vmatpush1.msra.mxu0 %v3952
    %3978 = vmatprep.subr.mxu0 0.0
    %3979 = vmatpush1.msra.mxu0 %v3953
    %3980 = vmatprep.subr.mxu0 0.0
    %3981 = vmatpush1.msra.mxu0 %v3954
    %3982 = vmatprep.subr.mxu0 0.0
    %3983 = vmatpush1.msra.mxu0 %v3955
    %3984 = vmatprep.subr.mxu0 0.0
    %3985 = vmatpush1.msra.mxu0 %v3956
    %3986 = vmatprep.subr.mxu0 0.0
    %3987 = vmatpush1.msra.mxu0 %v3957
    %3988 = vmatprep.subr.mxu0 0.0
    %3989 = vmatpush1.msra.mxu0 %v3958
    %3990 = vmatprep.subr.mxu0 0.0
    %3991 = vmatpush1.msra.mxu0 %v3959
    %3992 = vmatprep.subr.mxu0 0.0
    %3993 = vmatpush1.msra.mxu0 %v3960
    %3994 = vmatprep.subr.mxu0 0.0
    %3995 = vmatpush1.msra.mxu0 0.0
    %3996 = vmatprep.subr.mxu0 0.0
    %3997 = vmatpush1.msra.mxu0 0.0
    %3998 = vmatprep.subr.mxu0 0.0
    %3999 = vmatpush1.msra.mxu0 0.0
    %4000 = vmatprep.subr.mxu0 0.0
    %4001 = vmatpush1.msra.mxu0 0.0
    %4002 = vmatprep.subr.mxu0 0.0
    %4003 = vmatpush1.msra.mxu0 0.0
    %4004 = vmatprep.subr.mxu0 0.0
    %4005 = vmatpush1.msra.mxu0 0.0
    %4006 = vmatprep.subr.mxu0 0.0
    %4007 = vmatpush1.msra.mxu0 0.0
    %4008 = vmatprep.subr.mxu0 0.0
    %4009 = vmatpush1.msra.mxu0 0.0
    %4010 = vmatprep.subr.mxu0 0.0
    %4011 = vmatpush1.msra.mxu0 0.0
    %4012 = vmatprep.subr.mxu0 0.0
    %4013 = vmatpush1.msra.mxu0 0.0
    %4014 = vmatprep.subr.mxu0 0.0
    %4015 = vmatpush1.msra.mxu0 0.0
    %4016 = vmatprep.subr.mxu0 0.0
    %4017 = vmatpush1.msra.mxu0 0.0
    %4018 = vmatprep.subr.mxu0 0.0
    %4019 = vmatpush1.msra.mxu0 0.0
    %4020 = vmatprep.subr.mxu0 0.0
    %4021 = vmatpush1.msra.mxu0 0.0
    %4022 = vmatprep.subr.mxu0 0.0
    %4023 = vmatpush1.msra.mxu0 0.0
    %4024 = vmatprep.subr.mxu0 0.0
    %4025 = vmatpush1.msra.mxu0 0.0
    %4026 = vmatprep.mubr.f32.mxu0 0.0
    %4027 = vmatmul.mubr.f32.gmra.mrb[0].mxu0 %v3944
    %v4028 = vpop.f32.mrb[0].mxu0
    %v4029 = vadd.f32 %v3961, %v4028
    %v4030 = vpop.f32.mrb[0].mxu0
    %4031 = vdwg.mxu0
    %v4032 = vmax.f32 %v4029, 0.0
    %v4033 = vld [vmem:[#allocation9] sm:$0xff]
    %v4034 = vld [vmem:[#allocation9 + $0x8] sm:$0xff]
    %v4035 = vld [vmem:[#allocation9 + $0x10] sm:$0xff]
    %v4036 = vld [vmem:[#allocation9 + $0x18] sm:$0xff]
    %v4037 = vld [vmem:[#allocation9 + $0x20] sm:$0xff]
    %v4038 = vld [vmem:[#allocation9 + $0x28] sm:$0xff]
    %v4039 = vld [vmem:[#allocation9 + $0x30] sm:$0xff]
    %v4040 = vld [vmem:[#allocation9 + $0x38] sm:$0xff]
    %v4041 = vld [vmem:[#allocation9 + $0x40] sm:$0xff]
    %v4042 = vld [vmem:[#allocation9 + $0x48] sm:$0xff]
    %v4043 = vld [vmem:[#allocation9 + $0x50] sm:$0xff]
    %v4044 = vld [vmem:[#allocation9 + $0x58] sm:$0xff]
    %v4045 = vld [vmem:[#allocation9 + $0x60] sm:$0xff]
    %v4046 = vld [vmem:[#allocation9 + $0x68] sm:$0xff]
    %v4047 = vld [vmem:[#allocation9 + $0x70] sm:$0xff]
    %v4048 = vld [vmem:[#allocation9 + $0x78] sm:$0xff]
    %v4049 = vld [vmem:[%s12] sm:$0x1]
    %4050 = vmatprep.subr.mxu0 0.0
    %4051 = vmatpush1.msra.mxu0 %v4033
    %4052 = vmatprep.subr.mxu0 0.0
    %4053 = vmatpush1.msra.mxu0 %v4034
    %4054 = vmatprep.subr.mxu0 0.0
    %4055 = vmatpush1.msra.mxu0 %v4035
    %4056 = vmatprep.subr.mxu0 0.0
    %4057 = vmatpush1.msra.mxu0 %v4036
    %4058 = vmatprep.subr.mxu0 0.0
    %4059 = vmatpush1.msra.mxu0 %v4037
    %4060 = vmatprep.subr.mxu0 0.0
    %4061 = vmatpush1.msra.mxu0 %v4038
    %4062 = vmatprep.subr.mxu0 0.0
    %4063 = vmatpush1.msra.mxu0 %v4039
    %4064 = vmatprep.subr.mxu0 0.0
    %4065 = vmatpush1.msra.mxu0 %v4040
    %4066 = vmatprep.subr.mxu0 0.0
    %4067 = vmatpush1.msra.mxu0 %v4041
    %4068 = vmatprep.subr.mxu0 0.0
    %4069 = vmatpush1.msra.mxu0 %v4042
    %4070 = vmatprep.subr.mxu0 0.0
    %4071 = vmatpush1.msra.mxu0 %v4043
    %4072 = vmatprep.subr.mxu0 0.0
    %4073 = vmatpush1.msra.mxu0 %v4044
    %4074 = vmatprep.subr.mxu0 0.0
    %4075 = vmatpush1.msra.mxu0 %v4045
    %4076 = vmatprep.subr.mxu0 0.0
    %4077 = vmatpush1.msra.mxu0 %v4046
    %4078 = vmatprep.subr.mxu0 0.0
    %4079 = vmatpush1.msra.mxu0 %v4047
    %4080 = vmatprep.subr.mxu0 0.0
    %4081 = vmatpush1.msra.mxu0 %v4048
    %4082 = vmatprep.subr.mxu0 0.0
    %4083 = vmatpush1.msra.mxu0 0.0
    %4084 = vmatprep.subr.mxu0 0.0
    %4085 = vmatpush1.msra.mxu0 0.0
    %4086 = vmatprep.subr.mxu0 0.0
    %4087 = vmatpush1.msra.mxu0 0.0
    %4088 = vmatprep.subr.mxu0 0.0
    %4089 = vmatpush1.msra.mxu0 0.0
    %4090 = vmatprep.subr.mxu0 0.0
    %4091 = vmatpush1.msra.mxu0 0.0
    %4092 = vmatprep.subr.mxu0 0.0
    %4093 = vmatpush1.msra.mxu0 0.0
    %4094 = vmatprep.subr.mxu0 0.0
    %4095 = vmatpush1.msra.mxu0 0.0
    %4096 = vmatprep.subr.mxu0 0.0
    %4097 = vmatpush1.msra.mxu0 0.0
    %4098 = vmatprep.subr.mxu0 0.0
    %4099 = vmatpush1.msra.mxu0 0.0
    %4100 = vmatprep.subr.mxu0 0.0
    %4101 = vmatpush1.msra.mxu0 0.0
    %4102 = vmatprep.subr.mxu0 0.0
    %4103 = vmatpush1.msra.mxu0 0.0
    %4104 = vmatprep.subr.mxu0 0.0
    %4105 = vmatpush1.msra.mxu0 0.0
    %4106 = vmatprep.subr.mxu0 0.0
    %4107 = vmatpush1.msra.mxu0 0.0
    %4108 = vmatprep.subr.mxu0 0.0
    %4109 = vmatpush1.msra.mxu0 0.0
    %4110 = vmatprep.subr.mxu0 0.0
    %4111 = vmatpush1.msra.mxu0 0.0
    %4112 = vmatprep.subr.mxu0 0.0
    %4113 = vmatpush1.msra.mxu0 0.0
    %4114 = vmatprep.mubr.f32.mxu0 0.0
    %4115 = vmatmul.mubr.f32.gmra.mrb[0].mxu0 %v4032
    %v4116 = vpop.f32.mrb[0].mxu0
    %v4117 = vadd.f32 %v4049, %v4116
    %v4118 = vpop.f32.mrb[0].mxu0
    %4119 = vdwg.mxu0
    %4120 = vst [vmem:[#allocation11 + $0x1] sm:$0x1] %v4117
    // Predicated region
    $region62: #{lenet5_forward.1} parent=1 // pred_check
      _
    $region63: #{lenet5_forward.1} parent=1 // pred_check_branch
      %4122 = sbr.rel (0) target = $region65
    $region64: #{lenet5_forward.1} parent=1 // pred_region
      %s4124 = ssub.s32 32, 32
      %4125 = vsyncadd [#allocation8], %s4124
      %s4127 = sshll.u32 [#allocation11], 4
      %s4128 = int_to_ptr.vmem [resolvable:$true] %s4127
      %4130 = dma.vmem_to_hbm [thread:$0]  %s4128, 32, %s13, [#allocation8]
    $region65: #{lenet5_forward.1} parent=1 // pred_fallthru
      _
    // Predicated region
    $region66: #{lenet5_forward.1} parent=1 // pred_check
      _
    $region67: #{lenet5_forward.1} parent=1 // pred_check_branch
      %4132 = sbr.rel (0) target = $region69
    $region68: #{lenet5_forward.1} parent=1 // pred_region
      %4133 = dma.done [#allocation8], 32
    $region69: #{lenet5_forward.1} parent=1 // pred_fallthru
      _
    %4134 = vsyncpa [#allocation7], 1
    %4135 = vsyncpa [#allocation10], 1
    %4136 = vsyncpa [#allocation8], 1

</llo_original>
